<compile_context>
chip_gen: v5e
topology: v5e:2x2
jax: 0.10.0
libtpu: 0.0.40
codegen_flags: <defaults>
</compile_context>

<pallas_src>
import functools

import jax
import jax.numpy as jnp
import numpy as np
from jax.experimental import pallas as pl
from jax.experimental.pallas import tpu as pltpu

EPS = 1e-5


# ----------------------------------------------------------------------------
# The single fused kernel
# ----------------------------------------------------------------------------
def _ae_forward_kernel(*refs, num_layers):
    x_ref = refs[0]
    o_ref = refs[-1]
    enc_refs = refs[1:1 + 3 * num_layers]
    we_ref, be_ref, wd_ref, bd_ref = refs[1 + 3 * num_layers:5 + 3 * num_layers]
    dec_refs = refs[5 + 3 * num_layers:5 + 6 * num_layers]
    f32 = jnp.float32

    x = x_ref[0].astype(f32)                      # (C_in, H*W), channel-major

    # ---- encoder: Conv2d(k=2,s=2) + BN(eval, scale folded into W) + ReLU ----
    for l in range(num_layers):
        w_ref, s_ref, sh_ref = enc_refs[3 * l:3 * l + 3]
        n_out, hw_out = w_ref.shape[1], s_ref.shape[2]
        y = jnp.zeros((n_out, hw_out), f32)
        for k in range(4):                        # k = 2*kh + kw  (2x2 taps)
            sel = s_ref[k].astype(f32)            # (HW_in, HW_out) 0/1 gather
            xs = jnp.dot(x, sel, preferred_element_type=f32)             # sub-image
            y = y + jnp.dot(w_ref[k], xs, preferred_element_type=f32)    # (O, HW_out)
        x = jnp.maximum(y + sh_ref[...], 0.0)

    # ---- Flatten (already NCHW order) + Linear + Sigmoid ----
    s_b = x.shape[1]                              # bottleneck H*W
    z = be_ref[...]                               # (latent, 1)
    for s in range(s_b):
        zs = jnp.dot(we_ref[s], x, preferred_element_type=f32)           # (latent, s_b)
        z = z + zs[:, s:s + 1]
    z = jax.nn.sigmoid(z)

    # ---- Linear + Sigmoid + Unflatten to channel-major (C_last, s_b) ----
    c_last = wd_ref.shape[1]
    z_b = jnp.broadcast_to(z, (z.shape[0], s_b))
    lane = jax.lax.broadcasted_iota(jnp.int32, (c_last, s_b), 1)
    h = bd_ref[...]                               # (C_last, s_b)
    for s in range(s_b):
        hs = jnp.dot(wd_ref[s], z_b, preferred_element_type=f32)         # (C_last, s_b)
        h = h + jnp.where(lane == s, hs, 0.0)
    x = jax.nn.sigmoid(h)

    # ---- decoder: ConvTranspose2d(k=2,s=2) + BN(folded) + ReLU / Sigmoid ----
    for l in range(num_layers):
        w_ref, t_ref, sh_ref = dec_refs[3 * l:3 * l + 3]
        n_out, hw_out = w_ref.shape[1], t_ref.shape[2]
        y = jnp.zeros((n_out, hw_out), f32)
        for k in range(4):
            sct = t_ref[k].astype(f32)            # (HW_in, HW_out) 0/1 scatter
            wx = jnp.dot(w_ref[k], x, preferred_element_type=f32)        # (O, HW_in)
            y = y + jnp.dot(wx, sct, preferred_element_type=f32)         # (O, HW_out)
        y = y + sh_ref[...]
        x = jax.nn.sigmoid(y) if l == num_layers - 1 else jnp.maximum(y, 0.0)

    o_ref[0] = x.astype(o_ref.dtype)              # lane-dense store: last dim = H*W (>=128 mult)


# ----------------------------------------------------------------------------
# Host-side wrapper
# ----------------------------------------------------------------------------
def _full_block_spec(shape):
    ndim = len(shape)
    return pl.BlockSpec(tuple(shape), lambda b, _nd=ndim: (0,) * _nd)


def _compiler_params():
    cls = getattr(pltpu, "CompilerParams", None)
    if cls is None:  # older jax versions
        cls = getattr(pltpu, "TPUCompilerParams")
    return cls(dimension_semantics=("parallel",))


def ae_forward(flat_params, x_nchw, *, num_layers):
    """flat_params: tuple of packed arrays (see pack_params); x_nchw: (N, C, H, W)."""
    n, c_img, hh, ww = x_nchw.shape
    hw = hh * ww
    x2 = x_nchw.reshape(n, c_img, hw).astype(jnp.float32)   # metadata-only reshape

    in_specs = [pl.BlockSpec((1, c_img, hw), lambda b: (b, 0, 0))]
    for p in flat_params:
        in_specs.append(_full_block_spec(p.shape))

    kernel = functools.partial(_ae_forward_kernel, num_layers=num_layers)
    y2 = pl.pallas_call(
        kernel,
        out_shape=jax.ShapeDtypeStruct((n, c_img, hw), jnp.float32),
        grid=(n,),                                # one batch element per grid step
        in_specs=in_specs,
        out_specs=pl.BlockSpec((1, c_img, hw), lambda b: (b, 0, 0)),
        compiler_params=_compiler_params(),       # shards batch across v7x's 2 TCs
    )(x2, *flat_params)
    return y2.reshape(n, c_img, hh, ww)           # metadata-only reshape back to NCHW


# ----------------------------------------------------------------------------
# Parameter construction (PyTorch layout) and packing into kernel format
# ----------------------------------------------------------------------------
def calculate_channel_sizes(image_channels, max_filters, num_layers):
    sizes = [(image_channels, max_filters // (2 ** (num_layers - 1)))]
    for _ in range(1, num_layers):
        prev = sizes[-1][-1]
        sizes.append((prev, prev * 2))
    return sizes


def make_params(key, image_channels=3, max_filters=32, num_layers=3,
                latent_dim=32, input_image_dimensions=16):
    sizes = calculate_channel_sizes(image_channels, max_filters, num_layers)
    image_size = input_image_dimensions
    keys = iter(jax.random.split(key, 10 * num_layers + 8))

    def rand_bn(cout):
        return (1.0 + 0.2 * jax.random.normal(next(keys), (cout,), jnp.float32),   # gamma
                0.1 * jax.random.normal(next(keys), (cout,), jnp.float32),          # beta
                0.1 * jax.random.normal(next(keys), (cout,), jnp.float32),          # running mean
                1.0 + 0.1 * jax.random.uniform(next(keys), (cout,), jnp.float32))   # running var

    enc_convs, enc_bns = [], []
    for (cin, cout) in sizes:
        enc_convs.append(0.1 * jax.random.normal(next(keys), (cout, cin, 2, 2), jnp.float32))
        enc_bns.append(rand_bn(cout))
        image_size = (image_size - 2) // 2 + 1

    hidden_dim = max_filters * image_size * image_size
    w_enc = 0.1 * jax.random.normal(next(keys), (latent_dim, hidden_dim), jnp.float32)
    b_enc = 0.01 * jax.random.normal(next(keys), (latent_dim,), jnp.float32)
    w_dec = 0.1 * jax.random.normal(next(keys), (hidden_dim, latent_dim), jnp.float32)
    b_dec = 0.01 * jax.random.normal(next(keys), (hidden_dim,), jnp.float32)

    dec_convs, dec_bns = [], []
    for (cout, cin) in sizes[::-1]:
        dec_convs.append(0.1 * jax.random.normal(next(keys), (cin, cout, 2, 2), jnp.float32))
        dec_bns.append(rand_bn(cout))

    return dict(enc_convs=enc_convs, enc_bns=enc_bns,
                w_enc=w_enc, b_enc=b_enc, w_dec=w_dec, b_dec=b_dec,
                dec_convs=dec_convs, dec_bns=dec_bns,
                max_filters=max_filters, bottleneck_size=image_size,
                input_image_dimensions=input_image_dimensions)


def selection_matrices(h, w):
    """S[k, (2i+kh)*w + 2j+kw, i*wo + j] = 1 with k = 2*kh + kw (k=2, s=2 conv)."""
    ho, wo = (h - 2) // 2 + 1, (w - 2) // 2 + 1
    s = np.zeros((4, h * w, ho * wo), np.float32)
    for kh in range(2):
        for kw in range(2):
            k = 2 * kh + kw
            for i in range(ho):
                for j in range(wo):
                    s[k, (2 * i + kh) * w + (2 * j + kw), i * wo + j] = 1.0
    return s


def pack_params(params):
    """Fold BN scale into weights, split 2x2 taps, build gather/scatter matrices."""
    num_layers = len(params["enc_convs"])
    flat = []

    h = params["input_image_dimensions"]
    for w, (gamma, beta, mean, var) in zip(params["enc_convs"], params["enc_bns"]):
        o = w.shape[0]
        scale = gamma / jnp.sqrt(var + EPS)
        shift = (beta - mean * scale).reshape(o, 1)
        wk = jnp.stack([scale[:, None] * w[:, :, kh, kw]
                        for kh in range(2) for kw in range(2)], axis=0)           # (4, O, C_in)
        sel = jnp.asarray(selection_matrices(h, h), dtype=jnp.bfloat16)           # exact 0/1
        flat += [wk, sel, shift]
        h = (h - 2) // 2 + 1

    c_last = params["enc_convs"][-1].shape[0]
    s_b = h * h
    latent = params["w_enc"].shape[0]
    we3 = params["w_enc"].reshape(latent, c_last, s_b)        # hidden idx = c*s_b + s
    we = jnp.stack([we3[:, :, s] for s in range(s_b)], axis=0)                    # (s_b, latent, C)
    be = params["b_enc"].reshape(latent, 1)
    wd3 = params["w_dec"].reshape(c_last, s_b, latent)
    wd = jnp.stack([wd3[:, s, :] for s in range(s_b)], axis=0)                    # (s_b, C, latent)
    bd = params["b_dec"].reshape(c_last, s_b)
    flat += [we, be, wd, bd]

    hd = h
    for w, (gamma, beta, mean, var) in zip(params["dec_convs"], params["dec_bns"]):
        o = w.shape[1]
        scale = gamma / jnp.sqrt(var + EPS)
        shift = (beta - mean * scale).reshape(o, 1)
        wk = jnp.stack([scale[:, None] * w[:, :, kh, kw].T
                        for kh in range(2) for kw in range(2)], axis=0)           # (4, O, C_in)
        sct = jnp.asarray(selection_matrices(2 * hd, 2 * hd).transpose(0, 2, 1),
                          dtype=jnp.bfloat16)                                     # (4, hd^2, (2hd)^2)
        flat += [wk, sct, shift]
        hd = 2 * hd

    return tuple(flat), num_layers


# ----------------------------------------------------------------------------
# Pure-JAX reference (direct PyTorch semantics) for the correctness check
# ----------------------------------------------------------------------------
def reference_forward(params, x_nchw):
    def bn(y, gamma, beta, mean, var):
        scale = gamma / jnp.sqrt(var + EPS)
        return y * scale[None, :, None, None] + (beta - mean * scale)[None, :, None, None]

    x = x_nchw
    for w, bnp_ in zip(params["enc_convs"], params["enc_bns"]):
        n, c, hh, ww = x.shape
        ho, wo = (hh - 2) // 2 + 1, (ww - 2) // 2 + 1
        y = jnp.zeros((n, w.shape[0], ho, wo), jnp.float32)
        for kh in range(2):
            for kw in range(2):
                xs = x[:, :, kh::2, kw::2]
                y = y + jnp.einsum('nchw,oc->nohw', xs, w[:, :, kh, kw])
        x = jnp.maximum(bn(y, *bnp_), 0.0)

    n = x.shape[0]
    flat = x.reshape(n, -1)
    z = jax.nn.sigmoid(flat @ params["w_enc"].T + params["b_enc"])
    hvec = jax.nn.sigmoid(z @ params["w_dec"].T + params["b_dec"])
    c_last = params["enc_convs"][-1].shape[0]
    sdim = params["bottleneck_size"]
    x = hvec.reshape(n, c_last, sdim, sdim)

    n_dec = len(params["dec_convs"])
    for i, (w, bnp_) in enumerate(zip(params["dec_convs"], params["dec_bns"])):
        nb, c, hh, ww = x.shape
        o = w.shape[1]
        y = jnp.zeros((nb, o, 2 * hh, 2 * ww), jnp.float32)
        for kh in range(2):
            for kw in range(2):
                contrib = jnp.einsum('nchw,co->nohw', x, w[:, :, kh, kw])
                y = y.at[:, :, kh::2, kw::2].set(contrib)
        y = bn(y, *bnp_)
        x = jax.nn.sigmoid(y) if i == n_dec - 1 else jnp.maximum(y, 0.0)
    return x


# ----------------------------------------------------------------------------
if __name__ == "__main__":
    key = jax.random.PRNGKey(0)
    pkey, xkey = jax.random.split(key)
    params = make_params(pkey, image_channels=3, max_filters=32, num_layers=3,
                         latent_dim=32, input_image_dimensions=16)
    flat_params, num_layers = pack_params(params)
    x = jax.random.normal(xkey, (2, 3, 16, 16), jnp.float32)   # NCHW, like PyTorch

    fwd = jax.jit(functools.partial(ae_forward, num_layers=num_layers))
    out = jax.block_until_ready(fwd(flat_params, x))
    assert out.shape == (2, 3, 16, 16), out.shape
    assert bool(jnp.all(jnp.isfinite(out)))

    ref = jax.block_until_ready(reference_forward(params, x))
    max_err = float(jnp.max(jnp.abs(out - ref)))
    # Loose tolerance: TPU default-precision matmuls may use bf16 passes in both
    # paths; post-sigmoid outputs live in (0,1) so a real layout/math bug would
    # show up as O(0.3+) differences.
    assert max_err < 5e-2, f"max abs error vs reference: {max_err}"
    print("KERNEL_OK")
</pallas_src>

<mosaic_0001>
module attributes {stable_mosaic.version = 11 : i64} {
  func.func @_ae_forward_kernel(%arg0: i32, %arg1: memref<1x3x256xf32, #tpu.memory_space<vmem>>, %arg2: memref<4x8x3xf32, #tpu.memory_space<vmem>>, %arg3: memref<4x256x64xbf16, #tpu.memory_space<vmem>>, %arg4: memref<8x1xf32, #tpu.memory_space<vmem>>, %arg5: memref<4x16x8xf32, #tpu.memory_space<vmem>>, %arg6: memref<4x64x16xbf16, #tpu.memory_space<vmem>>, %arg7: memref<16x1xf32, #tpu.memory_space<vmem>>, %arg8: memref<4x32x16xf32, #tpu.memory_space<vmem>>, %arg9: memref<4x16x4xbf16, #tpu.memory_space<vmem>>, %arg10: memref<32x1xf32, #tpu.memory_space<vmem>>, %arg11: memref<4x32x32xf32, #tpu.memory_space<vmem>>, %arg12: memref<32x1xf32, #tpu.memory_space<vmem>>, %arg13: memref<4x32x32xf32, #tpu.memory_space<vmem>>, %arg14: memref<32x4xf32, #tpu.memory_space<vmem>>, %arg15: memref<4x16x32xf32, #tpu.memory_space<vmem>>, %arg16: memref<4x4x16xbf16, #tpu.memory_space<vmem>>, %arg17: memref<16x1xf32, #tpu.memory_space<vmem>>, %arg18: memref<4x8x16xf32, #tpu.memory_space<vmem>>, %arg19: memref<4x16x64xbf16, #tpu.memory_space<vmem>>, %arg20: memref<8x1xf32, #tpu.memory_space<vmem>>, %arg21: memref<4x3x8xf32, #tpu.memory_space<vmem>>, %arg22: memref<4x64x256xbf16, #tpu.memory_space<vmem>>, %arg23: memref<3x1xf32, #tpu.memory_space<vmem>>, %arg24: memref<1x3x256xf32, #tpu.memory_space<vmem>>) attributes {dimension_semantics = [#tpu.dimension_semantics<parallel>], iteration_bounds = array<i64: 2>, scalar_prefetch = 0 : i64, scratch_operands = 0 : i64, tpu.core_type = #tpu.core_type<tc>, window_params = [{transform_indices = @transform_0, window_bounds = array<i64: 1, 3, 256>}, {pipeline_mode = #tpu.pipeline_mode<synchronous>, transform_indices = @transform_1, window_bounds = array<i64: 4, 8, 3>}, {pipeline_mode = #tpu.pipeline_mode<synchronous>, transform_indices = @transform_2, window_bounds = array<i64: 4, 256, 64>}, {pipeline_mode = #tpu.pipeline_mode<synchronous>, transform_indices = @transform_3, window_bounds = array<i64: 8, 1>}, {pipeline_mode = #tpu.pipeline_mode<synchronous>, transform_indices = @transform_4, window_bounds = array<i64: 4, 16, 8>}, {pipeline_mode = #tpu.pipeline_mode<synchronous>, transform_indices = @transform_5, window_bounds = array<i64: 4, 64, 16>}, {pipeline_mode = #tpu.pipeline_mode<synchronous>, transform_indices = @transform_6, window_bounds = array<i64: 16, 1>}, {pipeline_mode = #tpu.pipeline_mode<synchronous>, transform_indices = @transform_7, window_bounds = array<i64: 4, 32, 16>}, {pipeline_mode = #tpu.pipeline_mode<synchronous>, transform_indices = @transform_8, window_bounds = array<i64: 4, 16, 4>}, {pipeline_mode = #tpu.pipeline_mode<synchronous>, transform_indices = @transform_9, window_bounds = array<i64: 32, 1>}, {pipeline_mode = #tpu.pipeline_mode<synchronous>, transform_indices = @transform_10, window_bounds = array<i64: 4, 32, 32>}, {pipeline_mode = #tpu.pipeline_mode<synchronous>, transform_indices = @transform_11, window_bounds = array<i64: 32, 1>}, {pipeline_mode = #tpu.pipeline_mode<synchronous>, transform_indices = @transform_12, window_bounds = array<i64: 4, 32, 32>}, {pipeline_mode = #tpu.pipeline_mode<synchronous>, transform_indices = @transform_13, window_bounds = array<i64: 32, 4>}, {pipeline_mode = #tpu.pipeline_mode<synchronous>, transform_indices = @transform_14, window_bounds = array<i64: 4, 16, 32>}, {pipeline_mode = #tpu.pipeline_mode<synchronous>, transform_indices = @transform_15, window_bounds = array<i64: 4, 4, 16>}, {pipeline_mode = #tpu.pipeline_mode<synchronous>, transform_indices = @transform_16, window_bounds = array<i64: 16, 1>}, {pipeline_mode = #tpu.pipeline_mode<synchronous>, transform_indices = @transform_17, window_bounds = array<i64: 4, 8, 16>}, {pipeline_mode = #tpu.pipeline_mode<synchronous>, transform_indices = @transform_18, window_bounds = array<i64: 4, 16, 64>}, {pipeline_mode = #tpu.pipeline_mode<synchronous>, transform_indices = @transform_19, window_bounds = array<i64: 8, 1>}, {pipeline_mode = #tpu.pipeline_mode<synchronous>, transform_indices = @transform_20, window_bounds = array<i64: 4, 3, 8>}, {pipeline_mode = #tpu.pipeline_mode<synchronous>, transform_indices = @transform_21, window_bounds = array<i64: 4, 64, 256>}, {pipeline_mode = #tpu.pipeline_mode<synchronous>, transform_indices = @transform_22, window_bounds = array<i64: 3, 1>}, {transform_indices = @transform_23, window_bounds = array<i64: 1, 3, 256>}]} {
    %c0 = arith.constant 0 : index
    %c0_0 = arith.constant 0 : index
    %c0_1 = arith.constant 0 : index
    %0 = vector.load %arg1[%c0, %c0_0, %c0_1] : memref<1x3x256xf32, #tpu.memory_space<vmem>>, vector<1x3x256xf32>
    %1 = vector.shape_cast %0 : vector<1x3x256xf32> to vector<3x256xf32>
    %cst = arith.constant 0.000000e+00 : f32
    %2 = vector.broadcast %cst : f32 to vector<8x64xf32>
    %c0_2 = arith.constant 0 : index
    %c0_3 = arith.constant 0 : index
    %c0_4 = arith.constant 0 : index
    %3 = vector.load %arg3[%c0_2, %c0_3, %c0_4] : memref<4x256x64xbf16, #tpu.memory_space<vmem>>, vector<1x256x64xbf16>
    %4 = vector.shape_cast %3 : vector<1x256x64xbf16> to vector<256x64xbf16>
    %5 = arith.extf %4 : vector<256x64xbf16> to vector<256x64xf32>
    %cst_5 = arith.constant dense<0.000000e+00> : vector<3x64xf32>
    %6 = tpu.matmul %1, %5, %cst_5 {dimension_numbers = #tpu.dot_dimension_numbers<[1], [0], [0], [1], [0, 0, 1, 1], [], []>} : vector<3x256xf32>, vector<256x64xf32>, vector<3x64xf32> -> vector<3x64xf32>
    %c0_6 = arith.constant 0 : index
    %c0_7 = arith.constant 0 : index
    %c0_8 = arith.constant 0 : index
    %7 = vector.load %arg2[%c0_6, %c0_7, %c0_8] : memref<4x8x3xf32, #tpu.memory_space<vmem>>, vector<1x8x3xf32>
    %8 = vector.shape_cast %7 : vector<1x8x3xf32> to vector<8x3xf32>
    %cst_9 = arith.constant dense<0.000000e+00> : vector<8x64xf32>
    %9 = tpu.matmul %8, %6, %cst_9 {dimension_numbers = #tpu.dot_dimension_numbers<[1], [0], [0], [1], [0, 0, 1, 1], [], []>} : vector<8x3xf32>, vector<3x64xf32>, vector<8x64xf32> -> vector<8x64xf32>
    %10 = arith.addf %2, %9 : vector<8x64xf32>
    %c1 = arith.constant 1 : index
    %c0_10 = arith.constant 0 : index
    %c0_11 = arith.constant 0 : index
    %11 = vector.load %arg3[%c1, %c0_10, %c0_11] : memref<4x256x64xbf16, #tpu.memory_space<vmem>>, vector<1x256x64xbf16>
    %12 = vector.shape_cast %11 : vector<1x256x64xbf16> to vector<256x64xbf16>
    %13 = arith.extf %12 : vector<256x64xbf16> to vector<256x64xf32>
    %cst_12 = arith.constant dense<0.000000e+00> : vector<3x64xf32>
    %14 = tpu.matmul %1, %13, %cst_12 {dimension_numbers = #tpu.dot_dimension_numbers<[1], [0], [0], [1], [0, 0, 1, 1], [], []>} : vector<3x256xf32>, vector<256x64xf32>, vector<3x64xf32> -> vector<3x64xf32>
    %c1_13 = arith.constant 1 : index
    %c0_14 = arith.constant 0 : index
    %c0_15 = arith.constant 0 : index
    %15 = vector.load %arg2[%c1_13, %c0_14, %c0_15] : memref<4x8x3xf32, #tpu.memory_space<vmem>>, vector<1x8x3xf32>
    %16 = vector.shape_cast %15 : vector<1x8x3xf32> to vector<8x3xf32>
    %cst_16 = arith.constant dense<0.000000e+00> : vector<8x64xf32>
    %17 = tpu.matmul %16, %14, %cst_16 {dimension_numbers = #tpu.dot_dimension_numbers<[1], [0], [0], [1], [0, 0, 1, 1], [], []>} : vector<8x3xf32>, vector<3x64xf32>, vector<8x64xf32> -> vector<8x64xf32>
    %18 = arith.addf %10, %17 : vector<8x64xf32>
    %c2 = arith.constant 2 : index
    %c0_17 = arith.constant 0 : index
    %c0_18 = arith.constant 0 : index
    %19 = vector.load %arg3[%c2, %c0_17, %c0_18] : memref<4x256x64xbf16, #tpu.memory_space<vmem>>, vector<1x256x64xbf16>
    %20 = vector.shape_cast %19 : vector<1x256x64xbf16> to vector<256x64xbf16>
    %21 = arith.extf %20 : vector<256x64xbf16> to vector<256x64xf32>
    %cst_19 = arith.constant dense<0.000000e+00> : vector<3x64xf32>
    %22 = tpu.matmul %1, %21, %cst_19 {dimension_numbers = #tpu.dot_dimension_numbers<[1], [0], [0], [1], [0, 0, 1, 1], [], []>} : vector<3x256xf32>, vector<256x64xf32>, vector<3x64xf32> -> vector<3x64xf32>
    %c2_20 = arith.constant 2 : index
    %c0_21 = arith.constant 0 : index
    %c0_22 = arith.constant 0 : index
    %23 = vector.load %arg2[%c2_20, %c0_21, %c0_22] : memref<4x8x3xf32, #tpu.memory_space<vmem>>, vector<1x8x3xf32>
    %24 = vector.shape_cast %23 : vector<1x8x3xf32> to vector<8x3xf32>
    %cst_23 = arith.constant dense<0.000000e+00> : vector<8x64xf32>
    %25 = tpu.matmul %24, %22, %cst_23 {dimension_numbers = #tpu.dot_dimension_numbers<[1], [0], [0], [1], [0, 0, 1, 1], [], []>} : vector<8x3xf32>, vector<3x64xf32>, vector<8x64xf32> -> vector<8x64xf32>
    %26 = arith.addf %18, %25 : vector<8x64xf32>
    %c3 = arith.constant 3 : index
    %c0_24 = arith.constant 0 : index
    %c0_25 = arith.constant 0 : index
    %27 = vector.load %arg3[%c3, %c0_24, %c0_25] : memref<4x256x64xbf16, #tpu.memory_space<vmem>>, vector<1x256x64xbf16>
    %28 = vector.shape_cast %27 : vector<1x256x64xbf16> to vector<256x64xbf16>
    %29 = arith.extf %28 : vector<256x64xbf16> to vector<256x64xf32>
    %cst_26 = arith.constant dense<0.000000e+00> : vector<3x64xf32>
    %30 = tpu.matmul %1, %29, %cst_26 {dimension_numbers = #tpu.dot_dimension_numbers<[1], [0], [0], [1], [0, 0, 1, 1], [], []>} : vector<3x256xf32>, vector<256x64xf32>, vector<3x64xf32> -> vector<3x64xf32>
    %c3_27 = arith.constant 3 : index
    %c0_28 = arith.constant 0 : index
    %c0_29 = arith.constant 0 : index
    %31 = vector.load %arg2[%c3_27, %c0_28, %c0_29] : memref<4x8x3xf32, #tpu.memory_space<vmem>>, vector<1x8x3xf32>
    %32 = vector.shape_cast %31 : vector<1x8x3xf32> to vector<8x3xf32>
    %cst_30 = arith.constant dense<0.000000e+00> : vector<8x64xf32>
    %33 = tpu.matmul %32, %30, %cst_30 {dimension_numbers = #tpu.dot_dimension_numbers<[1], [0], [0], [1], [0, 0, 1, 1], [], []>} : vector<8x3xf32>, vector<3x64xf32>, vector<8x64xf32> -> vector<8x64xf32>
    %34 = arith.addf %26, %33 : vector<8x64xf32>
    %c0_31 = arith.constant 0 : index
    %c0_32 = arith.constant 0 : index
    %35 = vector.load %arg4[%c0_31, %c0_32] : memref<8x1xf32, #tpu.memory_space<vmem>>, vector<8x1xf32>
    %36 = vector.broadcast %35 : vector<8x1xf32> to vector<8x64xf32>
    %37 = arith.addf %34, %36 : vector<8x64xf32>
    %cst_33 = arith.constant 0.000000e+00 : f32
    %38 = vector.broadcast %cst_33 : f32 to vector<8x64xf32>
    %39 = arith.maximumf %37, %38 : vector<8x64xf32>
    %cst_34 = arith.constant 0.000000e+00 : f32
    %40 = vector.broadcast %cst_34 : f32 to vector<16x16xf32>
    %c0_35 = arith.constant 0 : index
    %c0_36 = arith.constant 0 : index
    %c0_37 = arith.constant 0 : index
    %41 = vector.load %arg6[%c0_35, %c0_36, %c0_37] : memref<4x64x16xbf16, #tpu.memory_space<vmem>>, vector<1x64x16xbf16>
    %42 = vector.shape_cast %41 : vector<1x64x16xbf16> to vector<64x16xbf16>
    %43 = arith.extf %42 : vector<64x16xbf16> to vector<64x16xf32>
    %cst_38 = arith.constant dense<0.000000e+00> : vector<8x16xf32>
    %44 = tpu.matmul %39, %43, %cst_38 {dimension_numbers = #tpu.dot_dimension_numbers<[1], [0], [0], [1], [0, 0, 1, 1], [], []>} : vector<8x64xf32>, vector<64x16xf32>, vector<8x16xf32> -> vector<8x16xf32>
    %c0_39 = arith.constant 0 : index
    %c0_40 = arith.constant 0 : index
    %c0_41 = arith.constant 0 : index
    %45 = vector.load %arg5[%c0_39, %c0_40, %c0_41] : memref<4x16x8xf32, #tpu.memory_space<vmem>>, vector<1x16x8xf32>
    %46 = vector.shape_cast %45 : vector<1x16x8xf32> to vector<16x8xf32>
    %cst_42 = arith.constant dense<0.000000e+00> : vector<16x16xf32>
    %47 = tpu.matmul %46, %44, %cst_42 {dimension_numbers = #tpu.dot_dimension_numbers<[1], [0], [0], [1], [0, 0, 1, 1], [], []>} : vector<16x8xf32>, vector<8x16xf32>, vector<16x16xf32> -> vector<16x16xf32>
    %48 = arith.addf %40, %47 : vector<16x16xf32>
    %c1_43 = arith.constant 1 : index
    %c0_44 = arith.constant 0 : index
    %c0_45 = arith.constant 0 : index
    %49 = vector.load %arg6[%c1_43, %c0_44, %c0_45] : memref<4x64x16xbf16, #tpu.memory_space<vmem>>, vector<1x64x16xbf16>
    %50 = vector.shape_cast %49 : vector<1x64x16xbf16> to vector<64x16xbf16>
    %51 = arith.extf %50 : vector<64x16xbf16> to vector<64x16xf32>
    %cst_46 = arith.constant dense<0.000000e+00> : vector<8x16xf32>
    %52 = tpu.matmul %39, %51, %cst_46 {dimension_numbers = #tpu.dot_dimension_numbers<[1], [0], [0], [1], [0, 0, 1, 1], [], []>} : vector<8x64xf32>, vector<64x16xf32>, vector<8x16xf32> -> vector<8x16xf32>
    %c1_47 = arith.constant 1 : index
    %c0_48 = arith.constant 0 : index
    %c0_49 = arith.constant 0 : index
    %53 = vector.load %arg5[%c1_47, %c0_48, %c0_49] : memref<4x16x8xf32, #tpu.memory_space<vmem>>, vector<1x16x8xf32>
    %54 = vector.shape_cast %53 : vector<1x16x8xf32> to vector<16x8xf32>
    %cst_50 = arith.constant dense<0.000000e+00> : vector<16x16xf32>
    %55 = tpu.matmul %54, %52, %cst_50 {dimension_numbers = #tpu.dot_dimension_numbers<[1], [0], [0], [1], [0, 0, 1, 1], [], []>} : vector<16x8xf32>, vector<8x16xf32>, vector<16x16xf32> -> vector<16x16xf32>
    %56 = arith.addf %48, %55 : vector<16x16xf32>
    %c2_51 = arith.constant 2 : index
    %c0_52 = arith.constant 0 : index
    %c0_53 = arith.constant 0 : index
    %57 = vector.load %arg6[%c2_51, %c0_52, %c0_53] : memref<4x64x16xbf16, #tpu.memory_space<vmem>>, vector<1x64x16xbf16>
    %58 = vector.shape_cast %57 : vector<1x64x16xbf16> to vector<64x16xbf16>
    %59 = arith.extf %58 : vector<64x16xbf16> to vector<64x16xf32>
    %cst_54 = arith.constant dense<0.000000e+00> : vector<8x16xf32>
    %60 = tpu.matmul %39, %59, %cst_54 {dimension_numbers = #tpu.dot_dimension_numbers<[1], [0], [0], [1], [0, 0, 1, 1], [], []>} : vector<8x64xf32>, vector<64x16xf32>, vector<8x16xf32> -> vector<8x16xf32>
    %c2_55 = arith.constant 2 : index
    %c0_56 = arith.constant 0 : index
    %c0_57 = arith.constant 0 : index
    %61 = vector.load %arg5[%c2_55, %c0_56, %c0_57] : memref<4x16x8xf32, #tpu.memory_space<vmem>>, vector<1x16x8xf32>
    %62 = vector.shape_cast %61 : vector<1x16x8xf32> to vector<16x8xf32>
    %cst_58 = arith.constant dense<0.000000e+00> : vector<16x16xf32>
    %63 = tpu.matmul %62, %60, %cst_58 {dimension_numbers = #tpu.dot_dimension_numbers<[1], [0], [0], [1], [0, 0, 1, 1], [], []>} : vector<16x8xf32>, vector<8x16xf32>, vector<16x16xf32> -> vector<16x16xf32>
    %64 = arith.addf %56, %63 : vector<16x16xf32>
    %c3_59 = arith.constant 3 : index
    %c0_60 = arith.constant 0 : index
    %c0_61 = arith.constant 0 : index
    %65 = vector.load %arg6[%c3_59, %c0_60, %c0_61] : memref<4x64x16xbf16, #tpu.memory_space<vmem>>, vector<1x64x16xbf16>
    %66 = vector.shape_cast %65 : vector<1x64x16xbf16> to vector<64x16xbf16>
    %67 = arith.extf %66 : vector<64x16xbf16> to vector<64x16xf32>
    %cst_62 = arith.constant dense<0.000000e+00> : vector<8x16xf32>
    %68 = tpu.matmul %39, %67, %cst_62 {dimension_numbers = #tpu.dot_dimension_numbers<[1], [0], [0], [1], [0, 0, 1, 1], [], []>} : vector<8x64xf32>, vector<64x16xf32>, vector<8x16xf32> -> vector<8x16xf32>
    %c3_63 = arith.constant 3 : index
    %c0_64 = arith.constant 0 : index
    %c0_65 = arith.constant 0 : index
    %69 = vector.load %arg5[%c3_63, %c0_64, %c0_65] : memref<4x16x8xf32, #tpu.memory_space<vmem>>, vector<1x16x8xf32>
    %70 = vector.shape_cast %69 : vector<1x16x8xf32> to vector<16x8xf32>
    %cst_66 = arith.constant dense<0.000000e+00> : vector<16x16xf32>
    %71 = tpu.matmul %70, %68, %cst_66 {dimension_numbers = #tpu.dot_dimension_numbers<[1], [0], [0], [1], [0, 0, 1, 1], [], []>} : vector<16x8xf32>, vector<8x16xf32>, vector<16x16xf32> -> vector<16x16xf32>
    %72 = arith.addf %64, %71 : vector<16x16xf32>
    %c0_67 = arith.constant 0 : index
    %c0_68 = arith.constant 0 : index
    %73 = vector.load %arg7[%c0_67, %c0_68] : memref<16x1xf32, #tpu.memory_space<vmem>>, vector<16x1xf32>
    %74 = vector.broadcast %73 : vector<16x1xf32> to vector<16x16xf32>
    %75 = arith.addf %72, %74 : vector<16x16xf32>
    %cst_69 = arith.constant 0.000000e+00 : f32
    %76 = vector.broadcast %cst_69 : f32 to vector<16x16xf32>
    %77 = arith.maximumf %75, %76 : vector<16x16xf32>
    %cst_70 = arith.constant 0.000000e+00 : f32
    %78 = vector.broadcast %cst_70 : f32 to vector<32x4xf32>
    %c0_71 = arith.constant 0 : index
    %c0_72 = arith.constant 0 : index
    %c0_73 = arith.constant 0 : index
    %79 = vector.load %arg9[%c0_71, %c0_72, %c0_73] : memref<4x16x4xbf16, #tpu.memory_space<vmem>>, vector<1x16x4xbf16>
    %80 = vector.shape_cast %79 : vector<1x16x4xbf16> to vector<16x4xbf16>
    %81 = arith.extf %80 : vector<16x4xbf16> to vector<16x4xf32>
    %cst_74 = arith.constant dense<0.000000e+00> : vector<16x4xf32>
    %82 = tpu.matmul %77, %81, %cst_74 {dimension_numbers = #tpu.dot_dimension_numbers<[1], [0], [0], [1], [0, 0, 1, 1], [], []>} : vector<16x16xf32>, vector<16x4xf32>, vector<16x4xf32> -> vector<16x4xf32>
    %c0_75 = arith.constant 0 : index
    %c0_76 = arith.constant 0 : index
    %c0_77 = arith.constant 0 : index
    %83 = vector.load %arg8[%c0_75, %c0_76, %c0_77] : memref<4x32x16xf32, #tpu.memory_space<vmem>>, vector<1x32x16xf32>
    %84 = vector.shape_cast %83 : vector<1x32x16xf32> to vector<32x16xf32>
    %cst_78 = arith.constant dense<0.000000e+00> : vector<32x4xf32>
    %85 = tpu.matmul %84, %82, %cst_78 {dimension_numbers = #tpu.dot_dimension_numbers<[1], [0], [0], [1], [0, 0, 1, 1], [], []>} : vector<32x16xf32>, vector<16x4xf32>, vector<32x4xf32> -> vector<32x4xf32>
    %86 = arith.addf %78, %85 : vector<32x4xf32>
    %c1_79 = arith.constant 1 : index
    %c0_80 = arith.constant 0 : index
    %c0_81 = arith.constant 0 : index
    %87 = vector.load %arg9[%c1_79, %c0_80, %c0_81] : memref<4x16x4xbf16, #tpu.memory_space<vmem>>, vector<1x16x4xbf16>
    %88 = vector.shape_cast %87 : vector<1x16x4xbf16> to vector<16x4xbf16>
    %89 = arith.extf %88 : vector<16x4xbf16> to vector<16x4xf32>
    %cst_82 = arith.constant dense<0.000000e+00> : vector<16x4xf32>
    %90 = tpu.matmul %77, %89, %cst_82 {dimension_numbers = #tpu.dot_dimension_numbers<[1], [0], [0], [1], [0, 0, 1, 1], [], []>} : vector<16x16xf32>, vector<16x4xf32>, vector<16x4xf32> -> vector<16x4xf32>
    %c1_83 = arith.constant 1 : index
    %c0_84 = arith.constant 0 : index
    %c0_85 = arith.constant 0 : index
    %91 = vector.load %arg8[%c1_83, %c0_84, %c0_85] : memref<4x32x16xf32, #tpu.memory_space<vmem>>, vector<1x32x16xf32>
    %92 = vector.shape_cast %91 : vector<1x32x16xf32> to vector<32x16xf32>
    %cst_86 = arith.constant dense<0.000000e+00> : vector<32x4xf32>
    %93 = tpu.matmul %92, %90, %cst_86 {dimension_numbers = #tpu.dot_dimension_numbers<[1], [0], [0], [1], [0, 0, 1, 1], [], []>} : vector<32x16xf32>, vector<16x4xf32>, vector<32x4xf32> -> vector<32x4xf32>
    %94 = arith.addf %86, %93 : vector<32x4xf32>
    %c2_87 = arith.constant 2 : index
    %c0_88 = arith.constant 0 : index
    %c0_89 = arith.constant 0 : index
    %95 = vector.load %arg9[%c2_87, %c0_88, %c0_89] : memref<4x16x4xbf16, #tpu.memory_space<vmem>>, vector<1x16x4xbf16>
    %96 = vector.shape_cast %95 : vector<1x16x4xbf16> to vector<16x4xbf16>
    %97 = arith.extf %96 : vector<16x4xbf16> to vector<16x4xf32>
    %cst_90 = arith.constant dense<0.000000e+00> : vector<16x4xf32>
    %98 = tpu.matmul %77, %97, %cst_90 {dimension_numbers = #tpu.dot_dimension_numbers<[1], [0], [0], [1], [0, 0, 1, 1], [], []>} : vector<16x16xf32>, vector<16x4xf32>, vector<16x4xf32> -> vector<16x4xf32>
    %c2_91 = arith.constant 2 : index
    %c0_92 = arith.constant 0 : index
    %c0_93 = arith.constant 0 : index
    %99 = vector.load %arg8[%c2_91, %c0_92, %c0_93] : memref<4x32x16xf32, #tpu.memory_space<vmem>>, vector<1x32x16xf32>
    %100 = vector.shape_cast %99 : vector<1x32x16xf32> to vector<32x16xf32>
    %cst_94 = arith.constant dense<0.000000e+00> : vector<32x4xf32>
    %101 = tpu.matmul %100, %98, %cst_94 {dimension_numbers = #tpu.dot_dimension_numbers<[1], [0], [0], [1], [0, 0, 1, 1], [], []>} : vector<32x16xf32>, vector<16x4xf32>, vector<32x4xf32> -> vector<32x4xf32>
    %102 = arith.addf %94, %101 : vector<32x4xf32>
    %c3_95 = arith.constant 3 : index
    %c0_96 = arith.constant 0 : index
    %c0_97 = arith.constant 0 : index
    %103 = vector.load %arg9[%c3_95, %c0_96, %c0_97] : memref<4x16x4xbf16, #tpu.memory_space<vmem>>, vector<1x16x4xbf16>
    %104 = vector.shape_cast %103 : vector<1x16x4xbf16> to vector<16x4xbf16>
    %105 = arith.extf %104 : vector<16x4xbf16> to vector<16x4xf32>
    %cst_98 = arith.constant dense<0.000000e+00> : vector<16x4xf32>
    %106 = tpu.matmul %77, %105, %cst_98 {dimension_numbers = #tpu.dot_dimension_numbers<[1], [0], [0], [1], [0, 0, 1, 1], [], []>} : vector<16x16xf32>, vector<16x4xf32>, vector<16x4xf32> -> vector<16x4xf32>
    %c3_99 = arith.constant 3 : index
    %c0_100 = arith.constant 0 : index
    %c0_101 = arith.constant 0 : index
    %107 = vector.load %arg8[%c3_99, %c0_100, %c0_101] : memref<4x32x16xf32, #tpu.memory_space<vmem>>, vector<1x32x16xf32>
    %108 = vector.shape_cast %107 : vector<1x32x16xf32> to vector<32x16xf32>
    %cst_102 = arith.constant dense<0.000000e+00> : vector<32x4xf32>
    %109 = tpu.matmul %108, %106, %cst_102 {dimension_numbers = #tpu.dot_dimension_numbers<[1], [0], [0], [1], [0, 0, 1, 1], [], []>} : vector<32x16xf32>, vector<16x4xf32>, vector<32x4xf32> -> vector<32x4xf32>
    %110 = arith.addf %102, %109 : vector<32x4xf32>
    %c0_103 = arith.constant 0 : index
    %c0_104 = arith.constant 0 : index
    %111 = vector.load %arg10[%c0_103, %c0_104] : memref<32x1xf32, #tpu.memory_space<vmem>>, vector<32x1xf32>
    %112 = vector.broadcast %111 : vector<32x1xf32> to vector<32x4xf32>
    %113 = arith.addf %110, %112 : vector<32x4xf32>
    %cst_105 = arith.constant 0.000000e+00 : f32
    %114 = vector.broadcast %cst_105 : f32 to vector<32x4xf32>
    %115 = arith.maximumf %113, %114 : vector<32x4xf32>
    %c0_106 = arith.constant 0 : index
    %c0_107 = arith.constant 0 : index
    %116 = vector.load %arg12[%c0_106, %c0_107] : memref<32x1xf32, #tpu.memory_space<vmem>>, vector<32x1xf32>
    %c0_108 = arith.constant 0 : index
    %c0_109 = arith.constant 0 : index
    %c0_110 = arith.constant 0 : index
    %117 = vector.load %arg11[%c0_108, %c0_109, %c0_110] : memref<4x32x32xf32, #tpu.memory_space<vmem>>, vector<1x32x32xf32>
    %118 = vector.shape_cast %117 : vector<1x32x32xf32> to vector<32x32xf32>
    %cst_111 = arith.constant dense<0.000000e+00> : vector<32x4xf32>
    %119 = tpu.matmul %118, %115, %cst_111 {dimension_numbers = #tpu.dot_dimension_numbers<[1], [0], [0], [1], [0, 0, 1, 1], [], []>} : vector<32x32xf32>, vector<32x4xf32>, vector<32x4xf32> -> vector<32x4xf32>
    %120 = vector.extract_strided_slice %119 {offsets = [0, 0], sizes = [32, 1], strides = [1, 1]} : vector<32x4xf32> to vector<32x1xf32>
    %121 = arith.addf %116, %120 : vector<32x1xf32>
    %c1_112 = arith.constant 1 : index
    %c0_113 = arith.constant 0 : index
    %c0_114 = arith.constant 0 : index
    %122 = vector.load %arg11[%c1_112, %c0_113, %c0_114] : memref<4x32x32xf32, #tpu.memory_space<vmem>>, vector<1x32x32xf32>
    %123 = vector.shape_cast %122 : vector<1x32x32xf32> to vector<32x32xf32>
    %cst_115 = arith.constant dense<0.000000e+00> : vector<32x4xf32>
    %124 = tpu.matmul %123, %115, %cst_115 {dimension_numbers = #tpu.dot_dimension_numbers<[1], [0], [0], [1], [0, 0, 1, 1], [], []>} : vector<32x32xf32>, vector<32x4xf32>, vector<32x4xf32> -> vector<32x4xf32>
    %125 = vector.extract_strided_slice %124 {offsets = [0, 1], sizes = [32, 1], strides = [1, 1]} : vector<32x4xf32> to vector<32x1xf32>
    %126 = arith.addf %121, %125 : vector<32x1xf32>
    %c2_116 = arith.constant 2 : index
    %c0_117 = arith.constant 0 : index
    %c0_118 = arith.constant 0 : index
    %127 = vector.load %arg11[%c2_116, %c0_117, %c0_118] : memref<4x32x32xf32, #tpu.memory_space<vmem>>, vector<1x32x32xf32>
    %128 = vector.shape_cast %127 : vector<1x32x32xf32> to vector<32x32xf32>
    %cst_119 = arith.constant dense<0.000000e+00> : vector<32x4xf32>
    %129 = tpu.matmul %128, %115, %cst_119 {dimension_numbers = #tpu.dot_dimension_numbers<[1], [0], [0], [1], [0, 0, 1, 1], [], []>} : vector<32x32xf32>, vector<32x4xf32>, vector<32x4xf32> -> vector<32x4xf32>
    %130 = vector.extract_strided_slice %129 {offsets = [0, 2], sizes = [32, 1], strides = [1, 1]} : vector<32x4xf32> to vector<32x1xf32>
    %131 = arith.addf %126, %130 : vector<32x1xf32>
    %c3_120 = arith.constant 3 : index
    %c0_121 = arith.constant 0 : index
    %c0_122 = arith.constant 0 : index
    %132 = vector.load %arg11[%c3_120, %c0_121, %c0_122] : memref<4x32x32xf32, #tpu.memory_space<vmem>>, vector<1x32x32xf32>
    %133 = vector.shape_cast %132 : vector<1x32x32xf32> to vector<32x32xf32>
    %cst_123 = arith.constant dense<0.000000e+00> : vector<32x4xf32>
    %134 = tpu.matmul %133, %115, %cst_123 {dimension_numbers = #tpu.dot_dimension_numbers<[1], [0], [0], [1], [0, 0, 1, 1], [], []>} : vector<32x32xf32>, vector<32x4xf32>, vector<32x4xf32> -> vector<32x4xf32>
    %135 = vector.extract_strided_slice %134 {offsets = [0, 3], sizes = [32, 1], strides = [1, 1]} : vector<32x4xf32> to vector<32x1xf32>
    %136 = arith.addf %131, %135 : vector<32x1xf32>
    %137 = arith.negf %136 : vector<32x1xf32>
    %138 = math.exp %137 : vector<32x1xf32>
    %cst_124 = arith.constant 1.000000e+00 : f32
    %139 = vector.broadcast %cst_124 : f32 to vector<32x1xf32>
    %140 = arith.addf %139, %138 : vector<32x1xf32>
    %141 = arith.divf %139, %140 : vector<32x1xf32>
    %142 = vector.shape_cast %141 : vector<32x1xf32> to vector<32x1xf32>
    %143 = vector.broadcast %142 : vector<32x1xf32> to vector<32x4xf32>
    %144 = tpu.iota {dimensions = array<i32: 1>} : vector<32x4xi32>
    %c0_125 = arith.constant 0 : index
    %c0_126 = arith.constant 0 : index
    %145 = vector.load %arg14[%c0_125, %c0_126] : memref<32x4xf32, #tpu.memory_space<vmem>>, vector<32x4xf32>
    %c0_127 = arith.constant 0 : index
    %c0_128 = arith.constant 0 : index
    %c0_129 = arith.constant 0 : index
    %146 = vector.load %arg13[%c0_127, %c0_128, %c0_129] : memref<4x32x32xf32, #tpu.memory_space<vmem>>, vector<1x32x32xf32>
    %147 = vector.shape_cast %146 : vector<1x32x32xf32> to vector<32x32xf32>
    %cst_130 = arith.constant dense<0.000000e+00> : vector<32x4xf32>
    %148 = tpu.matmul %147, %143, %cst_130 {dimension_numbers = #tpu.dot_dimension_numbers<[1], [0], [0], [1], [0, 0, 1, 1], [], []>} : vector<32x32xf32>, vector<32x4xf32>, vector<32x4xf32> -> vector<32x4xf32>
    %c0_i32 = arith.constant 0 : i32
    %149 = vector.broadcast %c0_i32 : i32 to vector<32x4xi32>
    %150 = arith.cmpi eq, %144, %149 : vector<32x4xi32>
    %cst_131 = arith.constant 0.000000e+00 : f32
    %151 = vector.broadcast %cst_131 : f32 to vector<32x4xf32>
    %152 = arith.select %150, %148, %151 : vector<32x4xi1>, vector<32x4xf32>
    %153 = arith.addf %145, %152 : vector<32x4xf32>
    %c1_132 = arith.constant 1 : index
    %c0_133 = arith.constant 0 : index
    %c0_134 = arith.constant 0 : index
    %154 = vector.load %arg13[%c1_132, %c0_133, %c0_134] : memref<4x32x32xf32, #tpu.memory_space<vmem>>, vector<1x32x32xf32>
    %155 = vector.shape_cast %154 : vector<1x32x32xf32> to vector<32x32xf32>
    %cst_135 = arith.constant dense<0.000000e+00> : vector<32x4xf32>
    %156 = tpu.matmul %155, %143, %cst_135 {dimension_numbers = #tpu.dot_dimension_numbers<[1], [0], [0], [1], [0, 0, 1, 1], [], []>} : vector<32x32xf32>, vector<32x4xf32>, vector<32x4xf32> -> vector<32x4xf32>
    %c1_i32 = arith.constant 1 : i32
    %157 = vector.broadcast %c1_i32 : i32 to vector<32x4xi32>
    %158 = arith.cmpi eq, %144, %157 : vector<32x4xi32>
    %cst_136 = arith.constant 0.000000e+00 : f32
    %159 = vector.broadcast %cst_136 : f32 to vector<32x4xf32>
    %160 = arith.select %158, %156, %159 : vector<32x4xi1>, vector<32x4xf32>
    %161 = arith.addf %153, %160 : vector<32x4xf32>
    %c2_137 = arith.constant 2 : index
    %c0_138 = arith.constant 0 : index
    %c0_139 = arith.constant 0 : index
    %162 = vector.load %arg13[%c2_137, %c0_138, %c0_139] : memref<4x32x32xf32, #tpu.memory_space<vmem>>, vector<1x32x32xf32>
    %163 = vector.shape_cast %162 : vector<1x32x32xf32> to vector<32x32xf32>
    %cst_140 = arith.constant dense<0.000000e+00> : vector<32x4xf32>
    %164 = tpu.matmul %163, %143, %cst_140 {dimension_numbers = #tpu.dot_dimension_numbers<[1], [0], [0], [1], [0, 0, 1, 1], [], []>} : vector<32x32xf32>, vector<32x4xf32>, vector<32x4xf32> -> vector<32x4xf32>
    %c2_i32 = arith.constant 2 : i32
    %165 = vector.broadcast %c2_i32 : i32 to vector<32x4xi32>
    %166 = arith.cmpi eq, %144, %165 : vector<32x4xi32>
    %cst_141 = arith.constant 0.000000e+00 : f32
    %167 = vector.broadcast %cst_141 : f32 to vector<32x4xf32>
    %168 = arith.select %166, %164, %167 : vector<32x4xi1>, vector<32x4xf32>
    %169 = arith.addf %161, %168 : vector<32x4xf32>
    %c3_142 = arith.constant 3 : index
    %c0_143 = arith.constant 0 : index
    %c0_144 = arith.constant 0 : index
    %170 = vector.load %arg13[%c3_142, %c0_143, %c0_144] : memref<4x32x32xf32, #tpu.memory_space<vmem>>, vector<1x32x32xf32>
    %171 = vector.shape_cast %170 : vector<1x32x32xf32> to vector<32x32xf32>
    %cst_145 = arith.constant dense<0.000000e+00> : vector<32x4xf32>
    %172 = tpu.matmul %171, %143, %cst_145 {dimension_numbers = #tpu.dot_dimension_numbers<[1], [0], [0], [1], [0, 0, 1, 1], [], []>} : vector<32x32xf32>, vector<32x4xf32>, vector<32x4xf32> -> vector<32x4xf32>
    %c3_i32 = arith.constant 3 : i32
    %173 = vector.broadcast %c3_i32 : i32 to vector<32x4xi32>
    %174 = arith.cmpi eq, %144, %173 : vector<32x4xi32>
    %cst_146 = arith.constant 0.000000e+00 : f32
    %175 = vector.broadcast %cst_146 : f32 to vector<32x4xf32>
    %176 = arith.select %174, %172, %175 : vector<32x4xi1>, vector<32x4xf32>
    %177 = arith.addf %169, %176 : vector<32x4xf32>
    %178 = arith.negf %177 : vector<32x4xf32>
    %179 = math.exp %178 : vector<32x4xf32>
    %cst_147 = arith.constant 1.000000e+00 : f32
    %180 = vector.broadcast %cst_147 : f32 to vector<32x4xf32>
    %181 = arith.addf %180, %179 : vector<32x4xf32>
    %182 = arith.divf %180, %181 : vector<32x4xf32>
    %cst_148 = arith.constant 0.000000e+00 : f32
    %183 = vector.broadcast %cst_148 : f32 to vector<16x16xf32>
    %c0_149 = arith.constant 0 : index
    %c0_150 = arith.constant 0 : index
    %c0_151 = arith.constant 0 : index
    %184 = vector.load %arg16[%c0_149, %c0_150, %c0_151] : memref<4x4x16xbf16, #tpu.memory_space<vmem>>, vector<1x4x16xbf16>
    %185 = vector.shape_cast %184 : vector<1x4x16xbf16> to vector<4x16xbf16>
    %186 = arith.extf %185 : vector<4x16xbf16> to vector<4x16xf32>
    %c0_152 = arith.constant 0 : index
    %c0_153 = arith.constant 0 : index
    %c0_154 = arith.constant 0 : index
    %187 = vector.load %arg15[%c0_152, %c0_153, %c0_154] : memref<4x16x32xf32, #tpu.memory_space<vmem>>, vector<1x16x32xf32>
    %188 = vector.shape_cast %187 : vector<1x16x32xf32> to vector<16x32xf32>
    %cst_155 = arith.constant dense<0.000000e+00> : vector<16x4xf32>
    %189 = tpu.matmul %188, %182, %cst_155 {dimension_numbers = #tpu.dot_dimension_numbers<[1], [0], [0], [1], [0, 0, 1, 1], [], []>} : vector<16x32xf32>, vector<32x4xf32>, vector<16x4xf32> -> vector<16x4xf32>
    %cst_156 = arith.constant dense<0.000000e+00> : vector<16x16xf32>
    %190 = tpu.matmul %189, %186, %cst_156 {dimension_numbers = #tpu.dot_dimension_numbers<[1], [0], [0], [1], [0, 0, 1, 1], [], []>} : vector<16x4xf32>, vector<4x16xf32>, vector<16x16xf32> -> vector<16x16xf32>
    %191 = arith.addf %183, %190 : vector<16x16xf32>
    %c1_157 = arith.constant 1 : index
    %c0_158 = arith.constant 0 : index
    %c0_159 = arith.constant 0 : index
    %192 = vector.load %arg16[%c1_157, %c0_158, %c0_159] : memref<4x4x16xbf16, #tpu.memory_space<vmem>>, vector<1x4x16xbf16>
    %193 = vector.shape_cast %192 : vector<1x4x16xbf16> to vector<4x16xbf16>
    %194 = arith.extf %193 : vector<4x16xbf16> to vector<4x16xf32>
    %c1_160 = arith.constant 1 : index
    %c0_161 = arith.constant 0 : index
    %c0_162 = arith.constant 0 : index
    %195 = vector.load %arg15[%c1_160, %c0_161, %c0_162] : memref<4x16x32xf32, #tpu.memory_space<vmem>>, vector<1x16x32xf32>
    %196 = vector.shape_cast %195 : vector<1x16x32xf32> to vector<16x32xf32>
    %cst_163 = arith.constant dense<0.000000e+00> : vector<16x4xf32>
    %197 = tpu.matmul %196, %182, %cst_163 {dimension_numbers = #tpu.dot_dimension_numbers<[1], [0], [0], [1], [0, 0, 1, 1], [], []>} : vector<16x32xf32>, vector<32x4xf32>, vector<16x4xf32> -> vector<16x4xf32>
    %cst_164 = arith.constant dense<0.000000e+00> : vector<16x16xf32>
    %198 = tpu.matmul %197, %194, %cst_164 {dimension_numbers = #tpu.dot_dimension_numbers<[1], [0], [0], [1], [0, 0, 1, 1], [], []>} : vector<16x4xf32>, vector<4x16xf32>, vector<16x16xf32> -> vector<16x16xf32>
    %199 = arith.addf %191, %198 : vector<16x16xf32>
    %c2_165 = arith.constant 2 : index
    %c0_166 = arith.constant 0 : index
    %c0_167 = arith.constant 0 : index
    %200 = vector.load %arg16[%c2_165, %c0_166, %c0_167] : memref<4x4x16xbf16, #tpu.memory_space<vmem>>, vector<1x4x16xbf16>
    %201 = vector.shape_cast %200 : vector<1x4x16xbf16> to vector<4x16xbf16>
    %202 = arith.extf %201 : vector<4x16xbf16> to vector<4x16xf32>
    %c2_168 = arith.constant 2 : index
    %c0_169 = arith.constant 0 : index
    %c0_170 = arith.constant 0 : index
    %203 = vector.load %arg15[%c2_168, %c0_169, %c0_170] : memref<4x16x32xf32, #tpu.memory_space<vmem>>, vector<1x16x32xf32>
    %204 = vector.shape_cast %203 : vector<1x16x32xf32> to vector<16x32xf32>
    %cst_171 = arith.constant dense<0.000000e+00> : vector<16x4xf32>
    %205 = tpu.matmul %204, %182, %cst_171 {dimension_numbers = #tpu.dot_dimension_numbers<[1], [0], [0], [1], [0, 0, 1, 1], [], []>} : vector<16x32xf32>, vector<32x4xf32>, vector<16x4xf32> -> vector<16x4xf32>
    %cst_172 = arith.constant dense<0.000000e+00> : vector<16x16xf32>
    %206 = tpu.matmul %205, %202, %cst_172 {dimension_numbers = #tpu.dot_dimension_numbers<[1], [0], [0], [1], [0, 0, 1, 1], [], []>} : vector<16x4xf32>, vector<4x16xf32>, vector<16x16xf32> -> vector<16x16xf32>
    %207 = arith.addf %199, %206 : vector<16x16xf32>
    %c3_173 = arith.constant 3 : index
    %c0_174 = arith.constant 0 : index
    %c0_175 = arith.constant 0 : index
    %208 = vector.load %arg16[%c3_173, %c0_174, %c0_175] : memref<4x4x16xbf16, #tpu.memory_space<vmem>>, vector<1x4x16xbf16>
    %209 = vector.shape_cast %208 : vector<1x4x16xbf16> to vector<4x16xbf16>
    %210 = arith.extf %209 : vector<4x16xbf16> to vector<4x16xf32>
    %c3_176 = arith.constant 3 : index
    %c0_177 = arith.constant 0 : index
    %c0_178 = arith.constant 0 : index
    %211 = vector.load %arg15[%c3_176, %c0_177, %c0_178] : memref<4x16x32xf32, #tpu.memory_space<vmem>>, vector<1x16x32xf32>
    %212 = vector.shape_cast %211 : vector<1x16x32xf32> to vector<16x32xf32>
    %cst_179 = arith.constant dense<0.000000e+00> : vector<16x4xf32>
    %213 = tpu.matmul %212, %182, %cst_179 {dimension_numbers = #tpu.dot_dimension_numbers<[1], [0], [0], [1], [0, 0, 1, 1], [], []>} : vector<16x32xf32>, vector<32x4xf32>, vector<16x4xf32> -> vector<16x4xf32>
    %cst_180 = arith.constant dense<0.000000e+00> : vector<16x16xf32>
    %214 = tpu.matmul %213, %210, %cst_180 {dimension_numbers = #tpu.dot_dimension_numbers<[1], [0], [0], [1], [0, 0, 1, 1], [], []>} : vector<16x4xf32>, vector<4x16xf32>, vector<16x16xf32> -> vector<16x16xf32>
    %215 = arith.addf %207, %214 : vector<16x16xf32>
    %c0_181 = arith.constant 0 : index
    %c0_182 = arith.constant 0 : index
    %216 = vector.load %arg17[%c0_181, %c0_182] : memref<16x1xf32, #tpu.memory_space<vmem>>, vector<16x1xf32>
    %217 = vector.broadcast %216 : vector<16x1xf32> to vector<16x16xf32>
    %218 = arith.addf %215, %217 : vector<16x16xf32>
    %cst_183 = arith.constant 0.000000e+00 : f32
    %219 = vector.broadcast %cst_183 : f32 to vector<16x16xf32>
    %220 = arith.maximumf %218, %219 : vector<16x16xf32>
    %cst_184 = arith.constant 0.000000e+00 : f32
    %221 = vector.broadcast %cst_184 : f32 to vector<8x64xf32>
    %c0_185 = arith.constant 0 : index
    %c0_186 = arith.constant 0 : index
    %c0_187 = arith.constant 0 : index
    %222 = vector.load %arg19[%c0_185, %c0_186, %c0_187] : memref<4x16x64xbf16, #tpu.memory_space<vmem>>, vector<1x16x64xbf16>
    %223 = vector.shape_cast %222 : vector<1x16x64xbf16> to vector<16x64xbf16>
    %224 = arith.extf %223 : vector<16x64xbf16> to vector<16x64xf32>
    %c0_188 = arith.constant 0 : index
    %c0_189 = arith.constant 0 : index
    %c0_190 = arith.constant 0 : index
    %225 = vector.load %arg18[%c0_188, %c0_189, %c0_190] : memref<4x8x16xf32, #tpu.memory_space<vmem>>, vector<1x8x16xf32>
    %226 = vector.shape_cast %225 : vector<1x8x16xf32> to vector<8x16xf32>
    %cst_191 = arith.constant dense<0.000000e+00> : vector<8x16xf32>
    %227 = tpu.matmul %226, %220, %cst_191 {dimension_numbers = #tpu.dot_dimension_numbers<[1], [0], [0], [1], [0, 0, 1, 1], [], []>} : vector<8x16xf32>, vector<16x16xf32>, vector<8x16xf32> -> vector<8x16xf32>
    %cst_192 = arith.constant dense<0.000000e+00> : vector<8x64xf32>
    %228 = tpu.matmul %227, %224, %cst_192 {dimension_numbers = #tpu.dot_dimension_numbers<[1], [0], [0], [1], [0, 0, 1, 1], [], []>} : vector<8x16xf32>, vector<16x64xf32>, vector<8x64xf32> -> vector<8x64xf32>
    %229 = arith.addf %221, %228 : vector<8x64xf32>
    %c1_193 = arith.constant 1 : index
    %c0_194 = arith.constant 0 : index
    %c0_195 = arith.constant 0 : index
    %230 = vector.load %arg19[%c1_193, %c0_194, %c0_195] : memref<4x16x64xbf16, #tpu.memory_space<vmem>>, vector<1x16x64xbf16>
    %231 = vector.shape_cast %230 : vector<1x16x64xbf16> to vector<16x64xbf16>
    %232 = arith.extf %231 : vector<16x64xbf16> to vector<16x64xf32>
    %c1_196 = arith.constant 1 : index
    %c0_197 = arith.constant 0 : index
    %c0_198 = arith.constant 0 : index
    %233 = vector.load %arg18[%c1_196, %c0_197, %c0_198] : memref<4x8x16xf32, #tpu.memory_space<vmem>>, vector<1x8x16xf32>
    %234 = vector.shape_cast %233 : vector<1x8x16xf32> to vector<8x16xf32>
    %cst_199 = arith.constant dense<0.000000e+00> : vector<8x16xf32>
    %235 = tpu.matmul %234, %220, %cst_199 {dimension_numbers = #tpu.dot_dimension_numbers<[1], [0], [0], [1], [0, 0, 1, 1], [], []>} : vector<8x16xf32>, vector<16x16xf32>, vector<8x16xf32> -> vector<8x16xf32>
    %cst_200 = arith.constant dense<0.000000e+00> : vector<8x64xf32>
    %236 = tpu.matmul %235, %232, %cst_200 {dimension_numbers = #tpu.dot_dimension_numbers<[1], [0], [0], [1], [0, 0, 1, 1], [], []>} : vector<8x16xf32>, vector<16x64xf32>, vector<8x64xf32> -> vector<8x64xf32>
    %237 = arith.addf %229, %236 : vector<8x64xf32>
    %c2_201 = arith.constant 2 : index
    %c0_202 = arith.constant 0 : index
    %c0_203 = arith.constant 0 : index
    %238 = vector.load %arg19[%c2_201, %c0_202, %c0_203] : memref<4x16x64xbf16, #tpu.memory_space<vmem>>, vector<1x16x64xbf16>
    %239 = vector.shape_cast %238 : vector<1x16x64xbf16> to vector<16x64xbf16>
    %240 = arith.extf %239 : vector<16x64xbf16> to vector<16x64xf32>
    %c2_204 = arith.constant 2 : index
    %c0_205 = arith.constant 0 : index
    %c0_206 = arith.constant 0 : index
    %241 = vector.load %arg18[%c2_204, %c0_205, %c0_206] : memref<4x8x16xf32, #tpu.memory_space<vmem>>, vector<1x8x16xf32>
    %242 = vector.shape_cast %241 : vector<1x8x16xf32> to vector<8x16xf32>
    %cst_207 = arith.constant dense<0.000000e+00> : vector<8x16xf32>
    %243 = tpu.matmul %242, %220, %cst_207 {dimension_numbers = #tpu.dot_dimension_numbers<[1], [0], [0], [1], [0, 0, 1, 1], [], []>} : vector<8x16xf32>, vector<16x16xf32>, vector<8x16xf32> -> vector<8x16xf32>
    %cst_208 = arith.constant dense<0.000000e+00> : vector<8x64xf32>
    %244 = tpu.matmul %243, %240, %cst_208 {dimension_numbers = #tpu.dot_dimension_numbers<[1], [0], [0], [1], [0, 0, 1, 1], [], []>} : vector<8x16xf32>, vector<16x64xf32>, vector<8x64xf32> -> vector<8x64xf32>
    %245 = arith.addf %237, %244 : vector<8x64xf32>
    %c3_209 = arith.constant 3 : index
    %c0_210 = arith.constant 0 : index
    %c0_211 = arith.constant 0 : index
    %246 = vector.load %arg19[%c3_209, %c0_210, %c0_211] : memref<4x16x64xbf16, #tpu.memory_space<vmem>>, vector<1x16x64xbf16>
    %247 = vector.shape_cast %246 : vector<1x16x64xbf16> to vector<16x64xbf16>
    %248 = arith.extf %247 : vector<16x64xbf16> to vector<16x64xf32>
    %c3_212 = arith.constant 3 : index
    %c0_213 = arith.constant 0 : index
    %c0_214 = arith.constant 0 : index
    %249 = vector.load %arg18[%c3_212, %c0_213, %c0_214] : memref<4x8x16xf32, #tpu.memory_space<vmem>>, vector<1x8x16xf32>
    %250 = vector.shape_cast %249 : vector<1x8x16xf32> to vector<8x16xf32>
    %cst_215 = arith.constant dense<0.000000e+00> : vector<8x16xf32>
    %251 = tpu.matmul %250, %220, %cst_215 {dimension_numbers = #tpu.dot_dimension_numbers<[1], [0], [0], [1], [0, 0, 1, 1], [], []>} : vector<8x16xf32>, vector<16x16xf32>, vector<8x16xf32> -> vector<8x16xf32>
    %cst_216 = arith.constant dense<0.000000e+00> : vector<8x64xf32>
    %252 = tpu.matmul %251, %248, %cst_216 {dimension_numbers = #tpu.dot_dimension_numbers<[1], [0], [0], [1], [0, 0, 1, 1], [], []>} : vector<8x16xf32>, vector<16x64xf32>, vector<8x64xf32> -> vector<8x64xf32>
    %253 = arith.addf %245, %252 : vector<8x64xf32>
    %c0_217 = arith.constant 0 : index
    %c0_218 = arith.constant 0 : index
    %254 = vector.load %arg20[%c0_217, %c0_218] : memref<8x1xf32, #tpu.memory_space<vmem>>, vector<8x1xf32>
    %255 = vector.broadcast %254 : vector<8x1xf32> to vector<8x64xf32>
    %256 = arith.addf %253, %255 : vector<8x64xf32>
    %cst_219 = arith.constant 0.000000e+00 : f32
    %257 = vector.broadcast %cst_219 : f32 to vector<8x64xf32>
    %258 = arith.maximumf %256, %257 : vector<8x64xf32>
    %cst_220 = arith.constant 0.000000e+00 : f32
    %259 = vector.broadcast %cst_220 : f32 to vector<3x256xf32>
    %c0_221 = arith.constant 0 : index
    %c0_222 = arith.constant 0 : index
    %c0_223 = arith.constant 0 : index
    %260 = vector.load %arg22[%c0_221, %c0_222, %c0_223] : memref<4x64x256xbf16, #tpu.memory_space<vmem>>, vector<1x64x256xbf16>
    %261 = vector.shape_cast %260 : vector<1x64x256xbf16> to vector<64x256xbf16>
    %262 = arith.extf %261 : vector<64x256xbf16> to vector<64x256xf32>
    %c0_224 = arith.constant 0 : index
    %c0_225 = arith.constant 0 : index
    %c0_226 = arith.constant 0 : index
    %263 = vector.load %arg21[%c0_224, %c0_225, %c0_226] : memref<4x3x8xf32, #tpu.memory_space<vmem>>, vector<1x3x8xf32>
    %264 = vector.shape_cast %263 : vector<1x3x8xf32> to vector<3x8xf32>
    %cst_227 = arith.constant dense<0.000000e+00> : vector<3x64xf32>
    %265 = tpu.matmul %264, %258, %cst_227 {dimension_numbers = #tpu.dot_dimension_numbers<[1], [0], [0], [1], [0, 0, 1, 1], [], []>} : vector<3x8xf32>, vector<8x64xf32>, vector<3x64xf32> -> vector<3x64xf32>
    %cst_228 = arith.constant dense<0.000000e+00> : vector<3x256xf32>
    %266 = tpu.matmul %265, %262, %cst_228 {dimension_numbers = #tpu.dot_dimension_numbers<[1], [0], [0], [1], [0, 0, 1, 1], [], []>} : vector<3x64xf32>, vector<64x256xf32>, vector<3x256xf32> -> vector<3x256xf32>
    %267 = arith.addf %259, %266 : vector<3x256xf32>
    %c1_229 = arith.constant 1 : index
    %c0_230 = arith.constant 0 : index
    %c0_231 = arith.constant 0 : index
    %268 = vector.load %arg22[%c1_229, %c0_230, %c0_231] : memref<4x64x256xbf16, #tpu.memory_space<vmem>>, vector<1x64x256xbf16>
    %269 = vector.shape_cast %268 : vector<1x64x256xbf16> to vector<64x256xbf16>
    %270 = arith.extf %269 : vector<64x256xbf16> to vector<64x256xf32>
    %c1_232 = arith.constant 1 : index
    %c0_233 = arith.constant 0 : index
    %c0_234 = arith.constant 0 : index
    %271 = vector.load %arg21[%c1_232, %c0_233, %c0_234] : memref<4x3x8xf32, #tpu.memory_space<vmem>>, vector<1x3x8xf32>
    %272 = vector.shape_cast %271 : vector<1x3x8xf32> to vector<3x8xf32>
    %cst_235 = arith.constant dense<0.000000e+00> : vector<3x64xf32>
    %273 = tpu.matmul %272, %258, %cst_235 {dimension_numbers = #tpu.dot_dimension_numbers<[1], [0], [0], [1], [0, 0, 1, 1], [], []>} : vector<3x8xf32>, vector<8x64xf32>, vector<3x64xf32> -> vector<3x64xf32>
    %cst_236 = arith.constant dense<0.000000e+00> : vector<3x256xf32>
    %274 = tpu.matmul %273, %270, %cst_236 {dimension_numbers = #tpu.dot_dimension_numbers<[1], [0], [0], [1], [0, 0, 1, 1], [], []>} : vector<3x64xf32>, vector<64x256xf32>, vector<3x256xf32> -> vector<3x256xf32>
    %275 = arith.addf %267, %274 : vector<3x256xf32>
    %c2_237 = arith.constant 2 : index
    %c0_238 = arith.constant 0 : index
    %c0_239 = arith.constant 0 : index
    %276 = vector.load %arg22[%c2_237, %c0_238, %c0_239] : memref<4x64x256xbf16, #tpu.memory_space<vmem>>, vector<1x64x256xbf16>
    %277 = vector.shape_cast %276 : vector<1x64x256xbf16> to vector<64x256xbf16>
    %278 = arith.extf %277 : vector<64x256xbf16> to vector<64x256xf32>
    %c2_240 = arith.constant 2 : index
    %c0_241 = arith.constant 0 : index
    %c0_242 = arith.constant 0 : index
    %279 = vector.load %arg21[%c2_240, %c0_241, %c0_242] : memref<4x3x8xf32, #tpu.memory_space<vmem>>, vector<1x3x8xf32>
    %280 = vector.shape_cast %279 : vector<1x3x8xf32> to vector<3x8xf32>
    %cst_243 = arith.constant dense<0.000000e+00> : vector<3x64xf32>
    %281 = tpu.matmul %280, %258, %cst_243 {dimension_numbers = #tpu.dot_dimension_numbers<[1], [0], [0], [1], [0, 0, 1, 1], [], []>} : vector<3x8xf32>, vector<8x64xf32>, vector<3x64xf32> -> vector<3x64xf32>
    %cst_244 = arith.constant dense<0.000000e+00> : vector<3x256xf32>
    %282 = tpu.matmul %281, %278, %cst_244 {dimension_numbers = #tpu.dot_dimension_numbers<[1], [0], [0], [1], [0, 0, 1, 1], [], []>} : vector<3x64xf32>, vector<64x256xf32>, vector<3x256xf32> -> vector<3x256xf32>
    %283 = arith.addf %275, %282 : vector<3x256xf32>
    %c3_245 = arith.constant 3 : index
    %c0_246 = arith.constant 0 : index
    %c0_247 = arith.constant 0 : index
    %284 = vector.load %arg22[%c3_245, %c0_246, %c0_247] : memref<4x64x256xbf16, #tpu.memory_space<vmem>>, vector<1x64x256xbf16>
    %285 = vector.shape_cast %284 : vector<1x64x256xbf16> to vector<64x256xbf16>
    %286 = arith.extf %285 : vector<64x256xbf16> to vector<64x256xf32>
    %c3_248 = arith.constant 3 : index
    %c0_249 = arith.constant 0 : index
    %c0_250 = arith.constant 0 : index
    %287 = vector.load %arg21[%c3_248, %c0_249, %c0_250] : memref<4x3x8xf32, #tpu.memory_space<vmem>>, vector<1x3x8xf32>
    %288 = vector.shape_cast %287 : vector<1x3x8xf32> to vector<3x8xf32>
    %cst_251 = arith.constant dense<0.000000e+00> : vector<3x64xf32>
    %289 = tpu.matmul %288, %258, %cst_251 {dimension_numbers = #tpu.dot_dimension_numbers<[1], [0], [0], [1], [0, 0, 1, 1], [], []>} : vector<3x8xf32>, vector<8x64xf32>, vector<3x64xf32> -> vector<3x64xf32>
    %cst_252 = arith.constant dense<0.000000e+00> : vector<3x256xf32>
    %290 = tpu.matmul %289, %286, %cst_252 {dimension_numbers = #tpu.dot_dimension_numbers<[1], [0], [0], [1], [0, 0, 1, 1], [], []>} : vector<3x64xf32>, vector<64x256xf32>, vector<3x256xf32> -> vector<3x256xf32>
    %291 = arith.addf %283, %290 : vector<3x256xf32>
    %c0_253 = arith.constant 0 : index
    %c0_254 = arith.constant 0 : index
    %292 = vector.load %arg23[%c0_253, %c0_254] : memref<3x1xf32, #tpu.memory_space<vmem>>, vector<3x1xf32>
    %293 = vector.broadcast %292 : vector<3x1xf32> to vector<3x256xf32>
    %294 = arith.addf %291, %293 : vector<3x256xf32>
    %295 = arith.negf %294 : vector<3x256xf32>
    %296 = math.exp %295 : vector<3x256xf32>
    %cst_255 = arith.constant 1.000000e+00 : f32
    %297 = vector.broadcast %cst_255 : f32 to vector<3x256xf32>
    %298 = arith.addf %297, %296 : vector<3x256xf32>
    %299 = arith.divf %297, %298 : vector<3x256xf32>
    %c0_256 = arith.constant 0 : index
    %c0_257 = arith.constant 0 : index
    %c0_258 = arith.constant 0 : index
    %300 = vector.load %arg24[%c0_256, %c0_257, %c0_258] : memref<1x3x256xf32, #tpu.memory_space<vmem>>, vector<1x3x256xf32>
    %301 = vector.shape_cast %300 : vector<1x3x256xf32> to vector<3x256xf32>
    %302 = vector.shape_cast %299 : vector<3x256xf32> to vector<1x3x256xf32>
    tpu.vector_store %arg24[%c0_256, %c0_257, %c0_258], %302 {strides = array<i32>} : memref<1x3x256xf32, #tpu.memory_space<vmem>>, vector<1x3x256xf32>,
    return
  }
  func.func @transform_0(%arg0: i32) -> (i32, i32, i32) {
    %c0_i32 = arith.constant 0 : i32
    %c0_i32_0 = arith.constant 0 : i32
    %c0_i32_1 = arith.constant 0 : i32
    return %arg0, %c0_i32, %c0_i32_0 : i32, i32, i32
  }
  func.func @transform_1(%arg0: i32) -> (i32, i32, i32) {
    %c0_i32 = arith.constant 0 : i32
    %c0_i32_0 = arith.constant 0 : i32
    %c0_i32_1 = arith.constant 0 : i32
    %c0_i32_2 = arith.constant 0 : i32
    return %c0_i32, %c0_i32_0, %c0_i32_1 : i32, i32, i32
  }
  func.func @transform_2(%arg0: i32) -> (i32, i32, i32) {
    %c0_i32 = arith.constant 0 : i32
    %c0_i32_0 = arith.constant 0 : i32
    %c0_i32_1 = arith.constant 0 : i32
    %c0_i32_2 = arith.constant 0 : i32
    return %c0_i32, %c0_i32_0, %c0_i32_1 : i32, i32, i32
  }
  func.func @transform_3(%arg0: i32) -> (i32, i32) {
    %c0_i32 = arith.constant 0 : i32
    %c0_i32_0 = arith.constant 0 : i32
    %c0_i32_1 = arith.constant 0 : i32
    return %c0_i32, %c0_i32_0 : i32, i32
  }
  func.func @transform_4(%arg0: i32) -> (i32, i32, i32) {
    %c0_i32 = arith.constant 0 : i32
    %c0_i32_0 = arith.constant 0 : i32
    %c0_i32_1 = arith.constant 0 : i32
    %c0_i32_2 = arith.constant 0 : i32
    return %c0_i32, %c0_i32_0, %c0_i32_1 : i32, i32, i32
  }
  func.func @transform_5(%arg0: i32) -> (i32, i32, i32) {
    %c0_i32 = arith.constant 0 : i32
    %c0_i32_0 = arith.constant 0 : i32
    %c0_i32_1 = arith.constant 0 : i32
    %c0_i32_2 = arith.constant 0 : i32
    return %c0_i32, %c0_i32_0, %c0_i32_1 : i32, i32, i32
  }
  func.func @transform_6(%arg0: i32) -> (i32, i32) {
    %c0_i32 = arith.constant 0 : i32
    %c0_i32_0 = arith.constant 0 : i32
    %c0_i32_1 = arith.constant 0 : i32
    return %c0_i32, %c0_i32_0 : i32, i32
  }
  func.func @transform_7(%arg0: i32) -> (i32, i32, i32) {
    %c0_i32 = arith.constant 0 : i32
    %c0_i32_0 = arith.constant 0 : i32
    %c0_i32_1 = arith.constant 0 : i32
    %c0_i32_2 = arith.constant 0 : i32
    return %c0_i32, %c0_i32_0, %c0_i32_1 : i32, i32, i32
  }
  func.func @transform_8(%arg0: i32) -> (i32, i32, i32) {
    %c0_i32 = arith.constant 0 : i32
    %c0_i32_0 = arith.constant 0 : i32
    %c0_i32_1 = arith.constant 0 : i32
    %c0_i32_2 = arith.constant 0 : i32
    return %c0_i32, %c0_i32_0, %c0_i32_1 : i32, i32, i32
  }
  func.func @transform_9(%arg0: i32) -> (i32, i32) {
    %c0_i32 = arith.constant 0 : i32
    %c0_i32_0 = arith.constant 0 : i32
    %c0_i32_1 = arith.constant 0 : i32
    return %c0_i32, %c0_i32_0 : i32, i32
  }
  func.func @transform_10(%arg0: i32) -> (i32, i32, i32) {
    %c0_i32 = arith.constant 0 : i32
    %c0_i32_0 = arith.constant 0 : i32
    %c0_i32_1 = arith.constant 0 : i32
    %c0_i32_2 = arith.constant 0 : i32
    return %c0_i32, %c0_i32_0, %c0_i32_1 : i32, i32, i32
  }
  func.func @transform_11(%arg0: i32) -> (i32, i32) {
    %c0_i32 = arith.constant 0 : i32
    %c0_i32_0 = arith.constant 0 : i32
    %c0_i32_1 = arith.constant 0 : i32
    return %c0_i32, %c0_i32_0 : i32, i32
  }
  func.func @transform_12(%arg0: i32) -> (i32, i32, i32) {
    %c0_i32 = arith.constant 0 : i32
    %c0_i32_0 = arith.constant 0 : i32
    %c0_i32_1 = arith.constant 0 : i32
    %c0_i32_2 = arith.constant 0 : i32
    return %c0_i32, %c0_i32_0, %c0_i32_1 : i32, i32, i32
  }
  func.func @transform_13(%arg0: i32) -> (i32, i32) {
    %c0_i32 = arith.constant 0 : i32
    %c0_i32_0 = arith.constant 0 : i32
    %c0_i32_1 = arith.constant 0 : i32
    return %c0_i32, %c0_i32_0 : i32, i32
  }
  func.func @transform_14(%arg0: i32) -> (i32, i32, i32) {
    %c0_i32 = arith.constant 0 : i32
    %c0_i32_0 = arith.constant 0 : i32
    %c0_i32_1 = arith.constant 0 : i32
    %c0_i32_2 = arith.constant 0 : i32
    return %c0_i32, %c0_i32_0, %c0_i32_1 : i32, i32, i32
  }
  func.func @transform_15(%arg0: i32) -> (i32, i32, i32) {
    %c0_i32 = arith.constant 0 : i32
    %c0_i32_0 = arith.constant 0 : i32
    %c0_i32_1 = arith.constant 0 : i32
    %c0_i32_2 = arith.constant 0 : i32
    return %c0_i32, %c0_i32_0, %c0_i32_1 : i32, i32, i32
  }
  func.func @transform_16(%arg0: i32) -> (i32, i32) {
    %c0_i32 = arith.constant 0 : i32
    %c0_i32_0 = arith.constant 0 : i32
    %c0_i32_1 = arith.constant 0 : i32
    return %c0_i32, %c0_i32_0 : i32, i32
  }
  func.func @transform_17(%arg0: i32) -> (i32, i32, i32) {
    %c0_i32 = arith.constant 0 : i32
    %c0_i32_0 = arith.constant 0 : i32
    %c0_i32_1 = arith.constant 0 : i32
    %c0_i32_2 = arith.constant 0 : i32
    return %c0_i32, %c0_i32_0, %c0_i32_1 : i32, i32, i32
  }
  func.func @transform_18(%arg0: i32) -> (i32, i32, i32) {
    %c0_i32 = arith.constant 0 : i32
    %c0_i32_0 = arith.constant 0 : i32
    %c0_i32_1 = arith.constant 0 : i32
    %c0_i32_2 = arith.constant 0 : i32
    return %c0_i32, %c0_i32_0, %c0_i32_1 : i32, i32, i32
  }
  func.func @transform_19(%arg0: i32) -> (i32, i32) {
    %c0_i32 = arith.constant 0 : i32
    %c0_i32_0 = arith.constant 0 : i32
    %c0_i32_1 = arith.constant 0 : i32
    return %c0_i32, %c0_i32_0 : i32, i32
  }
  func.func @transform_20(%arg0: i32) -> (i32, i32, i32) {
    %c0_i32 = arith.constant 0 : i32
    %c0_i32_0 = arith.constant 0 : i32
    %c0_i32_1 = arith.constant 0 : i32
    %c0_i32_2 = arith.constant 0 : i32
    return %c0_i32, %c0_i32_0, %c0_i32_1 : i32, i32, i32
  }
  func.func @transform_21(%arg0: i32) -> (i32, i32, i32) {
    %c0_i32 = arith.constant 0 : i32
    %c0_i32_0 = arith.constant 0 : i32
    %c0_i32_1 = arith.constant 0 : i32
    %c0_i32_2 = arith.constant 0 : i32
    return %c0_i32, %c0_i32_0, %c0_i32_1 : i32, i32, i32
  }
  func.func @transform_22(%arg0: i32) -> (i32, i32) {
    %c0_i32 = arith.constant 0 : i32
    %c0_i32_0 = arith.constant 0 : i32
    %c0_i32_1 = arith.constant 0 : i32
    return %c0_i32, %c0_i32_0 : i32, i32
  }
  func.func @transform_23(%arg0: i32) -> (i32, i32, i32) {
    %c0_i32 = arith.constant 0 : i32
    %c0_i32_0 = arith.constant 0 : i32
    %c0_i32_1 = arith.constant 0 : i32
    return %arg0, %c0_i32, %c0_i32_0 : i32, i32, i32
  }
}

</mosaic_0001>

<llo_original>
// kernel: ae_forward.1
$region0: #{ae_forward.1}
  #allocation0 [shape = 'u32[]', space=smem, size = 0x4, offset = 0x4, fixed_abs, tag = 'smem constant byte address 0x4 - core index']
  #allocation1 [shape = 'u32[72,128]{1,0:T(1,128)}', space=vmem, size = 0x9000, scoped, tag = 'internal scratch']
  %s0 = inlined_call_operand.vmem [shape: f32[2,3,256], index: 0, kind: input, shape index: {}]
  %s1 = inlined_call_operand.vmem [shape: f32[4,8,3], index: 1, kind: input, shape index: {}]
  %s2 = inlined_call_operand.vmem [shape: bf16[4,256,64], index: 2, kind: input, shape index: {}]
  %s3 = inlined_call_operand.vmem [shape: f32[8,1], index: 3, kind: input, shape index: {}]
  %s4 = inlined_call_operand.vmem [shape: f32[4,16,8], index: 4, kind: input, shape index: {}]
  %s5 = inlined_call_operand.vmem [shape: bf16[4,64,16], index: 5, kind: input, shape index: {}]
  %s6 = inlined_call_operand.vmem [shape: f32[16,1], index: 6, kind: input, shape index: {}]
  %s7 = inlined_call_operand.vmem [shape: f32[4,32,16], index: 7, kind: input, shape index: {}]
  %s8 = inlined_call_operand.vmem [shape: bf16[4,16,4], index: 8, kind: input, shape index: {}]
  %s9 = inlined_call_operand.vmem [shape: f32[32,1], index: 9, kind: input, shape index: {}]
  %s10 = inlined_call_operand.vmem [shape: f32[4,32,32], index: 10, kind: input, shape index: {}]
  %s11 = inlined_call_operand.vmem [shape: f32[32,1], index: 11, kind: input, shape index: {}]
  %s12 = inlined_call_operand.vmem [shape: f32[4,32,32], index: 12, kind: input, shape index: {}]
  %s13 = inlined_call_operand.vmem [shape: f32[32,4], index: 13, kind: input, shape index: {}]
  %s14 = inlined_call_operand.vmem [shape: f32[4,16,32], index: 14, kind: input, shape index: {}]
  %s15 = inlined_call_operand.vmem [shape: bf16[4,4,16], index: 15, kind: input, shape index: {}]
  %s16 = inlined_call_operand.vmem [shape: f32[16,1], index: 16, kind: input, shape index: {}]
  %s17 = inlined_call_operand.vmem [shape: f32[4,8,16], index: 17, kind: input, shape index: {}]
  %s18 = inlined_call_operand.vmem [shape: bf16[4,16,64], index: 18, kind: input, shape index: {}]
  %s19 = inlined_call_operand.vmem [shape: f32[8,1], index: 19, kind: input, shape index: {}]
  %s20 = inlined_call_operand.vmem [shape: f32[4,3,8], index: 20, kind: input, shape index: {}]
  %s21 = inlined_call_operand.vmem [shape: bf16[4,64,256], index: 21, kind: input, shape index: {}]
  %s22 = inlined_call_operand.vmem [shape: f32[3,1], index: 22, kind: input, shape index: {}]
  %s23 = inlined_call_operand.vmem [shape: f32[2,3,256], index: 23, kind: output, shape index: {}]
  %s24 = sld [smem:[#allocation0]]
  $region125: #{ae_forward.1} parent=0
    _
  %s26 = ssub.s32 1, %s24
  %s27 = scalar_select 0, %s26, %s24
  loop: start=0, step=1, limit=4
  $region2: #{ae_forward.1} parent=0 // loop_pre_header
    _
  $region3: #{ae_forward.1} parent=0 // loop_header
    %s29 = sphi 0, %s33
    %p30 = scmp.ge.s32.totalorder %s29, 4
    %s39 = sphi 0, %s41
    %s42 = sphi 0, %s39
    %s43 = sphi 0, %s42
    %s59 = sphi 0, %s43
    %s63 = sphi 0, %s63
    %s65 = sphi 0, %s63
    %s66 = sphi 0, %s65
    %s80 = sphi 0, %s66
    %s84 = sphi 0, %s84
    %s86 = sphi 0, %s84
    %s87 = sphi 0, %s86
    %s101 = sphi 0, %s87
    %s105 = sphi 0, %s105
    %s107 = sphi 0, %s105
    %s108 = sphi 0, %s107
    %s122 = sphi 0, %s108
    %s126 = sphi 0, %s126
    %s128 = sphi 0, %s126
    %s129 = sphi 0, %s128
    %s143 = sphi 0, %s129
    %s147 = sphi 0, %s147
    %s149 = sphi 0, %s147
    %s150 = sphi 0, %s149
    %s164 = sphi 0, %s150
    %s168 = sphi 0, %s168
    %s170 = sphi 0, %s168
    %s171 = sphi 0, %s170
    %s185 = sphi 0, %s171
    %s189 = sphi 0, %s189
    %s191 = sphi 0, %s189
    %s192 = sphi 0, %s191
    %s206 = sphi 0, %s192
    %s210 = sphi 0, %s210
    %s212 = sphi 0, %s210
    %s213 = sphi 0, %s212
    %s227 = sphi 0, %s213
    %s231 = sphi 0, %s231
    %s233 = sphi 0, %s231
    %s234 = sphi 0, %s233
    %s248 = sphi 0, %s234
    %s252 = sphi 0, %s252
    %s254 = sphi 0, %s252
    %s255 = sphi 0, %s254
    %s269 = sphi 0, %s255
    %s273 = sphi 0, %s273
    %s275 = sphi 0, %s273
    %s276 = sphi 0, %s275
    %s290 = sphi 0, %s276
    %s294 = sphi 0, %s294
    %s296 = sphi 0, %s294
    %s297 = sphi 0, %s296
    %s311 = sphi 0, %s297
    %s315 = sphi 0, %s315
    %s317 = sphi 0, %s315
    %s318 = sphi 0, %s317
    %s332 = sphi 0, %s318
    %s336 = sphi 0, %s336
    %s338 = sphi 0, %s336
    %s339 = sphi 0, %s338
    %s353 = sphi 0, %s339
    %s357 = sphi 0, %s357
    %s359 = sphi 0, %s357
    %s360 = sphi 0, %s359
    %s374 = sphi 0, %s360
    %s378 = sphi 0, %s378
    %s380 = sphi 0, %s378
    %s381 = sphi 0, %s380
    %s395 = sphi 0, %s381
    %s399 = sphi 0, %s399
    %s401 = sphi 0, %s399
    %s402 = sphi 0, %s401
    %s416 = sphi 0, %s402
    %s420 = sphi 0, %s420
    %s422 = sphi 0, %s420
    %s423 = sphi 0, %s422
    %s437 = sphi 0, %s423
    %s441 = sphi 0, %s441
    %s443 = sphi 0, %s441
    %s444 = sphi 0, %s443
    %s458 = sphi 0, %s444
    %s462 = sphi 0, %s462
    %s464 = sphi 0, %s462
    %s465 = sphi 0, %s464
    %s479 = sphi 0, %s465
    %s483 = sphi 0, %s483
    %s485 = sphi 0, %s483
    %s486 = sphi 0, %s485
    %s500 = sphi 0, %s486
    %s504 = sphi 0, %s504
    %s506 = sphi 0, %s504
    %s507 = sphi 0, %s506
    %s521 = sphi 0, %s507
    %s527 = sphi 0, %s529
    %s530 = sphi 0, %s527
    %s531 = sphi 0, %s530
    %s547 = sphi 0, %s531
  $region4: #{ae_forward.1} parent=0 // loop_header_branch
    %32 = sbr.rel (%p30) target = $region8
  $region5: #{ae_forward.1} parent=0 // loop_body
    %s34 = ssub.s32 %s29, 1
    %s35 = ssub.s32 %s29, 2
    %s36 = sadd.s32 %s29, 1
    %s37 = ssub.s32 %s29, %s36
    %p38 = scmp.eq.s32.totalorder %s37, 0
    %s40 = sadd.s32 %s39, 1
    %s41 = scalar_select %p38, %s39, %s40
    %p44 = pneg %p38
    %p45 = scmp.eq.s32.totalorder %s29, 1
    %p46 = por %p44, %p45
    %p47 = scmp.ne.s32.totalorder %s39, %s42
    %p48 = scmp.eq.s32.totalorder %s29, 0
    %p49 = por %p47, %p48
    %p50 = scmp.ne.s32.totalorder %s39, %s42
    %p51 = scmp.eq.s32.totalorder %s34, 1
    %p52 = por %p50, %p51
    %p53 = scmp.ne.s32.totalorder %s42, %s43
    %p54 = scmp.eq.s32.totalorder %s34, 0
    %p55 = por %p53, %p54
    %p56 = scmp.ne.s32.totalorder %s42, %s43
    %p57 = scmp.eq.s32.totalorder %s35, 1
    %p58 = por %p56, %p57
    %p60 = scmp.ne.s32.totalorder %s43, %s59
    %p61 = scmp.eq.s32.totalorder %s35, 0
    %p62 = por %p60, %p61
    %s64 = sadd.s32 %s63, 1
    %p67 = scmp.eq.s32.totalorder %s29, 1
    %p68 = scmp.ne.s32.totalorder %s63, %s65
    %p69 = scmp.eq.s32.totalorder %s29, 0
    %p70 = por %p68, %p69
    %p71 = scmp.ne.s32.totalorder %s63, %s65
    %p72 = scmp.eq.s32.totalorder %s34, 1
    %p73 = por %p71, %p72
    %p74 = scmp.ne.s32.totalorder %s65, %s66
    %p75 = scmp.eq.s32.totalorder %s34, 0
    %p76 = por %p74, %p75
    %p77 = scmp.ne.s32.totalorder %s65, %s66
    %p78 = scmp.eq.s32.totalorder %s35, 1
    %p79 = por %p77, %p78
    %p81 = scmp.ne.s32.totalorder %s66, %s80
    %p82 = scmp.eq.s32.totalorder %s35, 0
    %p83 = por %p81, %p82
    %s85 = sadd.s32 %s84, 1
    %p88 = scmp.eq.s32.totalorder %s29, 1
    %p89 = scmp.ne.s32.totalorder %s84, %s86
    %p90 = scmp.eq.s32.totalorder %s29, 0
    %p91 = por %p89, %p90
    %p92 = scmp.ne.s32.totalorder %s84, %s86
    %p93 = scmp.eq.s32.totalorder %s34, 1
    %p94 = por %p92, %p93
    %p95 = scmp.ne.s32.totalorder %s86, %s87
    %p96 = scmp.eq.s32.totalorder %s34, 0
    %p97 = por %p95, %p96
    %p98 = scmp.ne.s32.totalorder %s86, %s87
    %p99 = scmp.eq.s32.totalorder %s35, 1
    %p100 = por %p98, %p99
    %p102 = scmp.ne.s32.totalorder %s87, %s101
    %p103 = scmp.eq.s32.totalorder %s35, 0
    %p104 = por %p102, %p103
    %s106 = sadd.s32 %s105, 1
    %p109 = scmp.eq.s32.totalorder %s29, 1
    %p110 = scmp.ne.s32.totalorder %s105, %s107
    %p111 = scmp.eq.s32.totalorder %s29, 0
    %p112 = por %p110, %p111
    %p113 = scmp.ne.s32.totalorder %s105, %s107
    %p114 = scmp.eq.s32.totalorder %s34, 1
    %p115 = por %p113, %p114
    %p116 = scmp.ne.s32.totalorder %s107, %s108
    %p117 = scmp.eq.s32.totalorder %s34, 0
    %p118 = por %p116, %p117
    %p119 = scmp.ne.s32.totalorder %s107, %s108
    %p120 = scmp.eq.s32.totalorder %s35, 1
    %p121 = por %p119, %p120
    %p123 = scmp.ne.s32.totalorder %s108, %s122
    %p124 = scmp.eq.s32.totalorder %s35, 0
    %p125 = por %p123, %p124
    %s127 = sadd.s32 %s126, 1
    %p130 = scmp.eq.s32.totalorder %s29, 1
    %p131 = scmp.ne.s32.totalorder %s126, %s128
    %p132 = scmp.eq.s32.totalorder %s29, 0
    %p133 = por %p131, %p132
    %p134 = scmp.ne.s32.totalorder %s126, %s128
    %p135 = scmp.eq.s32.totalorder %s34, 1
    %p136 = por %p134, %p135
    %p137 = scmp.ne.s32.totalorder %s128, %s129
    %p138 = scmp.eq.s32.totalorder %s34, 0
    %p139 = por %p137, %p138
    %p140 = scmp.ne.s32.totalorder %s128, %s129
    %p141 = scmp.eq.s32.totalorder %s35, 1
    %p142 = por %p140, %p141
    %p144 = scmp.ne.s32.totalorder %s129, %s143
    %p145 = scmp.eq.s32.totalorder %s35, 0
    %p146 = por %p144, %p145
    %s148 = sadd.s32 %s147, 1
    %p151 = scmp.eq.s32.totalorder %s29, 1
    %p152 = scmp.ne.s32.totalorder %s147, %s149
    %p153 = scmp.eq.s32.totalorder %s29, 0
    %p154 = por %p152, %p153
    %p155 = scmp.ne.s32.totalorder %s147, %s149
    %p156 = scmp.eq.s32.totalorder %s34, 1
    %p157 = por %p155, %p156
    %p158 = scmp.ne.s32.totalorder %s149, %s150
    %p159 = scmp.eq.s32.totalorder %s34, 0
    %p160 = por %p158, %p159
    %p161 = scmp.ne.s32.totalorder %s149, %s150
    %p162 = scmp.eq.s32.totalorder %s35, 1
    %p163 = por %p161, %p162
    %p165 = scmp.ne.s32.totalorder %s150, %s164
    %p166 = scmp.eq.s32.totalorder %s35, 0
    %p167 = por %p165, %p166
    %s169 = sadd.s32 %s168, 1
    %p172 = scmp.eq.s32.totalorder %s29, 1
    %p173 = scmp.ne.s32.totalorder %s168, %s170
    %p174 = scmp.eq.s32.totalorder %s29, 0
    %p175 = por %p173, %p174
    %p176 = scmp.ne.s32.totalorder %s168, %s170
    %p177 = scmp.eq.s32.totalorder %s34, 1
    %p178 = por %p176, %p177
    %p179 = scmp.ne.s32.totalorder %s170, %s171
    %p180 = scmp.eq.s32.totalorder %s34, 0
    %p181 = por %p179, %p180
    %p182 = scmp.ne.s32.totalorder %s170, %s171
    %p183 = scmp.eq.s32.totalorder %s35, 1
    %p184 = por %p182, %p183
    %p186 = scmp.ne.s32.totalorder %s171, %s185
    %p187 = scmp.eq.s32.totalorder %s35, 0
    %p188 = por %p186, %p187
    %s190 = sadd.s32 %s189, 1
    %p193 = scmp.eq.s32.totalorder %s29, 1
    %p194 = scmp.ne.s32.totalorder %s189, %s191
    %p195 = scmp.eq.s32.totalorder %s29, 0
    %p196 = por %p194, %p195
    %p197 = scmp.ne.s32.totalorder %s189, %s191
    %p198 = scmp.eq.s32.totalorder %s34, 1
    %p199 = por %p197, %p198
    %p200 = scmp.ne.s32.totalorder %s191, %s192
    %p201 = scmp.eq.s32.totalorder %s34, 0
    %p202 = por %p200, %p201
    %p203 = scmp.ne.s32.totalorder %s191, %s192
    %p204 = scmp.eq.s32.totalorder %s35, 1
    %p205 = por %p203, %p204
    %p207 = scmp.ne.s32.totalorder %s192, %s206
    %p208 = scmp.eq.s32.totalorder %s35, 0
    %p209 = por %p207, %p208
    %s211 = sadd.s32 %s210, 1
    %p214 = scmp.eq.s32.totalorder %s29, 1
    %p215 = scmp.ne.s32.totalorder %s210, %s212
    %p216 = scmp.eq.s32.totalorder %s29, 0
    %p217 = por %p215, %p216
    %p218 = scmp.ne.s32.totalorder %s210, %s212
    %p219 = scmp.eq.s32.totalorder %s34, 1
    %p220 = por %p218, %p219
    %p221 = scmp.ne.s32.totalorder %s212, %s213
    %p222 = scmp.eq.s32.totalorder %s34, 0
    %p223 = por %p221, %p222
    %p224 = scmp.ne.s32.totalorder %s212, %s213
    %p225 = scmp.eq.s32.totalorder %s35, 1
    %p226 = por %p224, %p225
    %p228 = scmp.ne.s32.totalorder %s213, %s227
    %p229 = scmp.eq.s32.totalorder %s35, 0
    %p230 = por %p228, %p229
    %s232 = sadd.s32 %s231, 1
    %p235 = scmp.eq.s32.totalorder %s29, 1
    %p236 = scmp.ne.s32.totalorder %s231, %s233
    %p237 = scmp.eq.s32.totalorder %s29, 0
    %p238 = por %p236, %p237
    %p239 = scmp.ne.s32.totalorder %s231, %s233
    %p240 = scmp.eq.s32.totalorder %s34, 1
    %p241 = por %p239, %p240
    %p242 = scmp.ne.s32.totalorder %s233, %s234
    %p243 = scmp.eq.s32.totalorder %s34, 0
    %p244 = por %p242, %p243
    %p245 = scmp.ne.s32.totalorder %s233, %s234
    %p246 = scmp.eq.s32.totalorder %s35, 1
    %p247 = por %p245, %p246
    %p249 = scmp.ne.s32.totalorder %s234, %s248
    %p250 = scmp.eq.s32.totalorder %s35, 0
    %p251 = por %p249, %p250
    %s253 = sadd.s32 %s252, 1
    %p256 = scmp.eq.s32.totalorder %s29, 1
    %p257 = scmp.ne.s32.totalorder %s252, %s254
    %p258 = scmp.eq.s32.totalorder %s29, 0
    %p259 = por %p257, %p258
    %p260 = scmp.ne.s32.totalorder %s252, %s254
    %p261 = scmp.eq.s32.totalorder %s34, 1
    %p262 = por %p260, %p261
    %p263 = scmp.ne.s32.totalorder %s254, %s255
    %p264 = scmp.eq.s32.totalorder %s34, 0
    %p265 = por %p263, %p264
    %p266 = scmp.ne.s32.totalorder %s254, %s255
    %p267 = scmp.eq.s32.totalorder %s35, 1
    %p268 = por %p266, %p267
    %p270 = scmp.ne.s32.totalorder %s255, %s269
    %p271 = scmp.eq.s32.totalorder %s35, 0
    %p272 = por %p270, %p271
    %s274 = sadd.s32 %s273, 1
    %p277 = scmp.eq.s32.totalorder %s29, 1
    %p278 = scmp.ne.s32.totalorder %s273, %s275
    %p279 = scmp.eq.s32.totalorder %s29, 0
    %p280 = por %p278, %p279
    %p281 = scmp.ne.s32.totalorder %s273, %s275
    %p282 = scmp.eq.s32.totalorder %s34, 1
    %p283 = por %p281, %p282
    %p284 = scmp.ne.s32.totalorder %s275, %s276
    %p285 = scmp.eq.s32.totalorder %s34, 0
    %p286 = por %p284, %p285
    %p287 = scmp.ne.s32.totalorder %s275, %s276
    %p288 = scmp.eq.s32.totalorder %s35, 1
    %p289 = por %p287, %p288
    %p291 = scmp.ne.s32.totalorder %s276, %s290
    %p292 = scmp.eq.s32.totalorder %s35, 0
    %p293 = por %p291, %p292
    %s295 = sadd.s32 %s294, 1
    %p298 = scmp.eq.s32.totalorder %s29, 1
    %p299 = scmp.ne.s32.totalorder %s294, %s296
    %p300 = scmp.eq.s32.totalorder %s29, 0
    %p301 = por %p299, %p300
    %p302 = scmp.ne.s32.totalorder %s294, %s296
    %p303 = scmp.eq.s32.totalorder %s34, 1
    %p304 = por %p302, %p303
    %p305 = scmp.ne.s32.totalorder %s296, %s297
    %p306 = scmp.eq.s32.totalorder %s34, 0
    %p307 = por %p305, %p306
    %p308 = scmp.ne.s32.totalorder %s296, %s297
    %p309 = scmp.eq.s32.totalorder %s35, 1
    %p310 = por %p308, %p309
    %p312 = scmp.ne.s32.totalorder %s297, %s311
    %p313 = scmp.eq.s32.totalorder %s35, 0
    %p314 = por %p312, %p313
    %s316 = sadd.s32 %s315, 1
    %p319 = scmp.eq.s32.totalorder %s29, 1
    %p320 = scmp.ne.s32.totalorder %s315, %s317
    %p321 = scmp.eq.s32.totalorder %s29, 0
    %p322 = por %p320, %p321
    %p323 = scmp.ne.s32.totalorder %s315, %s317
    %p324 = scmp.eq.s32.totalorder %s34, 1
    %p325 = por %p323, %p324
    %p326 = scmp.ne.s32.totalorder %s317, %s318
    %p327 = scmp.eq.s32.totalorder %s34, 0
    %p328 = por %p326, %p327
    %p329 = scmp.ne.s32.totalorder %s317, %s318
    %p330 = scmp.eq.s32.totalorder %s35, 1
    %p331 = por %p329, %p330
    %p333 = scmp.ne.s32.totalorder %s318, %s332
    %p334 = scmp.eq.s32.totalorder %s35, 0
    %p335 = por %p333, %p334
    %s337 = sadd.s32 %s336, 1
    %p340 = scmp.eq.s32.totalorder %s29, 1
    %p341 = scmp.ne.s32.totalorder %s336, %s338
    %p342 = scmp.eq.s32.totalorder %s29, 0
    %p343 = por %p341, %p342
    %p344 = scmp.ne.s32.totalorder %s336, %s338
    %p345 = scmp.eq.s32.totalorder %s34, 1
    %p346 = por %p344, %p345
    %p347 = scmp.ne.s32.totalorder %s338, %s339
    %p348 = scmp.eq.s32.totalorder %s34, 0
    %p349 = por %p347, %p348
    %p350 = scmp.ne.s32.totalorder %s338, %s339
    %p351 = scmp.eq.s32.totalorder %s35, 1
    %p352 = por %p350, %p351
    %p354 = scmp.ne.s32.totalorder %s339, %s353
    %p355 = scmp.eq.s32.totalorder %s35, 0
    %p356 = por %p354, %p355
    %s358 = sadd.s32 %s357, 1
    %p361 = scmp.eq.s32.totalorder %s29, 1
    %p362 = scmp.ne.s32.totalorder %s357, %s359
    %p363 = scmp.eq.s32.totalorder %s29, 0
    %p364 = por %p362, %p363
    %p365 = scmp.ne.s32.totalorder %s357, %s359
    %p366 = scmp.eq.s32.totalorder %s34, 1
    %p367 = por %p365, %p366
    %p368 = scmp.ne.s32.totalorder %s359, %s360
    %p369 = scmp.eq.s32.totalorder %s34, 0
    %p370 = por %p368, %p369
    %p371 = scmp.ne.s32.totalorder %s359, %s360
    %p372 = scmp.eq.s32.totalorder %s35, 1
    %p373 = por %p371, %p372
    %p375 = scmp.ne.s32.totalorder %s360, %s374
    %p376 = scmp.eq.s32.totalorder %s35, 0
    %p377 = por %p375, %p376
    %s379 = sadd.s32 %s378, 1
    %p382 = scmp.eq.s32.totalorder %s29, 1
    %p383 = scmp.ne.s32.totalorder %s378, %s380
    %p384 = scmp.eq.s32.totalorder %s29, 0
    %p385 = por %p383, %p384
    %p386 = scmp.ne.s32.totalorder %s378, %s380
    %p387 = scmp.eq.s32.totalorder %s34, 1
    %p388 = por %p386, %p387
    %p389 = scmp.ne.s32.totalorder %s380, %s381
    %p390 = scmp.eq.s32.totalorder %s34, 0
    %p391 = por %p389, %p390
    %p392 = scmp.ne.s32.totalorder %s380, %s381
    %p393 = scmp.eq.s32.totalorder %s35, 1
    %p394 = por %p392, %p393
    %p396 = scmp.ne.s32.totalorder %s381, %s395
    %p397 = scmp.eq.s32.totalorder %s35, 0
    %p398 = por %p396, %p397
    %s400 = sadd.s32 %s399, 1
    %p403 = scmp.eq.s32.totalorder %s29, 1
    %p404 = scmp.ne.s32.totalorder %s399, %s401
    %p405 = scmp.eq.s32.totalorder %s29, 0
    %p406 = por %p404, %p405
    %p407 = scmp.ne.s32.totalorder %s399, %s401
    %p408 = scmp.eq.s32.totalorder %s34, 1
    %p409 = por %p407, %p408
    %p410 = scmp.ne.s32.totalorder %s401, %s402
    %p411 = scmp.eq.s32.totalorder %s34, 0
    %p412 = por %p410, %p411
    %p413 = scmp.ne.s32.totalorder %s401, %s402
    %p414 = scmp.eq.s32.totalorder %s35, 1
    %p415 = por %p413, %p414
    %p417 = scmp.ne.s32.totalorder %s402, %s416
    %p418 = scmp.eq.s32.totalorder %s35, 0
    %p419 = por %p417, %p418
    %s421 = sadd.s32 %s420, 1
    %p424 = scmp.eq.s32.totalorder %s29, 1
    %p425 = scmp.ne.s32.totalorder %s420, %s422
    %p426 = scmp.eq.s32.totalorder %s29, 0
    %p427 = por %p425, %p426
    %p428 = scmp.ne.s32.totalorder %s420, %s422
    %p429 = scmp.eq.s32.totalorder %s34, 1
    %p430 = por %p428, %p429
    %p431 = scmp.ne.s32.totalorder %s422, %s423
    %p432 = scmp.eq.s32.totalorder %s34, 0
    %p433 = por %p431, %p432
    %p434 = scmp.ne.s32.totalorder %s422, %s423
    %p435 = scmp.eq.s32.totalorder %s35, 1
    %p436 = por %p434, %p435
    %p438 = scmp.ne.s32.totalorder %s423, %s437
    %p439 = scmp.eq.s32.totalorder %s35, 0
    %p440 = por %p438, %p439
    %s442 = sadd.s32 %s441, 1
    %p445 = scmp.eq.s32.totalorder %s29, 1
    %p446 = scmp.ne.s32.totalorder %s441, %s443
    %p447 = scmp.eq.s32.totalorder %s29, 0
    %p448 = por %p446, %p447
    %p449 = scmp.ne.s32.totalorder %s441, %s443
    %p450 = scmp.eq.s32.totalorder %s34, 1
    %p451 = por %p449, %p450
    %p452 = scmp.ne.s32.totalorder %s443, %s444
    %p453 = scmp.eq.s32.totalorder %s34, 0
    %p454 = por %p452, %p453
    %p455 = scmp.ne.s32.totalorder %s443, %s444
    %p456 = scmp.eq.s32.totalorder %s35, 1
    %p457 = por %p455, %p456
    %p459 = scmp.ne.s32.totalorder %s444, %s458
    %p460 = scmp.eq.s32.totalorder %s35, 0
    %p461 = por %p459, %p460
    %s463 = sadd.s32 %s462, 1
    %p466 = scmp.eq.s32.totalorder %s29, 1
    %p467 = scmp.ne.s32.totalorder %s462, %s464
    %p468 = scmp.eq.s32.totalorder %s29, 0
    %p469 = por %p467, %p468
    %p470 = scmp.ne.s32.totalorder %s462, %s464
    %p471 = scmp.eq.s32.totalorder %s34, 1
    %p472 = por %p470, %p471
    %p473 = scmp.ne.s32.totalorder %s464, %s465
    %p474 = scmp.eq.s32.totalorder %s34, 0
    %p475 = por %p473, %p474
    %p476 = scmp.ne.s32.totalorder %s464, %s465
    %p477 = scmp.eq.s32.totalorder %s35, 1
    %p478 = por %p476, %p477
    %p480 = scmp.ne.s32.totalorder %s465, %s479
    %p481 = scmp.eq.s32.totalorder %s35, 0
    %p482 = por %p480, %p481
    %s484 = sadd.s32 %s483, 1
    %p487 = scmp.eq.s32.totalorder %s29, 1
    %p488 = scmp.ne.s32.totalorder %s483, %s485
    %p489 = scmp.eq.s32.totalorder %s29, 0
    %p490 = por %p488, %p489
    %p491 = scmp.ne.s32.totalorder %s483, %s485
    %p492 = scmp.eq.s32.totalorder %s34, 1
    %p493 = por %p491, %p492
    %p494 = scmp.ne.s32.totalorder %s485, %s486
    %p495 = scmp.eq.s32.totalorder %s34, 0
    %p496 = por %p494, %p495
    %p497 = scmp.ne.s32.totalorder %s485, %s486
    %p498 = scmp.eq.s32.totalorder %s35, 1
    %p499 = por %p497, %p498
    %p501 = scmp.ne.s32.totalorder %s486, %s500
    %p502 = scmp.eq.s32.totalorder %s35, 0
    %p503 = por %p501, %p502
    %s505 = sadd.s32 %s504, 1
    %p508 = scmp.eq.s32.totalorder %s29, 1
    %p509 = scmp.ne.s32.totalorder %s504, %s506
    %p510 = scmp.eq.s32.totalorder %s29, 0
    %p511 = por %p509, %p510
    %p512 = scmp.ne.s32.totalorder %s504, %s506
    %p513 = scmp.eq.s32.totalorder %s34, 1
    %p514 = por %p512, %p513
    %p515 = scmp.ne.s32.totalorder %s506, %s507
    %p516 = scmp.eq.s32.totalorder %s34, 0
    %p517 = por %p515, %p516
    %p518 = scmp.ne.s32.totalorder %s506, %s507
    %p519 = scmp.eq.s32.totalorder %s35, 1
    %p520 = por %p518, %p519
    %p522 = scmp.ne.s32.totalorder %s507, %s521
    %p523 = scmp.eq.s32.totalorder %s35, 0
    %p524 = por %p522, %p523
    %s525 = ssub.s32 %s29, %s36
    %p526 = scmp.eq.s32.totalorder %s525, 0
    %s528 = sadd.s32 %s527, 1
    %s529 = scalar_select %p526, %s527, %s528
    %p532 = pneg %p526
    %p533 = scmp.eq.s32.totalorder %s29, 1
    %p534 = por %p532, %p533
    %p535 = scmp.ne.s32.totalorder %s527, %s530
    %p536 = scmp.eq.s32.totalorder %s29, 0
    %p537 = por %p535, %p536
    %p538 = scmp.ne.s32.totalorder %s527, %s530
    %p539 = scmp.eq.s32.totalorder %s34, 1
    %p540 = por %p538, %p539
    %p541 = scmp.ne.s32.totalorder %s530, %s531
    %p542 = scmp.eq.s32.totalorder %s34, 0
    %p543 = por %p541, %p542
    %p544 = scmp.ne.s32.totalorder %s530, %s531
    %p545 = scmp.eq.s32.totalorder %s35, 1
    %p546 = por %p544, %p545
    %p548 = scmp.ne.s32.totalorder %s531, %s547
    %p549 = scmp.eq.s32.totalorder %s35, 0
    %p550 = por %p548, %p549
    %p551 = scmp.le.s32.totalorder 1, %s29
    %p552 = scmp.lt.s32.totalorder %s29, 3
    %p553 = pnand %p551, %p552
    %p554 = pneg %p553
    // Predicated region
    $region9: #{ae_forward.1} parent=5 // pred_check
      _
    $region10: #{ae_forward.1} parent=5 // pred_check_branch
      %556 = sbr.rel (%p553) target = $region12
    $region11: #{ae_forward.1} parent=5 // pred_region
      %s557 = ssub.s32 %s29, 1
      // Predicated region
      $region13: #{ae_forward.1} parent=11 // pred_check
        %p558 = pneg %p76
      $region14: #{ae_forward.1} parent=11 // pred_check_branch
        %560 = sbr.rel (%p558) target = $region16
      $region15: #{ae_forward.1} parent=11 // pred_region
        _
      $region16: #{ae_forward.1} parent=11 // pred_fallthru
        _
      // Predicated region
      $region17: #{ae_forward.1} parent=11 // pred_check
        %p561 = pneg %p97
      $region18: #{ae_forward.1} parent=11 // pred_check_branch
        %563 = sbr.rel (%p561) target = $region20
      $region19: #{ae_forward.1} parent=11 // pred_region
        _
      $region20: #{ae_forward.1} parent=11 // pred_fallthru
        _
      // Predicated region
      $region21: #{ae_forward.1} parent=11 // pred_check
        %p564 = pneg %p118
      $region22: #{ae_forward.1} parent=11 // pred_check_branch
        %566 = sbr.rel (%p564) target = $region24
      $region23: #{ae_forward.1} parent=11 // pred_region
        _
      $region24: #{ae_forward.1} parent=11 // pred_fallthru
        _
      // Predicated region
      $region25: #{ae_forward.1} parent=11 // pred_check
        %p567 = pneg %p139
      $region26: #{ae_forward.1} parent=11 // pred_check_branch
        %569 = sbr.rel (%p567) target = $region28
      $region27: #{ae_forward.1} parent=11 // pred_region
        _
      $region28: #{ae_forward.1} parent=11 // pred_fallthru
        _
      // Predicated region
      $region29: #{ae_forward.1} parent=11 // pred_check
        %p570 = pneg %p160
      $region30: #{ae_forward.1} parent=11 // pred_check_branch
        %572 = sbr.rel (%p570) target = $region32
      $region31: #{ae_forward.1} parent=11 // pred_region
        _
      $region32: #{ae_forward.1} parent=11 // pred_fallthru
        _
      // Predicated region
      $region33: #{ae_forward.1} parent=11 // pred_check
        %p573 = pneg %p181
      $region34: #{ae_forward.1} parent=11 // pred_check_branch
        %575 = sbr.rel (%p573) target = $region36
      $region35: #{ae_forward.1} parent=11 // pred_region
        _
      $region36: #{ae_forward.1} parent=11 // pred_fallthru
        _
      // Predicated region
      $region37: #{ae_forward.1} parent=11 // pred_check
        %p576 = pneg %p202
      $region38: #{ae_forward.1} parent=11 // pred_check_branch
        %578 = sbr.rel (%p576) target = $region40
      $region39: #{ae_forward.1} parent=11 // pred_region
        _
      $region40: #{ae_forward.1} parent=11 // pred_fallthru
        _
      // Predicated region
      $region41: #{ae_forward.1} parent=11 // pred_check
        %p579 = pneg %p223
      $region42: #{ae_forward.1} parent=11 // pred_check_branch
        %581 = sbr.rel (%p579) target = $region44
      $region43: #{ae_forward.1} parent=11 // pred_region
        _
      $region44: #{ae_forward.1} parent=11 // pred_fallthru
        _
      // Predicated region
      $region45: #{ae_forward.1} parent=11 // pred_check
        %p582 = pneg %p244
      $region46: #{ae_forward.1} parent=11 // pred_check_branch
        %584 = sbr.rel (%p582) target = $region48
      $region47: #{ae_forward.1} parent=11 // pred_region
        _
      $region48: #{ae_forward.1} parent=11 // pred_fallthru
        _
      // Predicated region
      $region49: #{ae_forward.1} parent=11 // pred_check
        %p585 = pneg %p265
      $region50: #{ae_forward.1} parent=11 // pred_check_branch
        %587 = sbr.rel (%p585) target = $region52
      $region51: #{ae_forward.1} parent=11 // pred_region
        _
      $region52: #{ae_forward.1} parent=11 // pred_fallthru
        _
      // Predicated region
      $region53: #{ae_forward.1} parent=11 // pred_check
        %p588 = pneg %p286
      $region54: #{ae_forward.1} parent=11 // pred_check_branch
        %590 = sbr.rel (%p588) target = $region56
      $region55: #{ae_forward.1} parent=11 // pred_region
        _
      $region56: #{ae_forward.1} parent=11 // pred_fallthru
        _
      // Predicated region
      $region57: #{ae_forward.1} parent=11 // pred_check
        %p591 = pneg %p307
      $region58: #{ae_forward.1} parent=11 // pred_check_branch
        %593 = sbr.rel (%p591) target = $region60
      $region59: #{ae_forward.1} parent=11 // pred_region
        _
      $region60: #{ae_forward.1} parent=11 // pred_fallthru
        _
      // Predicated region
      $region61: #{ae_forward.1} parent=11 // pred_check
        %p594 = pneg %p328
      $region62: #{ae_forward.1} parent=11 // pred_check_branch
        %596 = sbr.rel (%p594) target = $region64
      $region63: #{ae_forward.1} parent=11 // pred_region
        _
      $region64: #{ae_forward.1} parent=11 // pred_fallthru
        _
      // Predicated region
      $region65: #{ae_forward.1} parent=11 // pred_check
        %p597 = pneg %p349
      $region66: #{ae_forward.1} parent=11 // pred_check_branch
        %599 = sbr.rel (%p597) target = $region68
      $region67: #{ae_forward.1} parent=11 // pred_region
        _
      $region68: #{ae_forward.1} parent=11 // pred_fallthru
        _
      // Predicated region
      $region69: #{ae_forward.1} parent=11 // pred_check
        %p600 = pneg %p370
      $region70: #{ae_forward.1} parent=11 // pred_check_branch
        %602 = sbr.rel (%p600) target = $region72
      $region71: #{ae_forward.1} parent=11 // pred_region
        _
      $region72: #{ae_forward.1} parent=11 // pred_fallthru
        _
      // Predicated region
      $region73: #{ae_forward.1} parent=11 // pred_check
        %p603 = pneg %p391
      $region74: #{ae_forward.1} parent=11 // pred_check_branch
        %605 = sbr.rel (%p603) target = $region76
      $region75: #{ae_forward.1} parent=11 // pred_region
        _
      $region76: #{ae_forward.1} parent=11 // pred_fallthru
        _
      // Predicated region
      $region77: #{ae_forward.1} parent=11 // pred_check
        %p606 = pneg %p412
      $region78: #{ae_forward.1} parent=11 // pred_check_branch
        %608 = sbr.rel (%p606) target = $region80
      $region79: #{ae_forward.1} parent=11 // pred_region
        _
      $region80: #{ae_forward.1} parent=11 // pred_fallthru
        _
      // Predicated region
      $region81: #{ae_forward.1} parent=11 // pred_check
        %p609 = pneg %p433
      $region82: #{ae_forward.1} parent=11 // pred_check_branch
        %611 = sbr.rel (%p609) target = $region84
      $region83: #{ae_forward.1} parent=11 // pred_region
        _
      $region84: #{ae_forward.1} parent=11 // pred_fallthru
        _
      // Predicated region
      $region85: #{ae_forward.1} parent=11 // pred_check
        %p612 = pneg %p454
      $region86: #{ae_forward.1} parent=11 // pred_check_branch
        %614 = sbr.rel (%p612) target = $region88
      $region87: #{ae_forward.1} parent=11 // pred_region
        _
      $region88: #{ae_forward.1} parent=11 // pred_fallthru
        _
      // Predicated region
      $region89: #{ae_forward.1} parent=11 // pred_check
        %p615 = pneg %p475
      $region90: #{ae_forward.1} parent=11 // pred_check_branch
        %617 = sbr.rel (%p615) target = $region92
      $region91: #{ae_forward.1} parent=11 // pred_region
        _
      $region92: #{ae_forward.1} parent=11 // pred_fallthru
        _
      // Predicated region
      $region93: #{ae_forward.1} parent=11 // pred_check
        %p618 = pneg %p496
      $region94: #{ae_forward.1} parent=11 // pred_check_branch
        %620 = sbr.rel (%p618) target = $region96
      $region95: #{ae_forward.1} parent=11 // pred_region
        _
      $region96: #{ae_forward.1} parent=11 // pred_fallthru
        _
      // Predicated region
      $region97: #{ae_forward.1} parent=11 // pred_check
        %p621 = pneg %p517
      $region98: #{ae_forward.1} parent=11 // pred_check_branch
        %623 = sbr.rel (%p621) target = $region100
      $region99: #{ae_forward.1} parent=11 // pred_region
        _
      $region100: #{ae_forward.1} parent=11 // pred_fallthru
        _
    $region12: #{ae_forward.1} parent=5 // pred_fallthru
      _
    %p624 = scmp.lt.s32.totalorder %s29, 2
    // Predicated region
    $region101: #{ae_forward.1} parent=5 // pred_check
      %p625 = pneg %p624
    $region102: #{ae_forward.1} parent=5 // pred_check_branch
      %627 = sbr.rel (%p625) target = $region104
    $region103: #{ae_forward.1} parent=5 // pred_region
      // Predicated region
      $region105: #{ae_forward.1} parent=103 // pred_check
        %p628 = pneg %p49
      $region106: #{ae_forward.1} parent=103 // pred_check_branch
        %630 = sbr.rel (%p628) target = $region108
      $region107: #{ae_forward.1} parent=103 // pred_region
        %p631 = scmp.lt.s32.totalorder %s29, 1
        %s632 = scalar_select %p631, %s29, 1
        %s633 = smul.addr %s632, 2
        %s634 = smul.addr %s633, 4
        %s635 = scalar_lea.vmem %s0, %s634
      $region108: #{ae_forward.1} parent=103 // pred_fallthru
        _
    $region104: #{ae_forward.1} parent=5 // pred_fallthru
      _
    %p636 = scmp.le.s32.totalorder 1, %s29
    %p637 = scmp.lt.s32.totalorder %s29, 3
    %p638 = pnand %p636, %p637
    %p639 = pneg %p638
    // Predicated region
    $region109: #{ae_forward.1} parent=5 // pred_check
      _
    $region110: #{ae_forward.1} parent=5 // pred_check_branch
      %641 = sbr.rel (%p638) target = $region112
    $region111: #{ae_forward.1} parent=5 // pred_region
      %s642 = ssub.s32 %s29, 1
      %p643 = scmp.lt.s32.totalorder %s34, 1
      %s644 = scalar_select %p643, %s34, 1
      %s645 = smul.addr %s644, 2
      %s646 = smul.addr %s645, 4
      %s647 = scalar_lea.vmem %s0, %s646
      %p648 = pneg %p55
      %p649 = pneg %p52
      %p650 = pneg %p76
      %p651 = pneg %p73
      %p652 = pneg %p97
      %p653 = pneg %p94
      %p654 = pneg %p118
      %p655 = pneg %p115
      %p656 = pneg %p139
      %p657 = pneg %p136
      %p658 = pneg %p160
      %p659 = pneg %p157
      %p660 = pneg %p181
      %p661 = pneg %p178
      %p662 = pneg %p202
      %p663 = pneg %p199
      %p664 = pneg %p223
      %p665 = pneg %p220
      %p666 = pneg %p244
      %p667 = pneg %p241
      %p668 = pneg %p265
      %p669 = pneg %p262
      %p670 = pneg %p286
      %p671 = pneg %p283
      %p672 = pneg %p307
      %p673 = pneg %p304
      %p674 = pneg %p328
      %p675 = pneg %p325
      %p676 = pneg %p349
      %p677 = pneg %p346
      %p678 = pneg %p370
      %p679 = pneg %p367
      %p680 = pneg %p391
      %p681 = pneg %p388
      %p682 = pneg %p412
      %p683 = pneg %p409
      %p684 = pneg %p433
      %p685 = pneg %p430
      %p686 = pneg %p454
      %p687 = pneg %p451
      %p688 = pneg %p475
      %p689 = pneg %p472
      %p690 = pneg %p496
      %p691 = pneg %p493
      %p692 = pneg %p517
      %p693 = pneg %p514
      %p694 = pneg %p543
      %p695 = pneg %p540
      %p696 = scmp.lt.s32.totalorder %s34, 1
      %s697 = scalar_select %p696, %s34, 1
      %s698 = smul.addr %s697, 2
      %s699 = smul.addr %s698, 4
      %s700 = scalar_lea.vmem %s23, %s699
      %p701 = scmp.lt.s32.totalorder %s34, 1
      %s702 = scalar_select %p701, %s34, 1
      %s703 = smul.addr %s702, 2
      %s704 = smul.addr %s703, 4
      %s705 = scalar_lea.vmem %s0, %s704
      %p706 = scmp.lt.s32.totalorder %s34, 1
      %s707 = scalar_select %p706, %s34, 1
      %s708 = smul.addr %s707, 2
      %s709 = smul.addr %s708, 4
      %s710 = scalar_lea.vmem %s23, %s709
      %v711 = vld [vmem:[%s705] sm:$0x77]
      %v712 = vld [vmem:[%s2] sm:$0xf]
      %v713 = vld [vmem:[%s2 + $0x4] sm:$0xf]
      %v714 = vld [vmem:[%s2 + $0x8] sm:$0xf]
      %v715 = vld [vmem:[%s2 + $0xc] sm:$0xf]
      %v716 = vld [vmem:[%s2 + $0x10] sm:$0xf]
      %v717 = vld [vmem:[%s2 + $0x14] sm:$0xf]
      %v718 = vld [vmem:[%s2 + $0x18] sm:$0xf]
      %v719 = vld [vmem:[%s2 + $0x1c] sm:$0xf]
      %v720 = vld [vmem:[%s2 + $0x20] sm:$0xf]
      %v721 = vld [vmem:[%s2 + $0x24] sm:$0xf]
      %v722 = vld [vmem:[%s2 + $0x28] sm:$0xf]
      %v723 = vld [vmem:[%s2 + $0x2c] sm:$0xf]
      %v724 = vld [vmem:[%s2 + $0x30] sm:$0xf]
      %v725 = vld [vmem:[%s2 + $0x34] sm:$0xf]
      %v726 = vld [vmem:[%s2 + $0x38] sm:$0xf]
      %v727 = vld [vmem:[%s2 + $0x3c] sm:$0xf]
      %v728 = vld [vmem:[%s2 + $0x40] sm:$0xf]
      %v729 = vld [vmem:[%s2 + $0x44] sm:$0xf]
      %v730 = vld [vmem:[%s2 + $0x48] sm:$0xf]
      %v731 = vld [vmem:[%s2 + $0x4c] sm:$0xf]
      %v732 = vld [vmem:[%s2 + $0x50] sm:$0xf]
      %v733 = vld [vmem:[%s2 + $0x54] sm:$0xf]
      %v734 = vld [vmem:[%s2 + $0x58] sm:$0xf]
      %v735 = vld [vmem:[%s2 + $0x5c] sm:$0xf]
      %v736 = vld [vmem:[%s2 + $0x60] sm:$0xf]
      %v737 = vld [vmem:[%s2 + $0x64] sm:$0xf]
      %v738 = vld [vmem:[%s2 + $0x68] sm:$0xf]
      %v739 = vld [vmem:[%s2 + $0x6c] sm:$0xf]
      %v740 = vld [vmem:[%s2 + $0x70] sm:$0xf]
      %v741 = vld [vmem:[%s2 + $0x74] sm:$0xf]
      %v742 = vld [vmem:[%s2 + $0x78] sm:$0xf]
      %v743 = vld [vmem:[%s2 + $0x7c] sm:$0xf]
      %v744 = vunpack.c.l.bf16 %v712
      %v745 = vunpack.c.l.bf16 %v713
      %v746 = vunpack.c.l.bf16 %v714
      %v747 = vunpack.c.l.bf16 %v715
      %v748 = vunpack.c.l.bf16 %v716
      %v749 = vunpack.c.l.bf16 %v717
      %v750 = vunpack.c.l.bf16 %v718
      %v751 = vunpack.c.l.bf16 %v719
      %v752 = vunpack.c.l.bf16 %v720
      %v753 = vunpack.c.l.bf16 %v721
      %v754 = vunpack.c.l.bf16 %v722
      %v755 = vunpack.c.l.bf16 %v723
      %v756 = vunpack.c.l.bf16 %v724
      %v757 = vunpack.c.l.bf16 %v725
      %v758 = vunpack.c.l.bf16 %v726
      %v759 = vunpack.c.l.bf16 %v727
      %v760 = vunpack.c.l.bf16 %v728
      %v761 = vunpack.c.l.bf16 %v729
      %v762 = vunpack.c.l.bf16 %v730
      %v763 = vunpack.c.l.bf16 %v731
      %v764 = vunpack.c.l.bf16 %v732
      %v765 = vunpack.c.l.bf16 %v733
      %v766 = vunpack.c.l.bf16 %v734
      %v767 = vunpack.c.l.bf16 %v735
      %v768 = vunpack.c.l.bf16 %v736
      %v769 = vunpack.c.l.bf16 %v737
      %v770 = vunpack.c.l.bf16 %v738
      %v771 = vunpack.c.l.bf16 %v739
      %v772 = vunpack.c.l.bf16 %v740
      %v773 = vunpack.c.l.bf16 %v741
      %v774 = vunpack.c.l.bf16 %v742
      %v775 = vunpack.c.l.bf16 %v743
      %777 = vst [vmem:[#allocation1] ss:$2 sm:$0xff] %v711
      %v778 = vld.sshfl [vmem:[#allocation1] sm:$0xff pattern:$0x75316420]
      %v779 = vld.sshfl [vmem:[#allocation1 + $0x8] sm:$0xff pattern:$0x75316420]
      %782 = vmatpush.msra.mxu0 %v759
      %783 = vmatpush.msra.mxu0 %v758
      %784 = vmatpush.msra.mxu0 %v757
      %785 = vmatpush.msra.mxu0 %v756
      %786 = vmatpush.msra.mxu0 %v755
      %787 = vmatpush.msra.mxu0 %v754
      %788 = vmatpush.msra.mxu0 %v753
      %789 = vmatpush.msra.mxu0 %v752
      %790 = vmatpush.msra.mxu0 %v751
      %791 = vmatpush.msra.mxu0 %v750
      %792 = vmatpush.msra.mxu0 %v749
      %793 = vmatpush.msra.mxu0 %v748
      %794 = vmatpush.msra.mxu0 %v747
      %795 = vmatpush.msra.mxu0 %v746
      %796 = vmatpush.msra.mxu0 %v745
      %797 = vmatpush.msra.mxu0 %v744
      %798 = vmatmul.f32.gmra.mxu0 %v778
      %v799 = vpop.f32.mrf.mxu0
      %v800 = vadd.f32 0.0, %v799
      %801 = vdwg.mxu0
      %802 = vmatpush.msra.mxu0 %v775
      %803 = vmatpush.msra.mxu0 %v774
      %804 = vmatpush.msra.mxu0 %v773
      %805 = vmatpush.msra.mxu0 %v772
      %806 = vmatpush.msra.mxu0 %v771
      %807 = vmatpush.msra.mxu0 %v770
      %808 = vmatpush.msra.mxu0 %v769
      %809 = vmatpush.msra.mxu0 %v768
      %810 = vmatpush.msra.mxu0 %v767
      %811 = vmatpush.msra.mxu0 %v766
      %812 = vmatpush.msra.mxu0 %v765
      %813 = vmatpush.msra.mxu0 %v764
      %814 = vmatpush.msra.mxu0 %v763
      %815 = vmatpush.msra.mxu0 %v762
      %816 = vmatpush.msra.mxu0 %v761
      %817 = vmatpush.msra.mxu0 %v760
      %818 = vmatmul.f32.gmra.mxu0 %v779
      %v819 = vpop.f32.mrf.mxu0
      %v820 = vadd.f32 %v800, %v819
      %821 = vdwg.mxu0
      %v822 = vld [vmem:[%s1] sm:$0xff]
      %s823 = scalar_lea.vmem %s2, 128
      %v824 = vld [vmem:[%s823] sm:$0xf]
      %v825 = vld [vmem:[%s823 + $0x4] sm:$0xf]
      %v826 = vld [vmem:[%s823 + $0x8] sm:$0xf]
      %v827 = vld [vmem:[%s823 + $0xc] sm:$0xf]
      %v828 = vld [vmem:[%s823 + $0x10] sm:$0xf]
      %v829 = vld [vmem:[%s823 + $0x14] sm:$0xf]
      %v830 = vld [vmem:[%s823 + $0x18] sm:$0xf]
      %v831 = vld [vmem:[%s823 + $0x1c] sm:$0xf]
      %v832 = vld [vmem:[%s823 + $0x20] sm:$0xf]
      %v833 = vld [vmem:[%s823 + $0x24] sm:$0xf]
      %v834 = vld [vmem:[%s823 + $0x28] sm:$0xf]
      %v835 = vld [vmem:[%s823 + $0x2c] sm:$0xf]
      %v836 = vld [vmem:[%s823 + $0x30] sm:$0xf]
      %v837 = vld [vmem:[%s823 + $0x34] sm:$0xf]
      %v838 = vld [vmem:[%s823 + $0x38] sm:$0xf]
      %v839 = vld [vmem:[%s823 + $0x3c] sm:$0xf]
      %v840 = vld [vmem:[%s823 + $0x40] sm:$0xf]
      %v841 = vld [vmem:[%s823 + $0x44] sm:$0xf]
      %v842 = vld [vmem:[%s823 + $0x48] sm:$0xf]
      %v843 = vld [vmem:[%s823 + $0x4c] sm:$0xf]
      %v844 = vld [vmem:[%s823 + $0x50] sm:$0xf]
      %v845 = vld [vmem:[%s823 + $0x54] sm:$0xf]
      %v846 = vld [vmem:[%s823 + $0x58] sm:$0xf]
      %v847 = vld [vmem:[%s823 + $0x5c] sm:$0xf]
      %v848 = vld [vmem:[%s823 + $0x60] sm:$0xf]
      %v849 = vld [vmem:[%s823 + $0x64] sm:$0xf]
      %v850 = vld [vmem:[%s823 + $0x68] sm:$0xf]
      %v851 = vld [vmem:[%s823 + $0x6c] sm:$0xf]
      %v852 = vld [vmem:[%s823 + $0x70] sm:$0xf]
      %v853 = vld [vmem:[%s823 + $0x74] sm:$0xf]
      %v854 = vld [vmem:[%s823 + $0x78] sm:$0xf]
      %v855 = vld [vmem:[%s823 + $0x7c] sm:$0xf]
      %v856 = vunpack.c.l.bf16 %v824
      %v857 = vunpack.c.l.bf16 %v825
      %v858 = vunpack.c.l.bf16 %v826
      %v859 = vunpack.c.l.bf16 %v827
      %v860 = vunpack.c.l.bf16 %v828
      %v861 = vunpack.c.l.bf16 %v829
      %v862 = vunpack.c.l.bf16 %v830
      %v863 = vunpack.c.l.bf16 %v831
      %v864 = vunpack.c.l.bf16 %v832
      %v865 = vunpack.c.l.bf16 %v833
      %v866 = vunpack.c.l.bf16 %v834
      %v867 = vunpack.c.l.bf16 %v835
      %v868 = vunpack.c.l.bf16 %v836
      %v869 = vunpack.c.l.bf16 %v837
      %v870 = vunpack.c.l.bf16 %v838
      %v871 = vunpack.c.l.bf16 %v839
      %v872 = vunpack.c.l.bf16 %v840
      %v873 = vunpack.c.l.bf16 %v841
      %v874 = vunpack.c.l.bf16 %v842
      %v875 = vunpack.c.l.bf16 %v843
      %v876 = vunpack.c.l.bf16 %v844
      %v877 = vunpack.c.l.bf16 %v845
      %v878 = vunpack.c.l.bf16 %v846
      %v879 = vunpack.c.l.bf16 %v847
      %v880 = vunpack.c.l.bf16 %v848
      %v881 = vunpack.c.l.bf16 %v849
      %v882 = vunpack.c.l.bf16 %v850
      %v883 = vunpack.c.l.bf16 %v851
      %v884 = vunpack.c.l.bf16 %v852
      %v885 = vunpack.c.l.bf16 %v853
      %v886 = vunpack.c.l.bf16 %v854
      %v887 = vunpack.c.l.bf16 %v855
      %888 = vst [vmem:[#allocation1] ss:$2 sm:$0xff] %v711
      %v889 = vld.sshfl [vmem:[#allocation1] sm:$0xff pattern:$0x75316420]
      %v890 = vld.sshfl [vmem:[#allocation1 + $0x8] sm:$0xff pattern:$0x75316420]
      %893 = vmatpush.msra.mxu0 %v871
      %894 = vmatpush.msra.mxu0 %v870
      %895 = vmatpush.msra.mxu0 %v869
      %896 = vmatpush.msra.mxu0 %v868
      %897 = vmatpush.msra.mxu0 %v867
      %898 = vmatpush.msra.mxu0 %v866
      %899 = vmatpush.msra.mxu0 %v865
      %900 = vmatpush.msra.mxu0 %v864
      %901 = vmatpush.msra.mxu0 %v863
      %902 = vmatpush.msra.mxu0 %v862
      %903 = vmatpush.msra.mxu0 %v861
      %904 = vmatpush.msra.mxu0 %v860
      %905 = vmatpush.msra.mxu0 %v859
      %906 = vmatpush.msra.mxu0 %v858
      %907 = vmatpush.msra.mxu0 %v857
      %908 = vmatpush.msra.mxu0 %v856
      %909 = vmatmul.f32.gmra.mxu0 %v889
      %v910 = vpop.f32.mrf.mxu0
      %v911 = vadd.f32 0.0, %v910
      %912 = vdwg.mxu0
      %913 = vmatpush.msra.mxu0 %v887
      %914 = vmatpush.msra.mxu0 %v886
      %915 = vmatpush.msra.mxu0 %v885
      %916 = vmatpush.msra.mxu0 %v884
      %917 = vmatpush.msra.mxu0 %v883
      %918 = vmatpush.msra.mxu0 %v882
      %919 = vmatpush.msra.mxu0 %v881
      %920 = vmatpush.msra.mxu0 %v880
      %921 = vmatpush.msra.mxu0 %v879
      %922 = vmatpush.msra.mxu0 %v878
      %923 = vmatpush.msra.mxu0 %v877
      %924 = vmatpush.msra.mxu0 %v876
      %925 = vmatpush.msra.mxu0 %v875
      %926 = vmatpush.msra.mxu0 %v874
      %927 = vmatpush.msra.mxu0 %v873
      %928 = vmatpush.msra.mxu0 %v872
      %929 = vmatmul.f32.gmra.mxu0 %v890
      %v930 = vpop.f32.mrf.mxu0
      %v931 = vadd.f32 %v911, %v930
      %932 = vdwg.mxu0
      %s933 = scalar_lea.vmem %s1, 8
      %v934 = vld [vmem:[%s933] sm:$0xff]
      %vm935 = vcmask 23552
      %v937 = vsel %vm935, %v934, 0
      %vm939 = vcmask 1042432
      %v941 = vsel %vm939, %v931, 0
      %943 = vmatpush.msra.mxu0 0.0
      %944 = vmatpush.msra.mxu0 0.0
      %945 = vmatpush.msra.mxu0 0.0
      %946 = vmatpush.msra.mxu0 0.0
      %947 = vmatpush.msra.mxu0 0.0
      %948 = vmatpush.msra.mxu0 0.0
      %949 = vmatpush.msra.mxu0 0.0
      %950 = vmatpush.msra.mxu0 0.0
      %951 = vmatpush.msra.mxu0 0.0
      %952 = vmatpush.msra.mxu0 0.0
      %953 = vmatpush.msra.mxu0 0.0
      %954 = vmatpush.msra.mxu0 0.0
      %955 = vmatpush.msra.mxu0 0.0
      %956 = vmatpush.msra.mxu0 0.0
      %957 = vmatpush.msra.mxu0 0.0
      %958 = vmatpush.msra.mxu0 %v941
      %959 = vmatmul.f32.gmra.mxu0 %v937
      %v960 = vpop.f32.mrf.mxu0
      %v961 = vadd.f32 0.0, %v960
      %962 = vdwg.mxu0
      %v964 = vsel %vm935, %v822, 0
      %v967 = vsel %vm939, %v820, 0
      %969 = vmatpush.msra.mxu0 0.0
      %970 = vmatpush.msra.mxu0 0.0
      %971 = vmatpush.msra.mxu0 0.0
      %972 = vmatpush.msra.mxu0 0.0
      %973 = vmatpush.msra.mxu0 0.0
      %974 = vmatpush.msra.mxu0 0.0
      %975 = vmatpush.msra.mxu0 0.0
      %976 = vmatpush.msra.mxu0 0.0
      %977 = vmatpush.msra.mxu0 0.0
      %978 = vmatpush.msra.mxu0 0.0
      %979 = vmatpush.msra.mxu0 0.0
      %980 = vmatpush.msra.mxu0 0.0
      %981 = vmatpush.msra.mxu0 0.0
      %982 = vmatpush.msra.mxu0 0.0
      %983 = vmatpush.msra.mxu0 0.0
      %984 = vmatpush.msra.mxu0 %v967
      %985 = vmatmul.f32.gmra.mxu0 %v964
      %v986 = vpop.f32.mrf.mxu0
      %v987 = vadd.f32 %v961, %v986
      %988 = vdwg.mxu0
      %s989 = scalar_lea.vmem %s2, 256
      %v990 = vld [vmem:[%s989] sm:$0xf]
      %v991 = vld [vmem:[%s989 + $0x4] sm:$0xf]
      %v992 = vld [vmem:[%s989 + $0x8] sm:$0xf]
      %v993 = vld [vmem:[%s989 + $0xc] sm:$0xf]
      %v994 = vld [vmem:[%s989 + $0x10] sm:$0xf]
      %v995 = vld [vmem:[%s989 + $0x14] sm:$0xf]
      %v996 = vld [vmem:[%s989 + $0x18] sm:$0xf]
      %v997 = vld [vmem:[%s989 + $0x1c] sm:$0xf]
      %v998 = vld [vmem:[%s989 + $0x20] sm:$0xf]
      %v999 = vld [vmem:[%s989 + $0x24] sm:$0xf]
      %v1000 = vld [vmem:[%s989 + $0x28] sm:$0xf]
      %v1001 = vld [vmem:[%s989 + $0x2c] sm:$0xf]
      %v1002 = vld [vmem:[%s989 + $0x30] sm:$0xf]
      %v1003 = vld [vmem:[%s989 + $0x34] sm:$0xf]
      %v1004 = vld [vmem:[%s989 + $0x38] sm:$0xf]
      %v1005 = vld [vmem:[%s989 + $0x3c] sm:$0xf]
      %v1006 = vld [vmem:[%s989 + $0x40] sm:$0xf]
      %v1007 = vld [vmem:[%s989 + $0x44] sm:$0xf]
      %v1008 = vld [vmem:[%s989 + $0x48] sm:$0xf]
      %v1009 = vld [vmem:[%s989 + $0x4c] sm:$0xf]
      %v1010 = vld [vmem:[%s989 + $0x50] sm:$0xf]
      %v1011 = vld [vmem:[%s989 + $0x54] sm:$0xf]
      %v1012 = vld [vmem:[%s989 + $0x58] sm:$0xf]
      %v1013 = vld [vmem:[%s989 + $0x5c] sm:$0xf]
      %v1014 = vld [vmem:[%s989 + $0x60] sm:$0xf]
      %v1015 = vld [vmem:[%s989 + $0x64] sm:$0xf]
      %v1016 = vld [vmem:[%s989 + $0x68] sm:$0xf]
      %v1017 = vld [vmem:[%s989 + $0x6c] sm:$0xf]
      %v1018 = vld [vmem:[%s989 + $0x70] sm:$0xf]
      %v1019 = vld [vmem:[%s989 + $0x74] sm:$0xf]
      %v1020 = vld [vmem:[%s989 + $0x78] sm:$0xf]
      %v1021 = vld [vmem:[%s989 + $0x7c] sm:$0xf]
      %v1022 = vunpack.c.l.bf16 %v990
      %v1023 = vunpack.c.l.bf16 %v991
      %v1024 = vunpack.c.l.bf16 %v992
      %v1025 = vunpack.c.l.bf16 %v993
      %v1026 = vunpack.c.l.bf16 %v994
      %v1027 = vunpack.c.l.bf16 %v995
      %v1028 = vunpack.c.l.bf16 %v996
      %v1029 = vunpack.c.l.bf16 %v997
      %v1030 = vunpack.c.l.bf16 %v998
      %v1031 = vunpack.c.l.bf16 %v999
      %v1032 = vunpack.c.l.bf16 %v1000
      %v1033 = vunpack.c.l.bf16 %v1001
      %v1034 = vunpack.c.l.bf16 %v1002
      %v1035 = vunpack.c.l.bf16 %v1003
      %v1036 = vunpack.c.l.bf16 %v1004
      %v1037 = vunpack.c.l.bf16 %v1005
      %v1038 = vunpack.c.l.bf16 %v1006
      %v1039 = vunpack.c.l.bf16 %v1007
      %v1040 = vunpack.c.l.bf16 %v1008
      %v1041 = vunpack.c.l.bf16 %v1009
      %v1042 = vunpack.c.l.bf16 %v1010
      %v1043 = vunpack.c.l.bf16 %v1011
      %v1044 = vunpack.c.l.bf16 %v1012
      %v1045 = vunpack.c.l.bf16 %v1013
      %v1046 = vunpack.c.l.bf16 %v1014
      %v1047 = vunpack.c.l.bf16 %v1015
      %v1048 = vunpack.c.l.bf16 %v1016
      %v1049 = vunpack.c.l.bf16 %v1017
      %v1050 = vunpack.c.l.bf16 %v1018
      %v1051 = vunpack.c.l.bf16 %v1019
      %v1052 = vunpack.c.l.bf16 %v1020
      %v1053 = vunpack.c.l.bf16 %v1021
      %1054 = vst [vmem:[#allocation1] ss:$2 sm:$0xff] %v711
      %v1055 = vld.sshfl [vmem:[#allocation1] sm:$0xff pattern:$0x75316420]
      %v1056 = vld.sshfl [vmem:[#allocation1 + $0x8] sm:$0xff pattern:$0x75316420]
      %1059 = vmatpush.msra.mxu0 %v1037
      %1060 = vmatpush.msra.mxu0 %v1036
      %1061 = vmatpush.msra.mxu0 %v1035
      %1062 = vmatpush.msra.mxu0 %v1034
      %1063 = vmatpush.msra.mxu0 %v1033
      %1064 = vmatpush.msra.mxu0 %v1032
      %1065 = vmatpush.msra.mxu0 %v1031
      %1066 = vmatpush.msra.mxu0 %v1030
      %1067 = vmatpush.msra.mxu0 %v1029
      %1068 = vmatpush.msra.mxu0 %v1028
      %1069 = vmatpush.msra.mxu0 %v1027
      %1070 = vmatpush.msra.mxu0 %v1026
      %1071 = vmatpush.msra.mxu0 %v1025
      %1072 = vmatpush.msra.mxu0 %v1024
      %1073 = vmatpush.msra.mxu0 %v1023
      %1074 = vmatpush.msra.mxu0 %v1022
      %1075 = vmatmul.f32.gmra.mxu0 %v1055
      %v1076 = vpop.f32.mrf.mxu0
      %v1077 = vadd.f32 0.0, %v1076
      %1078 = vdwg.mxu0
      %1079 = vmatpush.msra.mxu0 %v1053
      %1080 = vmatpush.msra.mxu0 %v1052
      %1081 = vmatpush.msra.mxu0 %v1051
      %1082 = vmatpush.msra.mxu0 %v1050
      %1083 = vmatpush.msra.mxu0 %v1049
      %1084 = vmatpush.msra.mxu0 %v1048
      %1085 = vmatpush.msra.mxu0 %v1047
      %1086 = vmatpush.msra.mxu0 %v1046
      %1087 = vmatpush.msra.mxu0 %v1045
      %1088 = vmatpush.msra.mxu0 %v1044
      %1089 = vmatpush.msra.mxu0 %v1043
      %1090 = vmatpush.msra.mxu0 %v1042
      %1091 = vmatpush.msra.mxu0 %v1041
      %1092 = vmatpush.msra.mxu0 %v1040
      %1093 = vmatpush.msra.mxu0 %v1039
      %1094 = vmatpush.msra.mxu0 %v1038
      %1095 = vmatmul.f32.gmra.mxu0 %v1056
      %v1096 = vpop.f32.mrf.mxu0
      %v1097 = vadd.f32 %v1077, %v1096
      %1098 = vdwg.mxu0
      %s1099 = scalar_lea.vmem %s1, 16
      %v1100 = vld [vmem:[%s1099] sm:$0xff]
      %v1102 = vsel %vm935, %v1100, 0
      %v1105 = vsel %vm939, %v1097, 0
      %1107 = vmatpush.msra.mxu0 0.0
      %1108 = vmatpush.msra.mxu0 0.0
      %1109 = vmatpush.msra.mxu0 0.0
      %1110 = vmatpush.msra.mxu0 0.0
      %1111 = vmatpush.msra.mxu0 0.0
      %1112 = vmatpush.msra.mxu0 0.0
      %1113 = vmatpush.msra.mxu0 0.0
      %1114 = vmatpush.msra.mxu0 0.0
      %1115 = vmatpush.msra.mxu0 0.0
      %1116 = vmatpush.msra.mxu0 0.0
      %1117 = vmatpush.msra.mxu0 0.0
      %1118 = vmatpush.msra.mxu0 0.0
      %1119 = vmatpush.msra.mxu0 0.0
      %1120 = vmatpush.msra.mxu0 0.0
      %1121 = vmatpush.msra.mxu0 0.0
      %1122 = vmatpush.msra.mxu0 %v1105
      %1123 = vmatmul.f32.gmra.mxu0 %v1102
      %v1124 = vpop.f32.mrf.mxu0
      %v1125 = vadd.f32 0.0, %v1124
      %1126 = vdwg.mxu0
      %v1127 = vadd.f32 %v987, %v1125
      %s1128 = scalar_lea.vmem %s2, 384
      %v1129 = vld [vmem:[%s1128] sm:$0xf]
      %v1130 = vld [vmem:[%s1128 + $0x4] sm:$0xf]
      %v1131 = vld [vmem:[%s1128 + $0x8] sm:$0xf]
      %v1132 = vld [vmem:[%s1128 + $0xc] sm:$0xf]
      %v1133 = vld [vmem:[%s1128 + $0x10] sm:$0xf]
      %v1134 = vld [vmem:[%s1128 + $0x14] sm:$0xf]
      %v1135 = vld [vmem:[%s1128 + $0x18] sm:$0xf]
      %v1136 = vld [vmem:[%s1128 + $0x1c] sm:$0xf]
      %v1137 = vld [vmem:[%s1128 + $0x20] sm:$0xf]
      %v1138 = vld [vmem:[%s1128 + $0x24] sm:$0xf]
      %v1139 = vld [vmem:[%s1128 + $0x28] sm:$0xf]
      %v1140 = vld [vmem:[%s1128 + $0x2c] sm:$0xf]
      %v1141 = vld [vmem:[%s1128 + $0x30] sm:$0xf]
      %v1142 = vld [vmem:[%s1128 + $0x34] sm:$0xf]
      %v1143 = vld [vmem:[%s1128 + $0x38] sm:$0xf]
      %v1144 = vld [vmem:[%s1128 + $0x3c] sm:$0xf]
      %v1145 = vld [vmem:[%s1128 + $0x40] sm:$0xf]
      %v1146 = vld [vmem:[%s1128 + $0x44] sm:$0xf]
      %v1147 = vld [vmem:[%s1128 + $0x48] sm:$0xf]
      %v1148 = vld [vmem:[%s1128 + $0x4c] sm:$0xf]
      %v1149 = vld [vmem:[%s1128 + $0x50] sm:$0xf]
      %v1150 = vld [vmem:[%s1128 + $0x54] sm:$0xf]
      %v1151 = vld [vmem:[%s1128 + $0x58] sm:$0xf]
      %v1152 = vld [vmem:[%s1128 + $0x5c] sm:$0xf]
      %v1153 = vld [vmem:[%s1128 + $0x60] sm:$0xf]
      %v1154 = vld [vmem:[%s1128 + $0x64] sm:$0xf]
      %v1155 = vld [vmem:[%s1128 + $0x68] sm:$0xf]
      %v1156 = vld [vmem:[%s1128 + $0x6c] sm:$0xf]
      %v1157 = vld [vmem:[%s1128 + $0x70] sm:$0xf]
      %v1158 = vld [vmem:[%s1128 + $0x74] sm:$0xf]
      %v1159 = vld [vmem:[%s1128 + $0x78] sm:$0xf]
      %v1160 = vld [vmem:[%s1128 + $0x7c] sm:$0xf]
      %v1161 = vunpack.c.l.bf16 %v1129
      %v1162 = vunpack.c.l.bf16 %v1130
      %v1163 = vunpack.c.l.bf16 %v1131
      %v1164 = vunpack.c.l.bf16 %v1132
      %v1165 = vunpack.c.l.bf16 %v1133
      %v1166 = vunpack.c.l.bf16 %v1134
      %v1167 = vunpack.c.l.bf16 %v1135
      %v1168 = vunpack.c.l.bf16 %v1136
      %v1169 = vunpack.c.l.bf16 %v1137
      %v1170 = vunpack.c.l.bf16 %v1138
      %v1171 = vunpack.c.l.bf16 %v1139
      %v1172 = vunpack.c.l.bf16 %v1140
      %v1173 = vunpack.c.l.bf16 %v1141
      %v1174 = vunpack.c.l.bf16 %v1142
      %v1175 = vunpack.c.l.bf16 %v1143
      %v1176 = vunpack.c.l.bf16 %v1144
      %v1177 = vunpack.c.l.bf16 %v1145
      %v1178 = vunpack.c.l.bf16 %v1146
      %v1179 = vunpack.c.l.bf16 %v1147
      %v1180 = vunpack.c.l.bf16 %v1148
      %v1181 = vunpack.c.l.bf16 %v1149
      %v1182 = vunpack.c.l.bf16 %v1150
      %v1183 = vunpack.c.l.bf16 %v1151
      %v1184 = vunpack.c.l.bf16 %v1152
      %v1185 = vunpack.c.l.bf16 %v1153
      %v1186 = vunpack.c.l.bf16 %v1154
      %v1187 = vunpack.c.l.bf16 %v1155
      %v1188 = vunpack.c.l.bf16 %v1156
      %v1189 = vunpack.c.l.bf16 %v1157
      %v1190 = vunpack.c.l.bf16 %v1158
      %v1191 = vunpack.c.l.bf16 %v1159
      %v1192 = vunpack.c.l.bf16 %v1160
      %1193 = vst [vmem:[#allocation1] ss:$2 sm:$0xff] %v711
      %v1194 = vld.sshfl [vmem:[#allocation1] sm:$0xff pattern:$0x75316420]
      %v1195 = vld.sshfl [vmem:[#allocation1 + $0x8] sm:$0xff pattern:$0x75316420]
      %1198 = vmatpush.msra.mxu0 %v1176
      %1199 = vmatpush.msra.mxu0 %v1175
      %1200 = vmatpush.msra.mxu0 %v1174
      %1201 = vmatpush.msra.mxu0 %v1173
      %1202 = vmatpush.msra.mxu0 %v1172
      %1203 = vmatpush.msra.mxu0 %v1171
      %1204 = vmatpush.msra.mxu0 %v1170
      %1205 = vmatpush.msra.mxu0 %v1169
      %1206 = vmatpush.msra.mxu0 %v1168
      %1207 = vmatpush.msra.mxu0 %v1167
      %1208 = vmatpush.msra.mxu0 %v1166
      %1209 = vmatpush.msra.mxu0 %v1165
      %1210 = vmatpush.msra.mxu0 %v1164
      %1211 = vmatpush.msra.mxu0 %v1163
      %1212 = vmatpush.msra.mxu0 %v1162
      %1213 = vmatpush.msra.mxu0 %v1161
      %1214 = vmatmul.f32.gmra.mxu0 %v1194
      %v1215 = vpop.f32.mrf.mxu0
      %v1216 = vadd.f32 0.0, %v1215
      %1217 = vdwg.mxu0
      %1218 = vmatpush.msra.mxu0 %v1192
      %1219 = vmatpush.msra.mxu0 %v1191
      %1220 = vmatpush.msra.mxu0 %v1190
      %1221 = vmatpush.msra.mxu0 %v1189
      %1222 = vmatpush.msra.mxu0 %v1188
      %1223 = vmatpush.msra.mxu0 %v1187
      %1224 = vmatpush.msra.mxu0 %v1186
      %1225 = vmatpush.msra.mxu0 %v1185
      %1226 = vmatpush.msra.mxu0 %v1184
      %1227 = vmatpush.msra.mxu0 %v1183
      %1228 = vmatpush.msra.mxu0 %v1182
      %1229 = vmatpush.msra.mxu0 %v1181
      %1230 = vmatpush.msra.mxu0 %v1180
      %1231 = vmatpush.msra.mxu0 %v1179
      %1232 = vmatpush.msra.mxu0 %v1178
      %1233 = vmatpush.msra.mxu0 %v1177
      %1234 = vmatmul.f32.gmra.mxu0 %v1195
      %v1235 = vpop.f32.mrf.mxu0
      %v1236 = vadd.f32 %v1216, %v1235
      %1237 = vdwg.mxu0
      %s1238 = scalar_lea.vmem %s1, 24
      %v1239 = vld [vmem:[%s1238] sm:$0xff]
      %v1241 = vsel %vm935, %v1239, 0
      %v1244 = vsel %vm939, %v1236, 0
      %1246 = vmatpush.msra.mxu0 0.0
      %1247 = vmatpush.msra.mxu0 0.0
      %1248 = vmatpush.msra.mxu0 0.0
      %1249 = vmatpush.msra.mxu0 0.0
      %1250 = vmatpush.msra.mxu0 0.0
      %1251 = vmatpush.msra.mxu0 0.0
      %1252 = vmatpush.msra.mxu0 0.0
      %1253 = vmatpush.msra.mxu0 0.0
      %1254 = vmatpush.msra.mxu0 0.0
      %1255 = vmatpush.msra.mxu0 0.0
      %1256 = vmatpush.msra.mxu0 0.0
      %1257 = vmatpush.msra.mxu0 0.0
      %1258 = vmatpush.msra.mxu0 0.0
      %1259 = vmatpush.msra.mxu0 0.0
      %1260 = vmatpush.msra.mxu0 0.0
      %1261 = vmatpush.msra.mxu0 %v1244
      %1262 = vmatmul.f32.gmra.mxu0 %v1241
      %v1263 = vpop.f32.mrf.mxu0
      %v1264 = vadd.f32 0.0, %v1263
      %1265 = vdwg.mxu0
      %v1266 = vadd.f32 %v1127, %v1264
      %v1267 = vld [vmem:[%s3] sm:$0xff]
      %1269 = vset.pattern.permute.xlu0 0
      %1270 = vperm.xlu0 %1269, %v1267
      %v1271 = vpop.permute.xlu0 %1270
      %v1273 = vadd.f32 %v1266, %v1271
      %v1274 = vmax.f32 %v1273, 0.0
      %v1275 = vld [vmem:[%s5] sm:$0xf]
      %v1276 = vld [vmem:[%s5 + $0x4] sm:$0xf]
      %v1277 = vld [vmem:[%s5 + $0x8] sm:$0xf]
      %v1278 = vld [vmem:[%s5 + $0xc] sm:$0xf]
      %v1279 = vld [vmem:[%s5 + $0x10] sm:$0xf]
      %v1280 = vld [vmem:[%s5 + $0x14] sm:$0xf]
      %v1281 = vld [vmem:[%s5 + $0x18] sm:$0xf]
      %v1282 = vld [vmem:[%s5 + $0x1c] sm:$0xf]
      %v1283 = vunpack.c.l.bf16 %v1275
      %v1284 = vunpack.c.l.bf16 %v1276
      %v1285 = vunpack.c.l.bf16 %v1277
      %v1286 = vunpack.c.l.bf16 %v1278
      %v1287 = vunpack.c.l.bf16 %v1279
      %v1288 = vunpack.c.l.bf16 %v1280
      %v1289 = vunpack.c.l.bf16 %v1281
      %v1290 = vunpack.c.l.bf16 %v1282
      %vm1291 = vcmask 523264
      %v1293 = vsel %vm1291, %v1274, 0
      %1295 = vmatpush.msra.mxu0 0.0
      %1296 = vmatpush.msra.mxu0 0.0
      %1297 = vmatpush.msra.mxu0 0.0
      %1298 = vmatpush.msra.mxu0 0.0
      %1299 = vmatpush.msra.mxu0 0.0
      %1300 = vmatpush.msra.mxu0 0.0
      %1301 = vmatpush.msra.mxu0 0.0
      %1302 = vmatpush.msra.mxu0 0.0
      %1303 = vmatpush.msra.mxu0 %v1290
      %1304 = vmatpush.msra.mxu0 %v1289
      %1305 = vmatpush.msra.mxu0 %v1288
      %1306 = vmatpush.msra.mxu0 %v1287
      %1307 = vmatpush.msra.mxu0 %v1286
      %1308 = vmatpush.msra.mxu0 %v1285
      %1309 = vmatpush.msra.mxu0 %v1284
      %1310 = vmatpush.msra.mxu0 %v1283
      %1311 = vmatmul.f32.gmra.mxu0 %v1293
      %v1312 = vpop.f32.mrf.mxu0
      %v1313 = vadd.f32 0.0, %v1312
      %1314 = vdwg.mxu0
      %v1315 = vld [vmem:[%s4] sm:$0xff]
      %v1316 = vld [vmem:[%s4 + $0x8] sm:$0xff]
      %s1317 = scalar_lea.vmem %s5, 32
      %v1318 = vld [vmem:[%s1317] sm:$0xf]
      %v1319 = vld [vmem:[%s1317 + $0x4] sm:$0xf]
      %v1320 = vld [vmem:[%s1317 + $0x8] sm:$0xf]
      %v1321 = vld [vmem:[%s1317 + $0xc] sm:$0xf]
      %v1322 = vld [vmem:[%s1317 + $0x10] sm:$0xf]
      %v1323 = vld [vmem:[%s1317 + $0x14] sm:$0xf]
      %v1324 = vld [vmem:[%s1317 + $0x18] sm:$0xf]
      %v1325 = vld [vmem:[%s1317 + $0x1c] sm:$0xf]
      %v1326 = vunpack.c.l.bf16 %v1318
      %v1327 = vunpack.c.l.bf16 %v1319
      %v1328 = vunpack.c.l.bf16 %v1320
      %v1329 = vunpack.c.l.bf16 %v1321
      %v1330 = vunpack.c.l.bf16 %v1322
      %v1331 = vunpack.c.l.bf16 %v1323
      %v1332 = vunpack.c.l.bf16 %v1324
      %v1333 = vunpack.c.l.bf16 %v1325
      %1334 = vmatpush.msra.mxu0 0.0
      %1335 = vmatpush.msra.mxu0 0.0
      %1336 = vmatpush.msra.mxu0 0.0
      %1337 = vmatpush.msra.mxu0 0.0
      %1338 = vmatpush.msra.mxu0 0.0
      %1339 = vmatpush.msra.mxu0 0.0
      %1340 = vmatpush.msra.mxu0 0.0
      %1341 = vmatpush.msra.mxu0 0.0
      %1342 = vmatpush.msra.mxu0 %v1333
      %1343 = vmatpush.msra.mxu0 %v1332
      %1344 = vmatpush.msra.mxu0 %v1331
      %1345 = vmatpush.msra.mxu0 %v1330
      %1346 = vmatpush.msra.mxu0 %v1329
      %1347 = vmatpush.msra.mxu0 %v1328
      %1348 = vmatpush.msra.mxu0 %v1327
      %1349 = vmatpush.msra.mxu0 %v1326
      %1350 = vmatmul.f32.gmra.mxu0 %v1293
      %v1351 = vpop.f32.mrf.mxu0
      %v1352 = vadd.f32 0.0, %v1351
      %1353 = vdwg.mxu0
      %s1354 = scalar_lea.vmem %s4, 16
      %v1355 = vld [vmem:[%s1354] sm:$0xff]
      %v1356 = vld [vmem:[%s1354 + $0x8] sm:$0xff]
      %vm1357 = vcmask 64512
      %v1359 = vsel %vm1357, %v1355, 0
      %v1362 = vsel %vm1357, %v1356, 0
      %1364 = vmatpush.msra.mxu0 0.0
      %1365 = vmatpush.msra.mxu0 0.0
      %1366 = vmatpush.msra.mxu0 0.0
      %1367 = vmatpush.msra.mxu0 0.0
      %1368 = vmatpush.msra.mxu0 0.0
      %1369 = vmatpush.msra.mxu0 0.0
      %1370 = vmatpush.msra.mxu0 0.0
      %1371 = vmatpush.msra.mxu0 0.0
      %1372 = vmatpush.msra.mxu0 0.0
      %1373 = vmatpush.msra.mxu0 0.0
      %1374 = vmatpush.msra.mxu0 0.0
      %1375 = vmatpush.msra.mxu0 0.0
      %1376 = vmatpush.msra.mxu0 0.0
      %1377 = vmatpush.msra.mxu0 0.0
      %1378 = vmatpush.msra.mxu0 0.0
      %1379 = vmatpush.msra.mxu0 %v1352
      %1380 = vmatmul.f32.gmra.mxu0 %v1359
      %v1381 = vpop.f32.mrf.mxu0
      %v1382 = vadd.f32 0.0, %v1381
      %1383 = vmatmul.f32.gmra.mxu0 %v1362
      %v1384 = vpop.f32.mrf.mxu0
      %v1385 = vadd.f32 0.0, %v1384
      %1386 = vdwg.mxu0
      %v1388 = vsel %vm1357, %v1315, 0
      %v1391 = vsel %vm1357, %v1316, 0
      %1393 = vmatpush.msra.mxu0 0.0
      %1394 = vmatpush.msra.mxu0 0.0
      %1395 = vmatpush.msra.mxu0 0.0
      %1396 = vmatpush.msra.mxu0 0.0
      %1397 = vmatpush.msra.mxu0 0.0
      %1398 = vmatpush.msra.mxu0 0.0
      %1399 = vmatpush.msra.mxu0 0.0
      %1400 = vmatpush.msra.mxu0 0.0
      %1401 = vmatpush.msra.mxu0 0.0
      %1402 = vmatpush.msra.mxu0 0.0
      %1403 = vmatpush.msra.mxu0 0.0
      %1404 = vmatpush.msra.mxu0 0.0
      %1405 = vmatpush.msra.mxu0 0.0
      %1406 = vmatpush.msra.mxu0 0.0
      %1407 = vmatpush.msra.mxu0 0.0
      %1408 = vmatpush.msra.mxu0 %v1313
      %1409 = vmatmul.f32.gmra.mxu0 %v1388
      %v1410 = vpop.f32.mrf.mxu0
      %v1411 = vadd.f32 %v1382, %v1410
      %1412 = vmatmul.f32.gmra.mxu0 %v1391
      %v1413 = vpop.f32.mrf.mxu0
      %v1414 = vadd.f32 %v1385, %v1413
      %1415 = vdwg.mxu0
      %s1416 = scalar_lea.vmem %s5, 64
      %v1417 = vld [vmem:[%s1416] sm:$0xf]
      %v1418 = vld [vmem:[%s1416 + $0x4] sm:$0xf]
      %v1419 = vld [vmem:[%s1416 + $0x8] sm:$0xf]
      %v1420 = vld [vmem:[%s1416 + $0xc] sm:$0xf]
      %v1421 = vld [vmem:[%s1416 + $0x10] sm:$0xf]
      %v1422 = vld [vmem:[%s1416 + $0x14] sm:$0xf]
      %v1423 = vld [vmem:[%s1416 + $0x18] sm:$0xf]
      %v1424 = vld [vmem:[%s1416 + $0x1c] sm:$0xf]
      %v1425 = vunpack.c.l.bf16 %v1417
      %v1426 = vunpack.c.l.bf16 %v1418
      %v1427 = vunpack.c.l.bf16 %v1419
      %v1428 = vunpack.c.l.bf16 %v1420
      %v1429 = vunpack.c.l.bf16 %v1421
      %v1430 = vunpack.c.l.bf16 %v1422
      %v1431 = vunpack.c.l.bf16 %v1423
      %v1432 = vunpack.c.l.bf16 %v1424
      %1433 = vmatpush.msra.mxu0 0.0
      %1434 = vmatpush.msra.mxu0 0.0
      %1435 = vmatpush.msra.mxu0 0.0
      %1436 = vmatpush.msra.mxu0 0.0
      %1437 = vmatpush.msra.mxu0 0.0
      %1438 = vmatpush.msra.mxu0 0.0
      %1439 = vmatpush.msra.mxu0 0.0
      %1440 = vmatpush.msra.mxu0 0.0
      %1441 = vmatpush.msra.mxu0 %v1432
      %1442 = vmatpush.msra.mxu0 %v1431
      %1443 = vmatpush.msra.mxu0 %v1430
      %1444 = vmatpush.msra.mxu0 %v1429
      %1445 = vmatpush.msra.mxu0 %v1428
      %1446 = vmatpush.msra.mxu0 %v1427
      %1447 = vmatpush.msra.mxu0 %v1426
      %1448 = vmatpush.msra.mxu0 %v1425
      %1449 = vmatmul.f32.gmra.mxu0 %v1293
      %v1450 = vpop.f32.mrf.mxu0
      %v1451 = vadd.f32 0.0, %v1450
      %1452 = vdwg.mxu0
      %s1453 = scalar_lea.vmem %s4, 32
      %v1454 = vld [vmem:[%s1453] sm:$0xff]
      %v1455 = vld [vmem:[%s1453 + $0x8] sm:$0xff]
      %v1457 = vsel %vm1357, %v1454, 0
      %v1460 = vsel %vm1357, %v1455, 0
      %1462 = vmatpush.msra.mxu0 0.0
      %1463 = vmatpush.msra.mxu0 0.0
      %1464 = vmatpush.msra.mxu0 0.0
      %1465 = vmatpush.msra.mxu0 0.0
      %1466 = vmatpush.msra.mxu0 0.0
      %1467 = vmatpush.msra.mxu0 0.0
      %1468 = vmatpush.msra.mxu0 0.0
      %1469 = vmatpush.msra.mxu0 0.0
      %1470 = vmatpush.msra.mxu0 0.0
      %1471 = vmatpush.msra.mxu0 0.0
      %1472 = vmatpush.msra.mxu0 0.0
      %1473 = vmatpush.msra.mxu0 0.0
      %1474 = vmatpush.msra.mxu0 0.0
      %1475 = vmatpush.msra.mxu0 0.0
      %1476 = vmatpush.msra.mxu0 0.0
      %1477 = vmatpush.msra.mxu0 %v1451
      %1478 = vmatmul.f32.gmra.mxu0 %v1457
      %v1479 = vpop.f32.mrf.mxu0
      %v1480 = vadd.f32 0.0, %v1479
      %1481 = vmatmul.f32.gmra.mxu0 %v1460
      %v1482 = vpop.f32.mrf.mxu0
      %v1483 = vadd.f32 0.0, %v1482
      %1484 = vdwg.mxu0
      %v1485 = vadd.f32 %v1411, %v1480
      %v1486 = vadd.f32 %v1414, %v1483
      %s1487 = scalar_lea.vmem %s5, 96
      %v1488 = vld [vmem:[%s1487] sm:$0xf]
      %v1489 = vld [vmem:[%s1487 + $0x4] sm:$0xf]
      %v1490 = vld [vmem:[%s1487 + $0x8] sm:$0xf]
      %v1491 = vld [vmem:[%s1487 + $0xc] sm:$0xf]
      %v1492 = vld [vmem:[%s1487 + $0x10] sm:$0xf]
      %v1493 = vld [vmem:[%s1487 + $0x14] sm:$0xf]
      %v1494 = vld [vmem:[%s1487 + $0x18] sm:$0xf]
      %v1495 = vld [vmem:[%s1487 + $0x1c] sm:$0xf]
      %v1496 = vunpack.c.l.bf16 %v1488
      %v1497 = vunpack.c.l.bf16 %v1489
      %v1498 = vunpack.c.l.bf16 %v1490
      %v1499 = vunpack.c.l.bf16 %v1491
      %v1500 = vunpack.c.l.bf16 %v1492
      %v1501 = vunpack.c.l.bf16 %v1493
      %v1502 = vunpack.c.l.bf16 %v1494
      %v1503 = vunpack.c.l.bf16 %v1495
      %1504 = vmatpush.msra.mxu0 0.0
      %1505 = vmatpush.msra.mxu0 0.0
      %1506 = vmatpush.msra.mxu0 0.0
      %1507 = vmatpush.msra.mxu0 0.0
      %1508 = vmatpush.msra.mxu0 0.0
      %1509 = vmatpush.msra.mxu0 0.0
      %1510 = vmatpush.msra.mxu0 0.0
      %1511 = vmatpush.msra.mxu0 0.0
      %1512 = vmatpush.msra.mxu0 %v1503
      %1513 = vmatpush.msra.mxu0 %v1502
      %1514 = vmatpush.msra.mxu0 %v1501
      %1515 = vmatpush.msra.mxu0 %v1500
      %1516 = vmatpush.msra.mxu0 %v1499
      %1517 = vmatpush.msra.mxu0 %v1498
      %1518 = vmatpush.msra.mxu0 %v1497
      %1519 = vmatpush.msra.mxu0 %v1496
      %1520 = vmatmul.f32.gmra.mxu0 %v1293
      %v1521 = vpop.f32.mrf.mxu0
      %v1522 = vadd.f32 0.0, %v1521
      %1523 = vdwg.mxu0
      %s1524 = scalar_lea.vmem %s4, 48
      %v1525 = vld [vmem:[%s1524] sm:$0xff]
      %v1526 = vld [vmem:[%s1524 + $0x8] sm:$0xff]
      %v1528 = vsel %vm1357, %v1525, 0
      %v1531 = vsel %vm1357, %v1526, 0
      %1533 = vmatpush.msra.mxu0 0.0
      %1534 = vmatpush.msra.mxu0 0.0
      %1535 = vmatpush.msra.mxu0 0.0
      %1536 = vmatpush.msra.mxu0 0.0
      %1537 = vmatpush.msra.mxu0 0.0
      %1538 = vmatpush.msra.mxu0 0.0
      %1539 = vmatpush.msra.mxu0 0.0
      %1540 = vmatpush.msra.mxu0 0.0
      %1541 = vmatpush.msra.mxu0 0.0
      %1542 = vmatpush.msra.mxu0 0.0
      %1543 = vmatpush.msra.mxu0 0.0
      %1544 = vmatpush.msra.mxu0 0.0
      %1545 = vmatpush.msra.mxu0 0.0
      %1546 = vmatpush.msra.mxu0 0.0
      %1547 = vmatpush.msra.mxu0 0.0
      %1548 = vmatpush.msra.mxu0 %v1522
      %1549 = vmatmul.f32.gmra.mxu0 %v1528
      %v1550 = vpop.f32.mrf.mxu0
      %v1551 = vadd.f32 0.0, %v1550
      %1552 = vmatmul.f32.gmra.mxu0 %v1531
      %v1553 = vpop.f32.mrf.mxu0
      %v1554 = vadd.f32 0.0, %v1553
      %1555 = vdwg.mxu0
      %v1556 = vadd.f32 %v1485, %v1551
      %v1557 = vadd.f32 %v1486, %v1554
      %v1558 = vld [vmem:[%s6] sm:$0xff]
      %v1559 = vld [vmem:[%s6 + $0x8] sm:$0xff]
      %1561 = vset.pattern.permute.xlu0 0
      %1562 = vperm.xlu0 %1561, %v1558
      %v1563 = vpop.permute.xlu0 %1562
      %1566 = vset.pattern.permute.xlu0 0
      %1567 = vperm.xlu0 %1566, %v1559
      %v1568 = vpop.permute.xlu0 %1567
      %v1570 = vadd.f32 %v1556, %v1563
      %v1571 = vadd.f32 %v1557, %v1568
      %v1572 = vmax.f32 %v1570, 0.0
      %v1573 = vmax.f32 %v1571, 0.0
      %v1574 = vld [vmem:[%s8] sm:$0xf]
      %v1575 = vld [vmem:[%s8 + $0x4] sm:$0xf]
      %v1576 = vunpack.c.l.bf16 %v1574
      %v1577 = vunpack.c.l.bf16 %v1575
      %vm1578 = vcmask 130048
      %v1580 = vsel %vm1578, %v1572, 0
      %v1583 = vsel %vm1578, %v1573, 0
      %1585 = vmatpush.msra.mxu0 0.0
      %1586 = vmatpush.msra.mxu0 0.0
      %1587 = vmatpush.msra.mxu0 0.0
      %1588 = vmatpush.msra.mxu0 0.0
      %1589 = vmatpush.msra.mxu0 0.0
      %1590 = vmatpush.msra.mxu0 0.0
      %1591 = vmatpush.msra.mxu0 0.0
      %1592 = vmatpush.msra.mxu0 0.0
      %1593 = vmatpush.msra.mxu0 0.0
      %1594 = vmatpush.msra.mxu0 0.0
      %1595 = vmatpush.msra.mxu0 0.0
      %1596 = vmatpush.msra.mxu0 0.0
      %1597 = vmatpush.msra.mxu0 0.0
      %1598 = vmatpush.msra.mxu0 0.0
      %1599 = vmatpush.msra.mxu0 %v1577
      %1600 = vmatpush.msra.mxu0 %v1576
      %1601 = vmatmul.f32.gmra.mxu0 %v1580
      %v1602 = vpop.f32.mrf.mxu0
      %v1603 = vadd.f32 0.0, %v1602
      %1604 = vmatmul.f32.gmra.mxu0 %v1583
      %v1605 = vpop.f32.mrf.mxu0
      %v1606 = vadd.f32 0.0, %v1605
      %1607 = vdwg.mxu0
      %v1608 = vld [vmem:[%s7] sm:$0xff]
      %v1609 = vld [vmem:[%s7 + $0x8] sm:$0xff]
      %v1610 = vld [vmem:[%s7 + $0x10] sm:$0xff]
      %v1611 = vld [vmem:[%s7 + $0x18] sm:$0xff]
      %s1612 = scalar_lea.vmem %s8, 8
      %v1613 = vld [vmem:[%s1612] sm:$0xf]
      %v1614 = vld [vmem:[%s1612 + $0x4] sm:$0xf]
      %v1615 = vunpack.c.l.bf16 %v1613
      %v1616 = vunpack.c.l.bf16 %v1614
      %1617 = vmatpush.msra.mxu0 0.0
      %1618 = vmatpush.msra.mxu0 0.0
      %1619 = vmatpush.msra.mxu0 0.0
      %1620 = vmatpush.msra.mxu0 0.0
      %1621 = vmatpush.msra.mxu0 0.0
      %1622 = vmatpush.msra.mxu0 0.0
      %1623 = vmatpush.msra.mxu0 0.0
      %1624 = vmatpush.msra.mxu0 0.0
      %1625 = vmatpush.msra.mxu0 0.0
      %1626 = vmatpush.msra.mxu0 0.0
      %1627 = vmatpush.msra.mxu0 0.0
      %1628 = vmatpush.msra.mxu0 0.0
      %1629 = vmatpush.msra.mxu0 0.0
      %1630 = vmatpush.msra.mxu0 0.0
      %1631 = vmatpush.msra.mxu0 %v1616
      %1632 = vmatpush.msra.mxu0 %v1615
      %1633 = vmatmul.f32.gmra.mxu0 %v1580
      %v1634 = vpop.f32.mrf.mxu0
      %v1635 = vadd.f32 0.0, %v1634
      %1636 = vmatmul.f32.gmra.mxu0 %v1583
      %v1637 = vpop.f32.mrf.mxu0
      %v1638 = vadd.f32 0.0, %v1637
      %1639 = vdwg.mxu0
      %s1640 = scalar_lea.vmem %s7, 32
      %v1641 = vld [vmem:[%s1640] sm:$0xff]
      %v1642 = vld [vmem:[%s1640 + $0x8] sm:$0xff]
      %v1643 = vld [vmem:[%s1640 + $0x10] sm:$0xff]
      %v1644 = vld [vmem:[%s1640 + $0x18] sm:$0xff]
      %v1646 = vsel %vm1578, %v1641, 0
      %v1649 = vsel %vm1578, %v1642, 0
      %v1652 = vsel %vm1578, %v1643, 0
      %v1655 = vsel %vm1578, %v1644, 0
      %1657 = vmatpush.msra.mxu0 0.0
      %1658 = vmatpush.msra.mxu0 0.0
      %1659 = vmatpush.msra.mxu0 0.0
      %1660 = vmatpush.msra.mxu0 0.0
      %1661 = vmatpush.msra.mxu0 0.0
      %1662 = vmatpush.msra.mxu0 0.0
      %1663 = vmatpush.msra.mxu0 0.0
      %1664 = vmatpush.msra.mxu0 0.0
      %1665 = vmatpush.msra.mxu0 0.0
      %1666 = vmatpush.msra.mxu0 0.0
      %1667 = vmatpush.msra.mxu0 0.0
      %1668 = vmatpush.msra.mxu0 0.0
      %1669 = vmatpush.msra.mxu0 0.0
      %1670 = vmatpush.msra.mxu0 0.0
      %1671 = vmatpush.msra.mxu0 %v1638
      %1672 = vmatpush.msra.mxu0 %v1635
      %1673 = vmatmul.f32.gmra.mxu0 %v1646
      %v1674 = vpop.f32.mrf.mxu0
      %v1675 = vadd.f32 0.0, %v1674
      %1676 = vmatmul.f32.gmra.mxu0 %v1649
      %v1677 = vpop.f32.mrf.mxu0
      %v1678 = vadd.f32 0.0, %v1677
      %1679 = vmatmul.f32.gmra.mxu0 %v1652
      %v1680 = vpop.f32.mrf.mxu0
      %v1681 = vadd.f32 0.0, %v1680
      %1682 = vmatmul.f32.gmra.mxu0 %v1655
      %v1683 = vpop.f32.mrf.mxu0
      %v1684 = vadd.f32 0.0, %v1683
      %1685 = vdwg.mxu0
      %v1687 = vsel %vm1578, %v1608, 0
      %v1690 = vsel %vm1578, %v1609, 0
      %v1693 = vsel %vm1578, %v1610, 0
      %v1696 = vsel %vm1578, %v1611, 0
      %1698 = vmatpush.msra.mxu0 0.0
      %1699 = vmatpush.msra.mxu0 0.0
      %1700 = vmatpush.msra.mxu0 0.0
      %1701 = vmatpush.msra.mxu0 0.0
      %1702 = vmatpush.msra.mxu0 0.0
      %1703 = vmatpush.msra.mxu0 0.0
      %1704 = vmatpush.msra.mxu0 0.0
      %1705 = vmatpush.msra.mxu0 0.0
      %1706 = vmatpush.msra.mxu0 0.0
      %1707 = vmatpush.msra.mxu0 0.0
      %1708 = vmatpush.msra.mxu0 0.0
      %1709 = vmatpush.msra.mxu0 0.0
      %1710 = vmatpush.msra.mxu0 0.0
      %1711 = vmatpush.msra.mxu0 0.0
      %1712 = vmatpush.msra.mxu0 %v1606
      %1713 = vmatpush.msra.mxu0 %v1603
      %1714 = vmatmul.f32.gmra.mxu0 %v1687
      %v1715 = vpop.f32.mrf.mxu0
      %v1716 = vadd.f32 %v1675, %v1715
      %1717 = vmatmul.f32.gmra.mxu0 %v1690
      %v1718 = vpop.f32.mrf.mxu0
      %v1719 = vadd.f32 %v1678, %v1718
      %1720 = vmatmul.f32.gmra.mxu0 %v1693
      %v1721 = vpop.f32.mrf.mxu0
      %v1722 = vadd.f32 %v1681, %v1721
      %1723 = vmatmul.f32.gmra.mxu0 %v1696
      %v1724 = vpop.f32.mrf.mxu0
      %v1725 = vadd.f32 %v1684, %v1724
      %1726 = vdwg.mxu0
      %s1727 = scalar_lea.vmem %s8, 16
      %v1728 = vld [vmem:[%s1727] sm:$0xf]
      %v1729 = vld [vmem:[%s1727 + $0x4] sm:$0xf]
      %v1730 = vunpack.c.l.bf16 %v1728
      %v1731 = vunpack.c.l.bf16 %v1729
      %1732 = vmatpush.msra.mxu0 0.0
      %1733 = vmatpush.msra.mxu0 0.0
      %1734 = vmatpush.msra.mxu0 0.0
      %1735 = vmatpush.msra.mxu0 0.0
      %1736 = vmatpush.msra.mxu0 0.0
      %1737 = vmatpush.msra.mxu0 0.0
      %1738 = vmatpush.msra.mxu0 0.0
      %1739 = vmatpush.msra.mxu0 0.0
      %1740 = vmatpush.msra.mxu0 0.0
      %1741 = vmatpush.msra.mxu0 0.0
      %1742 = vmatpush.msra.mxu0 0.0
      %1743 = vmatpush.msra.mxu0 0.0
      %1744 = vmatpush.msra.mxu0 0.0
      %1745 = vmatpush.msra.mxu0 0.0
      %1746 = vmatpush.msra.mxu0 %v1731
      %1747 = vmatpush.msra.mxu0 %v1730
      %1748 = vmatmul.f32.gmra.mxu0 %v1580
      %v1749 = vpop.f32.mrf.mxu0
      %v1750 = vadd.f32 0.0, %v1749
      %1751 = vmatmul.f32.gmra.mxu0 %v1583
      %v1752 = vpop.f32.mrf.mxu0
      %v1753 = vadd.f32 0.0, %v1752
      %1754 = vdwg.mxu0
      %s1755 = scalar_lea.vmem %s7, 64
      %v1756 = vld [vmem:[%s1755] sm:$0xff]
      %v1757 = vld [vmem:[%s1755 + $0x8] sm:$0xff]
      %v1758 = vld [vmem:[%s1755 + $0x10] sm:$0xff]
      %v1759 = vld [vmem:[%s1755 + $0x18] sm:$0xff]
      %v1761 = vsel %vm1578, %v1756, 0
      %v1764 = vsel %vm1578, %v1757, 0
      %v1767 = vsel %vm1578, %v1758, 0
      %v1770 = vsel %vm1578, %v1759, 0
      %1772 = vmatpush.msra.mxu0 0.0
      %1773 = vmatpush.msra.mxu0 0.0
      %1774 = vmatpush.msra.mxu0 0.0
      %1775 = vmatpush.msra.mxu0 0.0
      %1776 = vmatpush.msra.mxu0 0.0
      %1777 = vmatpush.msra.mxu0 0.0
      %1778 = vmatpush.msra.mxu0 0.0
      %1779 = vmatpush.msra.mxu0 0.0
      %1780 = vmatpush.msra.mxu0 0.0
      %1781 = vmatpush.msra.mxu0 0.0
      %1782 = vmatpush.msra.mxu0 0.0
      %1783 = vmatpush.msra.mxu0 0.0
      %1784 = vmatpush.msra.mxu0 0.0
      %1785 = vmatpush.msra.mxu0 0.0
      %1786 = vmatpush.msra.mxu0 %v1753
      %1787 = vmatpush.msra.mxu0 %v1750
      %1788 = vmatmul.f32.gmra.mxu0 %v1761
      %v1789 = vpop.f32.mrf.mxu0
      %v1790 = vadd.f32 0.0, %v1789
      %1791 = vmatmul.f32.gmra.mxu0 %v1764
      %v1792 = vpop.f32.mrf.mxu0
      %v1793 = vadd.f32 0.0, %v1792
      %1794 = vmatmul.f32.gmra.mxu0 %v1767
      %v1795 = vpop.f32.mrf.mxu0
      %v1796 = vadd.f32 0.0, %v1795
      %1797 = vmatmul.f32.gmra.mxu0 %v1770
      %v1798 = vpop.f32.mrf.mxu0
      %v1799 = vadd.f32 0.0, %v1798
      %1800 = vdwg.mxu0
      %v1801 = vadd.f32 %v1716, %v1790
      %v1802 = vadd.f32 %v1719, %v1793
      %v1803 = vadd.f32 %v1722, %v1796
      %v1804 = vadd.f32 %v1725, %v1799
      %s1805 = scalar_lea.vmem %s8, 24
      %v1806 = vld [vmem:[%s1805] sm:$0xf]
      %v1807 = vld [vmem:[%s1805 + $0x4] sm:$0xf]
      %v1808 = vunpack.c.l.bf16 %v1806
      %v1809 = vunpack.c.l.bf16 %v1807
      %1810 = vmatpush.msra.mxu0 0.0
      %1811 = vmatpush.msra.mxu0 0.0
      %1812 = vmatpush.msra.mxu0 0.0
      %1813 = vmatpush.msra.mxu0 0.0
      %1814 = vmatpush.msra.mxu0 0.0
      %1815 = vmatpush.msra.mxu0 0.0
      %1816 = vmatpush.msra.mxu0 0.0
      %1817 = vmatpush.msra.mxu0 0.0
      %1818 = vmatpush.msra.mxu0 0.0
      %1819 = vmatpush.msra.mxu0 0.0
      %1820 = vmatpush.msra.mxu0 0.0
      %1821 = vmatpush.msra.mxu0 0.0
      %1822 = vmatpush.msra.mxu0 0.0
      %1823 = vmatpush.msra.mxu0 0.0
      %1824 = vmatpush.msra.mxu0 %v1809
      %1825 = vmatpush.msra.mxu0 %v1808
      %1826 = vmatmul.f32.gmra.mxu0 %v1580
      %v1827 = vpop.f32.mrf.mxu0
      %v1828 = vadd.f32 0.0, %v1827
      %1829 = vmatmul.f32.gmra.mxu0 %v1583
      %v1830 = vpop.f32.mrf.mxu0
      %v1831 = vadd.f32 0.0, %v1830
      %1832 = vdwg.mxu0
      %s1833 = scalar_lea.vmem %s7, 96
      %v1834 = vld [vmem:[%s1833] sm:$0xff]
      %v1835 = vld [vmem:[%s1833 + $0x8] sm:$0xff]
      %v1836 = vld [vmem:[%s1833 + $0x10] sm:$0xff]
      %v1837 = vld [vmem:[%s1833 + $0x18] sm:$0xff]
      %v1839 = vsel %vm1578, %v1834, 0
      %v1842 = vsel %vm1578, %v1835, 0
      %v1845 = vsel %vm1578, %v1836, 0
      %v1848 = vsel %vm1578, %v1837, 0
      %1850 = vmatpush.msra.mxu0 0.0
      %1851 = vmatpush.msra.mxu0 0.0
      %1852 = vmatpush.msra.mxu0 0.0
      %1853 = vmatpush.msra.mxu0 0.0
      %1854 = vmatpush.msra.mxu0 0.0
      %1855 = vmatpush.msra.mxu0 0.0
      %1856 = vmatpush.msra.mxu0 0.0
      %1857 = vmatpush.msra.mxu0 0.0
      %1858 = vmatpush.msra.mxu0 0.0
      %1859 = vmatpush.msra.mxu0 0.0
      %1860 = vmatpush.msra.mxu0 0.0
      %1861 = vmatpush.msra.mxu0 0.0
      %1862 = vmatpush.msra.mxu0 0.0
      %1863 = vmatpush.msra.mxu0 0.0
      %1864 = vmatpush.msra.mxu0 %v1831
      %1865 = vmatpush.msra.mxu0 %v1828
      %1866 = vmatmul.f32.gmra.mxu0 %v1839
      %v1867 = vpop.f32.mrf.mxu0
      %v1868 = vadd.f32 0.0, %v1867
      %1869 = vmatmul.f32.gmra.mxu0 %v1842
      %v1870 = vpop.f32.mrf.mxu0
      %v1871 = vadd.f32 0.0, %v1870
      %1872 = vmatmul.f32.gmra.mxu0 %v1845
      %v1873 = vpop.f32.mrf.mxu0
      %v1874 = vadd.f32 0.0, %v1873
      %1875 = vmatmul.f32.gmra.mxu0 %v1848
      %v1876 = vpop.f32.mrf.mxu0
      %v1877 = vadd.f32 0.0, %v1876
      %1878 = vdwg.mxu0
      %v1879 = vadd.f32 %v1801, %v1868
      %v1880 = vadd.f32 %v1802, %v1871
      %v1881 = vadd.f32 %v1803, %v1874
      %v1882 = vadd.f32 %v1804, %v1877
      %v1883 = vld [vmem:[%s9] sm:$0xff]
      %v1884 = vld [vmem:[%s9 + $0x8] sm:$0xff]
      %v1885 = vld [vmem:[%s9 + $0x10] sm:$0xff]
      %v1886 = vld [vmem:[%s9 + $0x18] sm:$0xff]
      %1888 = vset.pattern.permute.xlu0 0
      %1889 = vperm.xlu0 %1888, %v1883
      %v1890 = vpop.permute.xlu0 %1889
      %1893 = vset.pattern.permute.xlu0 0
      %1894 = vperm.xlu0 %1893, %v1884
      %v1895 = vpop.permute.xlu0 %1894
      %1898 = vset.pattern.permute.xlu0 0
      %1899 = vperm.xlu0 %1898, %v1885
      %v1900 = vpop.permute.xlu0 %1899
      %1903 = vset.pattern.permute.xlu0 0
      %1904 = vperm.xlu0 %1903, %v1886
      %v1905 = vpop.permute.xlu0 %1904
      %v1907 = vadd.f32 %v1879, %v1890
      %v1908 = vadd.f32 %v1880, %v1895
      %v1909 = vadd.f32 %v1881, %v1900
      %v1910 = vadd.f32 %v1882, %v1905
      %v1911 = vmax.f32 %v1907, 0.0
      %v1912 = vmax.f32 %v1908, 0.0
      %v1913 = vmax.f32 %v1909, 0.0
      %v1914 = vmax.f32 %v1910, 0.0
      %v1915 = vld [vmem:[%s11] sm:$0xff]
      %v1916 = vld [vmem:[%s11 + $0x8] sm:$0xff]
      %v1917 = vld [vmem:[%s11 + $0x10] sm:$0xff]
      %v1918 = vld [vmem:[%s11 + $0x18] sm:$0xff]
      %v1919 = vld [vmem:[%s10] sm:$0xff]
      %v1920 = vld [vmem:[%s10 + $0x8] sm:$0xff]
      %v1921 = vld [vmem:[%s10 + $0x10] sm:$0xff]
      %v1922 = vld [vmem:[%s10 + $0x18] sm:$0xff]
      %vm1923 = vcmask 261120
      %v1925 = vsel %vm1923, %v1919, 0
      %v1928 = vsel %vm1923, %v1920, 0
      %v1931 = vsel %vm1923, %v1921, 0
      %v1934 = vsel %vm1923, %v1922, 0
      %1936 = vmatpush.msra.mxu0 0.0
      %1937 = vmatpush.msra.mxu0 0.0
      %1938 = vmatpush.msra.mxu0 0.0
      %1939 = vmatpush.msra.mxu0 0.0
      %1940 = vmatpush.msra.mxu0 0.0
      %1941 = vmatpush.msra.mxu0 0.0
      %1942 = vmatpush.msra.mxu0 0.0
      %1943 = vmatpush.msra.mxu0 0.0
      %1944 = vmatpush.msra.mxu0 0.0
      %1945 = vmatpush.msra.mxu0 0.0
      %1946 = vmatpush.msra.mxu0 0.0
      %1947 = vmatpush.msra.mxu0 0.0
      %1948 = vmatpush.msra.mxu0 %v1914
      %1949 = vmatpush.msra.mxu0 %v1913
      %1950 = vmatpush.msra.mxu0 %v1912
      %1951 = vmatpush.msra.mxu0 %v1911
      %1952 = vmatmul.f32.gmra.mxu0 %v1925
      %v1953 = vpop.f32.mrf.mxu0
      %v1954 = vadd.f32 0.0, %v1953
      %1955 = vmatmul.f32.gmra.mxu0 %v1928
      %v1956 = vpop.f32.mrf.mxu0
      %v1957 = vadd.f32 0.0, %v1956
      %1958 = vmatmul.f32.gmra.mxu0 %v1931
      %v1959 = vpop.f32.mrf.mxu0
      %v1960 = vadd.f32 0.0, %v1959
      %1961 = vmatmul.f32.gmra.mxu0 %v1934
      %v1962 = vpop.f32.mrf.mxu0
      %v1963 = vadd.f32 0.0, %v1962
      %1964 = vdwg.mxu0
      %v1965 = vadd.f32 %v1915, %v1954
      %v1966 = vadd.f32 %v1916, %v1957
      %v1967 = vadd.f32 %v1917, %v1960
      %v1968 = vadd.f32 %v1918, %v1963
      %s1969 = scalar_lea.vmem %s10, 32
      %v1970 = vld [vmem:[%s1969] sm:$0xff]
      %v1971 = vld [vmem:[%s1969 + $0x8] sm:$0xff]
      %v1972 = vld [vmem:[%s1969 + $0x10] sm:$0xff]
      %v1973 = vld [vmem:[%s1969 + $0x18] sm:$0xff]
      %v1975 = vsel %vm1923, %v1970, 0
      %v1978 = vsel %vm1923, %v1971, 0
      %v1981 = vsel %vm1923, %v1972, 0
      %v1984 = vsel %vm1923, %v1973, 0
      %1986 = vmatpush.msra.mxu0 0.0
      %1987 = vmatpush.msra.mxu0 0.0
      %1988 = vmatpush.msra.mxu0 0.0
      %1989 = vmatpush.msra.mxu0 0.0
      %1990 = vmatpush.msra.mxu0 0.0
      %1991 = vmatpush.msra.mxu0 0.0
      %1992 = vmatpush.msra.mxu0 0.0
      %1993 = vmatpush.msra.mxu0 0.0
      %1994 = vmatpush.msra.mxu0 0.0
      %1995 = vmatpush.msra.mxu0 0.0
      %1996 = vmatpush.msra.mxu0 0.0
      %1997 = vmatpush.msra.mxu0 0.0
      %1998 = vmatpush.msra.mxu0 %v1914
      %1999 = vmatpush.msra.mxu0 %v1913
      %2000 = vmatpush.msra.mxu0 %v1912
      %2001 = vmatpush.msra.mxu0 %v1911
      %2002 = vmatmul.f32.gmra.mxu0 %v1975
      %v2003 = vpop.f32.mrf.mxu0
      %v2004 = vadd.f32 0.0, %v2003
      %2005 = vmatmul.f32.gmra.mxu0 %v1978
      %v2006 = vpop.f32.mrf.mxu0
      %v2007 = vadd.f32 0.0, %v2006
      %2008 = vmatmul.f32.gmra.mxu0 %v1981
      %v2009 = vpop.f32.mrf.mxu0
      %v2010 = vadd.f32 0.0, %v2009
      %2011 = vmatmul.f32.gmra.mxu0 %v1984
      %v2012 = vpop.f32.mrf.mxu0
      %v2013 = vadd.f32 0.0, %v2012
      %2014 = vdwg.mxu0
      %2019 = vrot.lane.b32.xlu0 %v2004, 127
      %v2020 = vpop.permute.xlu0 %2019
      %2021 = vrot.lane.b32.xlu0 %v2007, 127
      %v2022 = vpop.permute.xlu0 %2021
      %2023 = vrot.lane.b32.xlu0 %v2010, 127
      %v2024 = vpop.permute.xlu0 %2023
      %2025 = vrot.lane.b32.xlu0 %v2013, 127
      %v2026 = vpop.permute.xlu0 %2025
      %v2031 = vadd.f32 %v1965, %v2020
      %v2032 = vadd.f32 %v1966, %v2022
      %v2033 = vadd.f32 %v1967, %v2024
      %v2034 = vadd.f32 %v1968, %v2026
      %s2035 = scalar_lea.vmem %s10, 64
      %v2036 = vld [vmem:[%s2035] sm:$0xff]
      %v2037 = vld [vmem:[%s2035 + $0x8] sm:$0xff]
      %v2038 = vld [vmem:[%s2035 + $0x10] sm:$0xff]
      %v2039 = vld [vmem:[%s2035 + $0x18] sm:$0xff]
      %v2041 = vsel %vm1923, %v2036, 0
      %v2044 = vsel %vm1923, %v2037, 0
      %v2047 = vsel %vm1923, %v2038, 0
      %v2050 = vsel %vm1923, %v2039, 0
      %2052 = vmatpush.msra.mxu0 0.0
      %2053 = vmatpush.msra.mxu0 0.0
      %2054 = vmatpush.msra.mxu0 0.0
      %2055 = vmatpush.msra.mxu0 0.0
      %2056 = vmatpush.msra.mxu0 0.0
      %2057 = vmatpush.msra.mxu0 0.0
      %2058 = vmatpush.msra.mxu0 0.0
      %2059 = vmatpush.msra.mxu0 0.0
      %2060 = vmatpush.msra.mxu0 0.0
      %2061 = vmatpush.msra.mxu0 0.0
      %2062 = vmatpush.msra.mxu0 0.0
      %2063 = vmatpush.msra.mxu0 0.0
      %2064 = vmatpush.msra.mxu0 %v1914
      %2065 = vmatpush.msra.mxu0 %v1913
      %2066 = vmatpush.msra.mxu0 %v1912
      %2067 = vmatpush.msra.mxu0 %v1911
      %2068 = vmatmul.f32.gmra.mxu0 %v2041
      %v2069 = vpop.f32.mrf.mxu0
      %v2070 = vadd.f32 0.0, %v2069
      %2071 = vmatmul.f32.gmra.mxu0 %v2044
      %v2072 = vpop.f32.mrf.mxu0
      %v2073 = vadd.f32 0.0, %v2072
      %2074 = vmatmul.f32.gmra.mxu0 %v2047
      %v2075 = vpop.f32.mrf.mxu0
      %v2076 = vadd.f32 0.0, %v2075
      %2077 = vmatmul.f32.gmra.mxu0 %v2050
      %v2078 = vpop.f32.mrf.mxu0
      %v2079 = vadd.f32 0.0, %v2078
      %2080 = vdwg.mxu0
      %2085 = vrot.lane.b32.xlu0 %v2070, 126
      %v2086 = vpop.permute.xlu0 %2085
      %2087 = vrot.lane.b32.xlu0 %v2073, 126
      %v2088 = vpop.permute.xlu0 %2087
      %2089 = vrot.lane.b32.xlu0 %v2076, 126
      %v2090 = vpop.permute.xlu0 %2089
      %2091 = vrot.lane.b32.xlu0 %v2079, 126
      %v2092 = vpop.permute.xlu0 %2091
      %v2097 = vadd.f32 %v2031, %v2086
      %v2098 = vadd.f32 %v2032, %v2088
      %v2099 = vadd.f32 %v2033, %v2090
      %v2100 = vadd.f32 %v2034, %v2092
      %s2101 = scalar_lea.vmem %s10, 96
      %v2102 = vld [vmem:[%s2101] sm:$0xff]
      %v2103 = vld [vmem:[%s2101 + $0x8] sm:$0xff]
      %v2104 = vld [vmem:[%s2101 + $0x10] sm:$0xff]
      %v2105 = vld [vmem:[%s2101 + $0x18] sm:$0xff]
      %v2107 = vsel %vm1923, %v2102, 0
      %v2110 = vsel %vm1923, %v2103, 0
      %v2113 = vsel %vm1923, %v2104, 0
      %v2116 = vsel %vm1923, %v2105, 0
      %2118 = vmatpush.msra.mxu0 0.0
      %2119 = vmatpush.msra.mxu0 0.0
      %2120 = vmatpush.msra.mxu0 0.0
      %2121 = vmatpush.msra.mxu0 0.0
      %2122 = vmatpush.msra.mxu0 0.0
      %2123 = vmatpush.msra.mxu0 0.0
      %2124 = vmatpush.msra.mxu0 0.0
      %2125 = vmatpush.msra.mxu0 0.0
      %2126 = vmatpush.msra.mxu0 0.0
      %2127 = vmatpush.msra.mxu0 0.0
      %2128 = vmatpush.msra.mxu0 0.0
      %2129 = vmatpush.msra.mxu0 0.0
      %2130 = vmatpush.msra.mxu0 %v1914
      %2131 = vmatpush.msra.mxu0 %v1913
      %2132 = vmatpush.msra.mxu0 %v1912
      %2133 = vmatpush.msra.mxu0 %v1911
      %2134 = vmatmul.f32.gmra.mxu0 %v2107
      %v2135 = vpop.f32.mrf.mxu0
      %v2136 = vadd.f32 0.0, %v2135
      %2137 = vmatmul.f32.gmra.mxu0 %v2110
      %v2138 = vpop.f32.mrf.mxu0
      %v2139 = vadd.f32 0.0, %v2138
      %2140 = vmatmul.f32.gmra.mxu0 %v2113
      %v2141 = vpop.f32.mrf.mxu0
      %v2142 = vadd.f32 0.0, %v2141
      %2143 = vmatmul.f32.gmra.mxu0 %v2116
      %v2144 = vpop.f32.mrf.mxu0
      %v2145 = vadd.f32 0.0, %v2144
      %2146 = vdwg.mxu0
      %2151 = vrot.lane.b32.xlu0 %v2136, 125
      %v2152 = vpop.permute.xlu0 %2151
      %2153 = vrot.lane.b32.xlu0 %v2139, 125
      %v2154 = vpop.permute.xlu0 %2153
      %2155 = vrot.lane.b32.xlu0 %v2142, 125
      %v2156 = vpop.permute.xlu0 %2155
      %2157 = vrot.lane.b32.xlu0 %v2145, 125
      %v2158 = vpop.permute.xlu0 %2157
      %v2163 = vadd.f32 %v2097, %v2152
      %v2164 = vadd.f32 %v2098, %v2154
      %v2165 = vadd.f32 %v2099, %v2156
      %v2166 = vadd.f32 %v2100, %v2158
      %v2167 = vxor.u32 %v2163, 2147483648
      %v2168 = vxor.u32 %v2164, 2147483648
      %v2169 = vxor.u32 %v2165, 2147483648
      %v2170 = vxor.u32 %v2166, 2147483648
      %v2171 = vmul.f32 %v2167, 1.442695
      %v2172 = vpow.pop %v2171
      %v2173 = vmul.f32 %v2168, 1.442695
      %v2174 = vpow.pop %v2173
      %v2175 = vmul.f32 %v2169, 1.442695
      %v2176 = vpow.pop %v2175
      %v2177 = vmul.f32 %v2170, 1.442695
      %v2178 = vpow.pop %v2177
      %v2179 = vadd.f32 %v2172, 1.0
      %v2180 = vadd.f32 %v2174, 1.0
      %v2181 = vadd.f32 %v2176, 1.0
      %v2182 = vadd.f32 %v2178, 1.0
      %v2183 = vrcp.pop %v2179
      %v2184 = vmul.f32 %v2179, %v2183
      %v2185 = vsub.f32 1.0, %v2184
      %v2186 = vmul.f32 %v2183, %v2185
      %v2187 = vadd.f32 %v2183, %v2186
      %vm2188 = vweird.f32 %v2179
      %vm2189 = vweird.f32 %v2183
      %vm2190 = vmor %vm2188, %vm2189
      %v2191 = vsel %vm2190, %v2183, %v2187
      %v2192 = vand.u32 2147483647, %v2179
      %vm2193 = vcmp.eq.f32.partialorder %v2192, 8.507059e+37
      %v2194 = vand.u32 %v2179, 2147483648
      %v2195 = vor.u32 1.1754944e-38, %v2194
      %v2196 = vsel %vm2193, %v2195, %v2191
      %v2197 = vmul.f32 1.0, %v2196
      %v2198 = vrcp.pop %v2180
      %v2199 = vmul.f32 %v2180, %v2198
      %v2200 = vsub.f32 1.0, %v2199
      %v2201 = vmul.f32 %v2198, %v2200
      %v2202 = vadd.f32 %v2198, %v2201
      %vm2203 = vweird.f32 %v2180
      %vm2204 = vweird.f32 %v2198
      %vm2205 = vmor %vm2203, %vm2204
      %v2206 = vsel %vm2205, %v2198, %v2202
      %v2207 = vand.u32 2147483647, %v2180
      %vm2208 = vcmp.eq.f32.partialorder %v2207, 8.507059e+37
      %v2209 = vand.u32 %v2180, 2147483648
      %v2210 = vor.u32 1.1754944e-38, %v2209
      %v2211 = vsel %vm2208, %v2210, %v2206
      %v2212 = vmul.f32 1.0, %v2211
      %v2213 = vrcp.pop %v2181
      %v2214 = vmul.f32 %v2181, %v2213
      %v2215 = vsub.f32 1.0, %v2214
      %v2216 = vmul.f32 %v2213, %v2215
      %v2217 = vadd.f32 %v2213, %v2216
      %vm2218 = vweird.f32 %v2181
      %vm2219 = vweird.f32 %v2213
      %vm2220 = vmor %vm2218, %vm2219
      %v2221 = vsel %vm2220, %v2213, %v2217
      %v2222 = vand.u32 2147483647, %v2181
      %vm2223 = vcmp.eq.f32.partialorder %v2222, 8.507059e+37
      %v2224 = vand.u32 %v2181, 2147483648
      %v2225 = vor.u32 1.1754944e-38, %v2224
      %v2226 = vsel %vm2223, %v2225, %v2221
      %v2227 = vmul.f32 1.0, %v2226
      %v2228 = vrcp.pop %v2182
      %v2229 = vmul.f32 %v2182, %v2228
      %v2230 = vsub.f32 1.0, %v2229
      %v2231 = vmul.f32 %v2228, %v2230
      %v2232 = vadd.f32 %v2228, %v2231
      %vm2233 = vweird.f32 %v2182
      %vm2234 = vweird.f32 %v2228
      %vm2235 = vmor %vm2233, %vm2234
      %v2236 = vsel %vm2235, %v2228, %v2232
      %v2237 = vand.u32 2147483647, %v2182
      %vm2238 = vcmp.eq.f32.partialorder %v2237, 8.507059e+37
      %v2239 = vand.u32 %v2182, 2147483648
      %v2240 = vor.u32 1.1754944e-38, %v2239
      %v2241 = vsel %vm2238, %v2240, %v2236
      %v2242 = vmul.f32 1.0, %v2241
      %2244 = vset.pattern.permute.xlu0 0
      %2245 = vperm.xlu0 %2244, %v2197
      %v2246 = vpop.permute.xlu0 %2245
      %2249 = vset.pattern.permute.xlu0 0
      %2250 = vperm.xlu0 %2249, %v2212
      %v2251 = vpop.permute.xlu0 %2250
      %2254 = vset.pattern.permute.xlu0 0
      %2255 = vperm.xlu0 %2254, %v2227
      %v2256 = vpop.permute.xlu0 %2255
      %2259 = vset.pattern.permute.xlu0 0
      %2260 = vperm.xlu0 %2259, %v2242
      %v2261 = vpop.permute.xlu0 %2260
      %v2263 = vlaneseq
      %v2264 = vand.u32 %v2263, 127
      %v2265 = vld [vmem:[%s13] sm:$0xff]
      %v2266 = vld [vmem:[%s13 + $0x8] sm:$0xff]
      %v2267 = vld [vmem:[%s13 + $0x10] sm:$0xff]
      %v2268 = vld [vmem:[%s13 + $0x18] sm:$0xff]
      %v2269 = vld [vmem:[%s12] sm:$0xff]
      %v2270 = vld [vmem:[%s12 + $0x8] sm:$0xff]
      %v2271 = vld [vmem:[%s12 + $0x10] sm:$0xff]
      %v2272 = vld [vmem:[%s12 + $0x18] sm:$0xff]
      %v2274 = vsel %vm1923, %v2269, 0
      %v2277 = vsel %vm1923, %v2270, 0
      %v2280 = vsel %vm1923, %v2271, 0
      %v2283 = vsel %vm1923, %v2272, 0
      %2285 = vmatpush.msra.mxu0 0.0
      %2286 = vmatpush.msra.mxu0 0.0
      %2287 = vmatpush.msra.mxu0 0.0
      %2288 = vmatpush.msra.mxu0 0.0
      %2289 = vmatpush.msra.mxu0 0.0
      %2290 = vmatpush.msra.mxu0 0.0
      %2291 = vmatpush.msra.mxu0 0.0
      %2292 = vmatpush.msra.mxu0 0.0
      %2293 = vmatpush.msra.mxu0 0.0
      %2294 = vmatpush.msra.mxu0 0.0
      %2295 = vmatpush.msra.mxu0 0.0
      %2296 = vmatpush.msra.mxu0 0.0
      %2297 = vmatpush.msra.mxu0 %v2261
      %2298 = vmatpush.msra.mxu0 %v2256
      %2299 = vmatpush.msra.mxu0 %v2251
      %2300 = vmatpush.msra.mxu0 %v2246
      %2301 = vmatmul.f32.gmra.mxu0 %v2274
      %v2302 = vpop.f32.mrf.mxu0
      %v2303 = vadd.f32 0.0, %v2302
      %2304 = vmatmul.f32.gmra.mxu0 %v2277
      %v2305 = vpop.f32.mrf.mxu0
      %v2306 = vadd.f32 0.0, %v2305
      %2307 = vmatmul.f32.gmra.mxu0 %v2280
      %v2308 = vpop.f32.mrf.mxu0
      %v2309 = vadd.f32 0.0, %v2308
      %2310 = vmatmul.f32.gmra.mxu0 %v2283
      %v2311 = vpop.f32.mrf.mxu0
      %v2312 = vadd.f32 0.0, %v2311
      %2313 = vdwg.mxu0
      %vm2314 = vcmp.eq.s32.totalorder %v2264, 0
      %v2315 = vsel %vm2314, %v2303, 0.0
      %v2316 = vsel %vm2314, %v2306, 0.0
      %v2317 = vsel %vm2314, %v2309, 0.0
      %v2318 = vsel %vm2314, %v2312, 0.0
      %v2319 = vadd.f32 %v2265, %v2315
      %v2320 = vadd.f32 %v2266, %v2316
      %v2321 = vadd.f32 %v2267, %v2317
      %v2322 = vadd.f32 %v2268, %v2318
      %s2323 = scalar_lea.vmem %s12, 32
      %v2324 = vld [vmem:[%s2323] sm:$0xff]
      %v2325 = vld [vmem:[%s2323 + $0x8] sm:$0xff]
      %v2326 = vld [vmem:[%s2323 + $0x10] sm:$0xff]
      %v2327 = vld [vmem:[%s2323 + $0x18] sm:$0xff]
      %v2329 = vsel %vm1923, %v2324, 0
      %v2332 = vsel %vm1923, %v2325, 0
      %v2335 = vsel %vm1923, %v2326, 0
      %v2338 = vsel %vm1923, %v2327, 0
      %2340 = vmatpush.msra.mxu0 0.0
      %2341 = vmatpush.msra.mxu0 0.0
      %2342 = vmatpush.msra.mxu0 0.0
      %2343 = vmatpush.msra.mxu0 0.0
      %2344 = vmatpush.msra.mxu0 0.0
      %2345 = vmatpush.msra.mxu0 0.0
      %2346 = vmatpush.msra.mxu0 0.0
      %2347 = vmatpush.msra.mxu0 0.0
      %2348 = vmatpush.msra.mxu0 0.0
      %2349 = vmatpush.msra.mxu0 0.0
      %2350 = vmatpush.msra.mxu0 0.0
      %2351 = vmatpush.msra.mxu0 0.0
      %2352 = vmatpush.msra.mxu0 %v2261
      %2353 = vmatpush.msra.mxu0 %v2256
      %2354 = vmatpush.msra.mxu0 %v2251
      %2355 = vmatpush.msra.mxu0 %v2246
      %2356 = vmatmul.f32.gmra.mxu0 %v2329
      %v2357 = vpop.f32.mrf.mxu0
      %v2358 = vadd.f32 0.0, %v2357
      %2359 = vmatmul.f32.gmra.mxu0 %v2332
      %v2360 = vpop.f32.mrf.mxu0
      %v2361 = vadd.f32 0.0, %v2360
      %2362 = vmatmul.f32.gmra.mxu0 %v2335
      %v2363 = vpop.f32.mrf.mxu0
      %v2364 = vadd.f32 0.0, %v2363
      %2365 = vmatmul.f32.gmra.mxu0 %v2338
      %v2366 = vpop.f32.mrf.mxu0
      %v2367 = vadd.f32 0.0, %v2366
      %2368 = vdwg.mxu0
      %vm2369 = vcmp.eq.s32.totalorder %v2264, 1
      %v2370 = vsel %vm2369, %v2358, 0.0
      %v2371 = vsel %vm2369, %v2361, 0.0
      %v2372 = vsel %vm2369, %v2364, 0.0
      %v2373 = vsel %vm2369, %v2367, 0.0
      %v2374 = vadd.f32 %v2319, %v2370
      %v2375 = vadd.f32 %v2320, %v2371
      %v2376 = vadd.f32 %v2321, %v2372
      %v2377 = vadd.f32 %v2322, %v2373
      %s2378 = scalar_lea.vmem %s12, 64
      %v2379 = vld [vmem:[%s2378] sm:$0xff]
      %v2380 = vld [vmem:[%s2378 + $0x8] sm:$0xff]
      %v2381 = vld [vmem:[%s2378 + $0x10] sm:$0xff]
      %v2382 = vld [vmem:[%s2378 + $0x18] sm:$0xff]
      %v2384 = vsel %vm1923, %v2379, 0
      %v2387 = vsel %vm1923, %v2380, 0
      %v2390 = vsel %vm1923, %v2381, 0
      %v2393 = vsel %vm1923, %v2382, 0
      %2395 = vmatpush.msra.mxu0 0.0
      %2396 = vmatpush.msra.mxu0 0.0
      %2397 = vmatpush.msra.mxu0 0.0
      %2398 = vmatpush.msra.mxu0 0.0
      %2399 = vmatpush.msra.mxu0 0.0
      %2400 = vmatpush.msra.mxu0 0.0
      %2401 = vmatpush.msra.mxu0 0.0
      %2402 = vmatpush.msra.mxu0 0.0
      %2403 = vmatpush.msra.mxu0 0.0
      %2404 = vmatpush.msra.mxu0 0.0
      %2405 = vmatpush.msra.mxu0 0.0
      %2406 = vmatpush.msra.mxu0 0.0
      %2407 = vmatpush.msra.mxu0 %v2261
      %2408 = vmatpush.msra.mxu0 %v2256
      %2409 = vmatpush.msra.mxu0 %v2251
      %2410 = vmatpush.msra.mxu0 %v2246
      %2411 = vmatmul.f32.gmra.mxu0 %v2384
      %v2412 = vpop.f32.mrf.mxu0
      %v2413 = vadd.f32 0.0, %v2412
      %2414 = vmatmul.f32.gmra.mxu0 %v2387
      %v2415 = vpop.f32.mrf.mxu0
      %v2416 = vadd.f32 0.0, %v2415
      %2417 = vmatmul.f32.gmra.mxu0 %v2390
      %v2418 = vpop.f32.mrf.mxu0
      %v2419 = vadd.f32 0.0, %v2418
      %2420 = vmatmul.f32.gmra.mxu0 %v2393
      %v2421 = vpop.f32.mrf.mxu0
      %v2422 = vadd.f32 0.0, %v2421
      %2423 = vdwg.mxu0
      %vm2424 = vcmp.eq.s32.totalorder %v2264, 2
      %v2425 = vsel %vm2424, %v2413, 0.0
      %v2426 = vsel %vm2424, %v2416, 0.0
      %v2427 = vsel %vm2424, %v2419, 0.0
      %v2428 = vsel %vm2424, %v2422, 0.0
      %v2429 = vadd.f32 %v2374, %v2425
      %v2430 = vadd.f32 %v2375, %v2426
      %v2431 = vadd.f32 %v2376, %v2427
      %v2432 = vadd.f32 %v2377, %v2428
      %s2433 = scalar_lea.vmem %s12, 96
      %v2434 = vld [vmem:[%s2433] sm:$0xff]
      %v2435 = vld [vmem:[%s2433 + $0x8] sm:$0xff]
      %v2436 = vld [vmem:[%s2433 + $0x10] sm:$0xff]
      %v2437 = vld [vmem:[%s2433 + $0x18] sm:$0xff]
      %v2439 = vsel %vm1923, %v2434, 0
      %v2442 = vsel %vm1923, %v2435, 0
      %v2445 = vsel %vm1923, %v2436, 0
      %v2448 = vsel %vm1923, %v2437, 0
      %2450 = vmatpush.msra.mxu0 0.0
      %2451 = vmatpush.msra.mxu0 0.0
      %2452 = vmatpush.msra.mxu0 0.0
      %2453 = vmatpush.msra.mxu0 0.0
      %2454 = vmatpush.msra.mxu0 0.0
      %2455 = vmatpush.msra.mxu0 0.0
      %2456 = vmatpush.msra.mxu0 0.0
      %2457 = vmatpush.msra.mxu0 0.0
      %2458 = vmatpush.msra.mxu0 0.0
      %2459 = vmatpush.msra.mxu0 0.0
      %2460 = vmatpush.msra.mxu0 0.0
      %2461 = vmatpush.msra.mxu0 0.0
      %2462 = vmatpush.msra.mxu0 %v2261
      %2463 = vmatpush.msra.mxu0 %v2256
      %2464 = vmatpush.msra.mxu0 %v2251
      %2465 = vmatpush.msra.mxu0 %v2246
      %2466 = vmatmul.f32.gmra.mxu0 %v2439
      %v2467 = vpop.f32.mrf.mxu0
      %v2468 = vadd.f32 0.0, %v2467
      %2469 = vmatmul.f32.gmra.mxu0 %v2442
      %v2470 = vpop.f32.mrf.mxu0
      %v2471 = vadd.f32 0.0, %v2470
      %2472 = vmatmul.f32.gmra.mxu0 %v2445
      %v2473 = vpop.f32.mrf.mxu0
      %v2474 = vadd.f32 0.0, %v2473
      %2475 = vmatmul.f32.gmra.mxu0 %v2448
      %v2476 = vpop.f32.mrf.mxu0
      %v2477 = vadd.f32 0.0, %v2476
      %2478 = vdwg.mxu0
      %vm2479 = vcmp.eq.s32.totalorder %v2264, 3
      %v2480 = vsel %vm2479, %v2468, 0.0
      %v2481 = vsel %vm2479, %v2471, 0.0
      %v2482 = vsel %vm2479, %v2474, 0.0
      %v2483 = vsel %vm2479, %v2477, 0.0
      %v2484 = vadd.f32 %v2429, %v2480
      %v2485 = vadd.f32 %v2430, %v2481
      %v2486 = vadd.f32 %v2431, %v2482
      %v2487 = vadd.f32 %v2432, %v2483
      %v2488 = vxor.u32 %v2484, 2147483648
      %v2489 = vxor.u32 %v2485, 2147483648
      %v2490 = vxor.u32 %v2486, 2147483648
      %v2491 = vxor.u32 %v2487, 2147483648
      %v2492 = vmul.f32 %v2488, 1.442695
      %v2493 = vpow.pop %v2492
      %v2494 = vmul.f32 %v2489, 1.442695
      %v2495 = vpow.pop %v2494
      %v2496 = vmul.f32 %v2490, 1.442695
      %v2497 = vpow.pop %v2496
      %v2498 = vmul.f32 %v2491, 1.442695
      %v2499 = vpow.pop %v2498
      %v2500 = vadd.f32 %v2493, 1.0
      %v2501 = vadd.f32 %v2495, 1.0
      %v2502 = vadd.f32 %v2497, 1.0
      %v2503 = vadd.f32 %v2499, 1.0
      %v2504 = vrcp.pop %v2500
      %v2505 = vmul.f32 %v2500, %v2504
      %v2506 = vsub.f32 1.0, %v2505
      %v2507 = vmul.f32 %v2504, %v2506
      %v2508 = vadd.f32 %v2504, %v2507
      %vm2509 = vweird.f32 %v2500
      %vm2510 = vweird.f32 %v2504
      %vm2511 = vmor %vm2509, %vm2510
      %v2512 = vsel %vm2511, %v2504, %v2508
      %v2513 = vand.u32 2147483647, %v2500
      %vm2514 = vcmp.eq.f32.partialorder %v2513, 8.507059e+37
      %v2515 = vand.u32 %v2500, 2147483648
      %v2516 = vor.u32 1.1754944e-38, %v2515
      %v2517 = vsel %vm2514, %v2516, %v2512
      %v2518 = vmul.f32 1.0, %v2517
      %v2519 = vrcp.pop %v2501
      %v2520 = vmul.f32 %v2501, %v2519
      %v2521 = vsub.f32 1.0, %v2520
      %v2522 = vmul.f32 %v2519, %v2521
      %v2523 = vadd.f32 %v2519, %v2522
      %vm2524 = vweird.f32 %v2501
      %vm2525 = vweird.f32 %v2519
      %vm2526 = vmor %vm2524, %vm2525
      %v2527 = vsel %vm2526, %v2519, %v2523
      %v2528 = vand.u32 2147483647, %v2501
      %vm2529 = vcmp.eq.f32.partialorder %v2528, 8.507059e+37
      %v2530 = vand.u32 %v2501, 2147483648
      %v2531 = vor.u32 1.1754944e-38, %v2530
      %v2532 = vsel %vm2529, %v2531, %v2527
      %v2533 = vmul.f32 1.0, %v2532
      %v2534 = vrcp.pop %v2502
      %v2535 = vmul.f32 %v2502, %v2534
      %v2536 = vsub.f32 1.0, %v2535
      %v2537 = vmul.f32 %v2534, %v2536
      %v2538 = vadd.f32 %v2534, %v2537
      %vm2539 = vweird.f32 %v2502
      %vm2540 = vweird.f32 %v2534
      %vm2541 = vmor %vm2539, %vm2540
      %v2542 = vsel %vm2541, %v2534, %v2538
      %v2543 = vand.u32 2147483647, %v2502
      %vm2544 = vcmp.eq.f32.partialorder %v2543, 8.507059e+37
      %v2545 = vand.u32 %v2502, 2147483648
      %v2546 = vor.u32 1.1754944e-38, %v2545
      %v2547 = vsel %vm2544, %v2546, %v2542
      %v2548 = vmul.f32 1.0, %v2547
      %v2549 = vrcp.pop %v2503
      %v2550 = vmul.f32 %v2503, %v2549
      %v2551 = vsub.f32 1.0, %v2550
      %v2552 = vmul.f32 %v2549, %v2551
      %v2553 = vadd.f32 %v2549, %v2552
      %vm2554 = vweird.f32 %v2503
      %vm2555 = vweird.f32 %v2549
      %vm2556 = vmor %vm2554, %vm2555
      %v2557 = vsel %vm2556, %v2549, %v2553
      %v2558 = vand.u32 2147483647, %v2503
      %vm2559 = vcmp.eq.f32.partialorder %v2558, 8.507059e+37
      %v2560 = vand.u32 %v2503, 2147483648
      %v2561 = vor.u32 1.1754944e-38, %v2560
      %v2562 = vsel %vm2559, %v2561, %v2557
      %v2563 = vmul.f32 1.0, %v2562
      %v2564 = vld [vmem:[%s15] sm:$0x3]
      %v2565 = vunpack.c.l.bf16 %v2564
      %v2566 = vld [vmem:[%s14] sm:$0xff]
      %v2567 = vld [vmem:[%s14 + $0x8] sm:$0xff]
      %v2569 = vsel %vm1923, %v2566, 0
      %v2572 = vsel %vm1923, %v2567, 0
      %2574 = vmatpush.msra.mxu0 0.0
      %2575 = vmatpush.msra.mxu0 0.0
      %2576 = vmatpush.msra.mxu0 0.0
      %2577 = vmatpush.msra.mxu0 0.0
      %2578 = vmatpush.msra.mxu0 0.0
      %2579 = vmatpush.msra.mxu0 0.0
      %2580 = vmatpush.msra.mxu0 0.0
      %2581 = vmatpush.msra.mxu0 0.0
      %2582 = vmatpush.msra.mxu0 0.0
      %2583 = vmatpush.msra.mxu0 0.0
      %2584 = vmatpush.msra.mxu0 0.0
      %2585 = vmatpush.msra.mxu0 0.0
      %2586 = vmatpush.msra.mxu0 %v2563
      %2587 = vmatpush.msra.mxu0 %v2548
      %2588 = vmatpush.msra.mxu0 %v2533
      %2589 = vmatpush.msra.mxu0 %v2518
      %2590 = vmatmul.f32.gmra.mxu0 %v2569
      %v2591 = vpop.f32.mrf.mxu0
      %v2592 = vadd.f32 0.0, %v2591
      %2593 = vmatmul.f32.gmra.mxu0 %v2572
      %v2594 = vpop.f32.mrf.mxu0
      %v2595 = vadd.f32 0.0, %v2594
      %2596 = vdwg.mxu0
      %s2597 = scalar_lea.vmem %s15, 2
      %v2598 = vld [vmem:[%s2597] sm:$0x3]
      %v2599 = vunpack.c.l.bf16 %v2598
      %s2600 = scalar_lea.vmem %s14, 16
      %v2601 = vld [vmem:[%s2600] sm:$0xff]
      %v2602 = vld [vmem:[%s2600 + $0x8] sm:$0xff]
      %v2604 = vsel %vm1923, %v2601, 0
      %v2607 = vsel %vm1923, %v2602, 0
      %2609 = vmatpush.msra.mxu0 0.0
      %2610 = vmatpush.msra.mxu0 0.0
      %2611 = vmatpush.msra.mxu0 0.0
      %2612 = vmatpush.msra.mxu0 0.0
      %2613 = vmatpush.msra.mxu0 0.0
      %2614 = vmatpush.msra.mxu0 0.0
      %2615 = vmatpush.msra.mxu0 0.0
      %2616 = vmatpush.msra.mxu0 0.0
      %2617 = vmatpush.msra.mxu0 0.0
      %2618 = vmatpush.msra.mxu0 0.0
      %2619 = vmatpush.msra.mxu0 0.0
      %2620 = vmatpush.msra.mxu0 0.0
      %2621 = vmatpush.msra.mxu0 %v2563
      %2622 = vmatpush.msra.mxu0 %v2548
      %2623 = vmatpush.msra.mxu0 %v2533
      %2624 = vmatpush.msra.mxu0 %v2518
      %2625 = vmatmul.f32.gmra.mxu0 %v2604
      %v2626 = vpop.f32.mrf.mxu0
      %v2627 = vadd.f32 0.0, %v2626
      %2628 = vmatmul.f32.gmra.mxu0 %v2607
      %v2629 = vpop.f32.mrf.mxu0
      %v2630 = vadd.f32 0.0, %v2629
      %2631 = vdwg.mxu0
      %vm2632 = vcmask 31744
      %v2634 = vsel %vm2632, %v2627, 0
      %v2637 = vsel %vm2632, %v2630, 0
      %vm2639 = vcmask 1043456
      %v2641 = vsel %vm2639, %v2599, 0
      %2643 = vmatpush.msra.mxu0 0.0
      %2644 = vmatpush.msra.mxu0 0.0
      %2645 = vmatpush.msra.mxu0 0.0
      %2646 = vmatpush.msra.mxu0 0.0
      %2647 = vmatpush.msra.mxu0 0.0
      %2648 = vmatpush.msra.mxu0 0.0
      %2649 = vmatpush.msra.mxu0 0.0
      %2650 = vmatpush.msra.mxu0 0.0
      %2651 = vmatpush.msra.mxu0 0.0
      %2652 = vmatpush.msra.mxu0 0.0
      %2653 = vmatpush.msra.mxu0 0.0
      %2654 = vmatpush.msra.mxu0 0.0
      %2655 = vmatpush.msra.mxu0 0.0
      %2656 = vmatpush.msra.mxu0 0.0
      %2657 = vmatpush.msra.mxu0 0.0
      %2658 = vmatpush.msra.mxu0 %v2641
      %2659 = vmatmul.f32.gmra.mxu0 %v2634
      %v2660 = vpop.f32.mrf.mxu0
      %v2661 = vadd.f32 0.0, %v2660
      %2662 = vmatmul.f32.gmra.mxu0 %v2637
      %v2663 = vpop.f32.mrf.mxu0
      %v2664 = vadd.f32 0.0, %v2663
      %2665 = vdwg.mxu0
      %v2667 = vsel %vm2632, %v2592, 0
      %v2670 = vsel %vm2632, %v2595, 0
      %v2673 = vsel %vm2639, %v2565, 0
      %2675 = vmatpush.msra.mxu0 0.0
      %2676 = vmatpush.msra.mxu0 0.0
      %2677 = vmatpush.msra.mxu0 0.0
      %2678 = vmatpush.msra.mxu0 0.0
      %2679 = vmatpush.msra.mxu0 0.0
      %2680 = vmatpush.msra.mxu0 0.0
      %2681 = vmatpush.msra.mxu0 0.0
      %2682 = vmatpush.msra.mxu0 0.0
      %2683 = vmatpush.msra.mxu0 0.0
      %2684 = vmatpush.msra.mxu0 0.0
      %2685 = vmatpush.msra.mxu0 0.0
      %2686 = vmatpush.msra.mxu0 0.0
      %2687 = vmatpush.msra.mxu0 0.0
      %2688 = vmatpush.msra.mxu0 0.0
      %2689 = vmatpush.msra.mxu0 0.0
      %2690 = vmatpush.msra.mxu0 %v2673
      %2691 = vmatmul.f32.gmra.mxu0 %v2667
      %v2692 = vpop.f32.mrf.mxu0
      %v2693 = vadd.f32 %v2661, %v2692
      %2694 = vmatmul.f32.gmra.mxu0 %v2670
      %v2695 = vpop.f32.mrf.mxu0
      %v2696 = vadd.f32 %v2664, %v2695
      %2697 = vdwg.mxu0
      %s2698 = scalar_lea.vmem %s15, 4
      %v2699 = vld [vmem:[%s2698] sm:$0x3]
      %v2700 = vunpack.c.l.bf16 %v2699
      %s2701 = scalar_lea.vmem %s14, 32
      %v2702 = vld [vmem:[%s2701] sm:$0xff]
      %v2703 = vld [vmem:[%s2701 + $0x8] sm:$0xff]
      %v2705 = vsel %vm1923, %v2702, 0
      %v2708 = vsel %vm1923, %v2703, 0
      %2710 = vmatpush.msra.mxu0 0.0
      %2711 = vmatpush.msra.mxu0 0.0
      %2712 = vmatpush.msra.mxu0 0.0
      %2713 = vmatpush.msra.mxu0 0.0
      %2714 = vmatpush.msra.mxu0 0.0
      %2715 = vmatpush.msra.mxu0 0.0
      %2716 = vmatpush.msra.mxu0 0.0
      %2717 = vmatpush.msra.mxu0 0.0
      %2718 = vmatpush.msra.mxu0 0.0
      %2719 = vmatpush.msra.mxu0 0.0
      %2720 = vmatpush.msra.mxu0 0.0
      %2721 = vmatpush.msra.mxu0 0.0
      %2722 = vmatpush.msra.mxu0 %v2563
      %2723 = vmatpush.msra.mxu0 %v2548
      %2724 = vmatpush.msra.mxu0 %v2533
      %2725 = vmatpush.msra.mxu0 %v2518
      %2726 = vmatmul.f32.gmra.mxu0 %v2705
      %v2727 = vpop.f32.mrf.mxu0
      %v2728 = vadd.f32 0.0, %v2727
      %2729 = vmatmul.f32.gmra.mxu0 %v2708
      %v2730 = vpop.f32.mrf.mxu0
      %v2731 = vadd.f32 0.0, %v2730
      %2732 = vdwg.mxu0
      %v2734 = vsel %vm2632, %v2728, 0
      %v2737 = vsel %vm2632, %v2731, 0
      %v2740 = vsel %vm2639, %v2700, 0
      %2742 = vmatpush.msra.mxu0 0.0
      %2743 = vmatpush.msra.mxu0 0.0
      %2744 = vmatpush.msra.mxu0 0.0
      %2745 = vmatpush.msra.mxu0 0.0
      %2746 = vmatpush.msra.mxu0 0.0
      %2747 = vmatpush.msra.mxu0 0.0
      %2748 = vmatpush.msra.mxu0 0.0
      %2749 = vmatpush.msra.mxu0 0.0
      %2750 = vmatpush.msra.mxu0 0.0
      %2751 = vmatpush.msra.mxu0 0.0
      %2752 = vmatpush.msra.mxu0 0.0
      %2753 = vmatpush.msra.mxu0 0.0
      %2754 = vmatpush.msra.mxu0 0.0
      %2755 = vmatpush.msra.mxu0 0.0
      %2756 = vmatpush.msra.mxu0 0.0
      %2757 = vmatpush.msra.mxu0 %v2740
      %2758 = vmatmul.f32.gmra.mxu0 %v2734
      %v2759 = vpop.f32.mrf.mxu0
      %v2760 = vadd.f32 0.0, %v2759
      %2761 = vmatmul.f32.gmra.mxu0 %v2737
      %v2762 = vpop.f32.mrf.mxu0
      %v2763 = vadd.f32 0.0, %v2762
      %2764 = vdwg.mxu0
      %v2765 = vadd.f32 %v2693, %v2760
      %v2766 = vadd.f32 %v2696, %v2763
      %s2767 = scalar_lea.vmem %s15, 6
      %v2768 = vld [vmem:[%s2767] sm:$0x3]
      %v2769 = vunpack.c.l.bf16 %v2768
      %s2770 = scalar_lea.vmem %s14, 48
      %v2771 = vld [vmem:[%s2770] sm:$0xff]
      %v2772 = vld [vmem:[%s2770 + $0x8] sm:$0xff]
      %v2774 = vsel %vm1923, %v2771, 0
      %v2777 = vsel %vm1923, %v2772, 0
      %2779 = vmatpush.msra.mxu0 0.0
      %2780 = vmatpush.msra.mxu0 0.0
      %2781 = vmatpush.msra.mxu0 0.0
      %2782 = vmatpush.msra.mxu0 0.0
      %2783 = vmatpush.msra.mxu0 0.0
      %2784 = vmatpush.msra.mxu0 0.0
      %2785 = vmatpush.msra.mxu0 0.0
      %2786 = vmatpush.msra.mxu0 0.0
      %2787 = vmatpush.msra.mxu0 0.0
      %2788 = vmatpush.msra.mxu0 0.0
      %2789 = vmatpush.msra.mxu0 0.0
      %2790 = vmatpush.msra.mxu0 0.0
      %2791 = vmatpush.msra.mxu0 %v2563
      %2792 = vmatpush.msra.mxu0 %v2548
      %2793 = vmatpush.msra.mxu0 %v2533
      %2794 = vmatpush.msra.mxu0 %v2518
      %2795 = vmatmul.f32.gmra.mxu0 %v2774
      %v2796 = vpop.f32.mrf.mxu0
      %v2797 = vadd.f32 0.0, %v2796
      %2798 = vmatmul.f32.gmra.mxu0 %v2777
      %v2799 = vpop.f32.mrf.mxu0
      %v2800 = vadd.f32 0.0, %v2799
      %2801 = vdwg.mxu0
      %v2803 = vsel %vm2632, %v2797, 0
      %v2806 = vsel %vm2632, %v2800, 0
      %v2809 = vsel %vm2639, %v2769, 0
      %2811 = vmatpush.msra.mxu0 0.0
      %2812 = vmatpush.msra.mxu0 0.0
      %2813 = vmatpush.msra.mxu0 0.0
      %2814 = vmatpush.msra.mxu0 0.0
      %2815 = vmatpush.msra.mxu0 0.0
      %2816 = vmatpush.msra.mxu0 0.0
      %2817 = vmatpush.msra.mxu0 0.0
      %2818 = vmatpush.msra.mxu0 0.0
      %2819 = vmatpush.msra.mxu0 0.0
      %2820 = vmatpush.msra.mxu0 0.0
      %2821 = vmatpush.msra.mxu0 0.0
      %2822 = vmatpush.msra.mxu0 0.0
      %2823 = vmatpush.msra.mxu0 0.0
      %2824 = vmatpush.msra.mxu0 0.0
      %2825 = vmatpush.msra.mxu0 0.0
      %2826 = vmatpush.msra.mxu0 %v2809
      %2827 = vmatmul.f32.gmra.mxu0 %v2803
      %v2828 = vpop.f32.mrf.mxu0
      %v2829 = vadd.f32 0.0, %v2828
      %2830 = vmatmul.f32.gmra.mxu0 %v2806
      %v2831 = vpop.f32.mrf.mxu0
      %v2832 = vadd.f32 0.0, %v2831
      %2833 = vdwg.mxu0
      %v2834 = vadd.f32 %v2765, %v2829
      %v2835 = vadd.f32 %v2766, %v2832
      %v2836 = vld [vmem:[%s16] sm:$0xff]
      %v2837 = vld [vmem:[%s16 + $0x8] sm:$0xff]
      %2839 = vset.pattern.permute.xlu0 0
      %2840 = vperm.xlu0 %2839, %v2836
      %v2841 = vpop.permute.xlu0 %2840
      %2844 = vset.pattern.permute.xlu0 0
      %2845 = vperm.xlu0 %2844, %v2837
      %v2846 = vpop.permute.xlu0 %2845
      %v2848 = vadd.f32 %v2834, %v2841
      %v2849 = vadd.f32 %v2835, %v2846
      %v2850 = vmax.f32 %v2848, 0.0
      %v2851 = vmax.f32 %v2849, 0.0
      %v2852 = vld [vmem:[%s18] sm:$0xf]
      %v2853 = vld [vmem:[%s18 + $0x4] sm:$0xf]
      %v2854 = vunpack.c.l.bf16 %v2852
      %v2855 = vunpack.c.l.bf16 %v2853
      %v2856 = vld [vmem:[%s17] sm:$0xff]
      %v2858 = vsel %vm1578, %v2856, 0
      %2860 = vmatpush.msra.mxu0 0.0
      %2861 = vmatpush.msra.mxu0 0.0
      %2862 = vmatpush.msra.mxu0 0.0
      %2863 = vmatpush.msra.mxu0 0.0
      %2864 = vmatpush.msra.mxu0 0.0
      %2865 = vmatpush.msra.mxu0 0.0
      %2866 = vmatpush.msra.mxu0 0.0
      %2867 = vmatpush.msra.mxu0 0.0
      %2868 = vmatpush.msra.mxu0 0.0
      %2869 = vmatpush.msra.mxu0 0.0
      %2870 = vmatpush.msra.mxu0 0.0
      %2871 = vmatpush.msra.mxu0 0.0
      %2872 = vmatpush.msra.mxu0 0.0
      %2873 = vmatpush.msra.mxu0 0.0
      %2874 = vmatpush.msra.mxu0 %v2851
      %2875 = vmatpush.msra.mxu0 %v2850
      %2876 = vmatmul.f32.gmra.mxu0 %v2858
      %v2877 = vpop.f32.mrf.mxu0
      %v2878 = vadd.f32 0.0, %v2877
      %2879 = vdwg.mxu0
      %s2880 = scalar_lea.vmem %s18, 8
      %v2881 = vld [vmem:[%s2880] sm:$0xf]
      %v2882 = vld [vmem:[%s2880 + $0x4] sm:$0xf]
      %v2883 = vunpack.c.l.bf16 %v2881
      %v2884 = vunpack.c.l.bf16 %v2882
      %s2885 = scalar_lea.vmem %s17, 8
      %v2886 = vld [vmem:[%s2885] sm:$0xff]
      %v2888 = vsel %vm1578, %v2886, 0
      %2890 = vmatpush.msra.mxu0 0.0
      %2891 = vmatpush.msra.mxu0 0.0
      %2892 = vmatpush.msra.mxu0 0.0
      %2893 = vmatpush.msra.mxu0 0.0
      %2894 = vmatpush.msra.mxu0 0.0
      %2895 = vmatpush.msra.mxu0 0.0
      %2896 = vmatpush.msra.mxu0 0.0
      %2897 = vmatpush.msra.mxu0 0.0
      %2898 = vmatpush.msra.mxu0 0.0
      %2899 = vmatpush.msra.mxu0 0.0
      %2900 = vmatpush.msra.mxu0 0.0
      %2901 = vmatpush.msra.mxu0 0.0
      %2902 = vmatpush.msra.mxu0 0.0
      %2903 = vmatpush.msra.mxu0 0.0
      %2904 = vmatpush.msra.mxu0 %v2851
      %2905 = vmatpush.msra.mxu0 %v2850
      %2906 = vmatmul.f32.gmra.mxu0 %v2888
      %v2907 = vpop.f32.mrf.mxu0
      %v2908 = vadd.f32 0.0, %v2907
      %2909 = vdwg.mxu0
      %v2911 = vsel %vm1578, %v2908, 0
      %2913 = vmatpush.msra.mxu0 0.0
      %2914 = vmatpush.msra.mxu0 0.0
      %2915 = vmatpush.msra.mxu0 0.0
      %2916 = vmatpush.msra.mxu0 0.0
      %2917 = vmatpush.msra.mxu0 0.0
      %2918 = vmatpush.msra.mxu0 0.0
      %2919 = vmatpush.msra.mxu0 0.0
      %2920 = vmatpush.msra.mxu0 0.0
      %2921 = vmatpush.msra.mxu0 0.0
      %2922 = vmatpush.msra.mxu0 0.0
      %2923 = vmatpush.msra.mxu0 0.0
      %2924 = vmatpush.msra.mxu0 0.0
      %2925 = vmatpush.msra.mxu0 0.0
      %2926 = vmatpush.msra.mxu0 0.0
      %2927 = vmatpush.msra.mxu0 %v2884
      %2928 = vmatpush.msra.mxu0 %v2883
      %2929 = vmatmul.f32.gmra.mxu0 %v2911
      %v2930 = vpop.f32.mrf.mxu0
      %v2931 = vadd.f32 0.0, %v2930
      %2932 = vdwg.mxu0
      %v2934 = vsel %vm1578, %v2878, 0
      %2936 = vmatpush.msra.mxu0 0.0
      %2937 = vmatpush.msra.mxu0 0.0
      %2938 = vmatpush.msra.mxu0 0.0
      %2939 = vmatpush.msra.mxu0 0.0
      %2940 = vmatpush.msra.mxu0 0.0
      %2941 = vmatpush.msra.mxu0 0.0
      %2942 = vmatpush.msra.mxu0 0.0
      %2943 = vmatpush.msra.mxu0 0.0
      %2944 = vmatpush.msra.mxu0 0.0
      %2945 = vmatpush.msra.mxu0 0.0
      %2946 = vmatpush.msra.mxu0 0.0
      %2947 = vmatpush.msra.mxu0 0.0
      %2948 = vmatpush.msra.mxu0 0.0
      %2949 = vmatpush.msra.mxu0 0.0
      %2950 = vmatpush.msra.mxu0 %v2855
      %2951 = vmatpush.msra.mxu0 %v2854
      %2952 = vmatmul.f32.gmra.mxu0 %v2934
      %v2953 = vpop.f32.mrf.mxu0
      %v2954 = vadd.f32 %v2931, %v2953
      %2955 = vdwg.mxu0
      %s2956 = scalar_lea.vmem %s18, 16
      %v2957 = vld [vmem:[%s2956] sm:$0xf]
      %v2958 = vld [vmem:[%s2956 + $0x4] sm:$0xf]
      %v2959 = vunpack.c.l.bf16 %v2957
      %v2960 = vunpack.c.l.bf16 %v2958
      %s2961 = scalar_lea.vmem %s17, 16
      %v2962 = vld [vmem:[%s2961] sm:$0xff]
      %v2964 = vsel %vm1578, %v2962, 0
      %2966 = vmatpush.msra.mxu0 0.0
      %2967 = vmatpush.msra.mxu0 0.0
      %2968 = vmatpush.msra.mxu0 0.0
      %2969 = vmatpush.msra.mxu0 0.0
      %2970 = vmatpush.msra.mxu0 0.0
      %2971 = vmatpush.msra.mxu0 0.0
      %2972 = vmatpush.msra.mxu0 0.0
      %2973 = vmatpush.msra.mxu0 0.0
      %2974 = vmatpush.msra.mxu0 0.0
      %2975 = vmatpush.msra.mxu0 0.0
      %2976 = vmatpush.msra.mxu0 0.0
      %2977 = vmatpush.msra.mxu0 0.0
      %2978 = vmatpush.msra.mxu0 0.0
      %2979 = vmatpush.msra.mxu0 0.0
      %2980 = vmatpush.msra.mxu0 %v2851
      %2981 = vmatpush.msra.mxu0 %v2850
      %2982 = vmatmul.f32.gmra.mxu0 %v2964
      %v2983 = vpop.f32.mrf.mxu0
      %v2984 = vadd.f32 0.0, %v2983
      %2985 = vdwg.mxu0
      %v2987 = vsel %vm1578, %v2984, 0
      %2989 = vmatpush.msra.mxu0 0.0
      %2990 = vmatpush.msra.mxu0 0.0
      %2991 = vmatpush.msra.mxu0 0.0
      %2992 = vmatpush.msra.mxu0 0.0
      %2993 = vmatpush.msra.mxu0 0.0
      %2994 = vmatpush.msra.mxu0 0.0
      %2995 = vmatpush.msra.mxu0 0.0
      %2996 = vmatpush.msra.mxu0 0.0
      %2997 = vmatpush.msra.mxu0 0.0
      %2998 = vmatpush.msra.mxu0 0.0
      %2999 = vmatpush.msra.mxu0 0.0
      %3000 = vmatpush.msra.mxu0 0.0
      %3001 = vmatpush.msra.mxu0 0.0
      %3002 = vmatpush.msra.mxu0 0.0
      %3003 = vmatpush.msra.mxu0 %v2960
      %3004 = vmatpush.msra.mxu0 %v2959
      %3005 = vmatmul.f32.gmra.mxu0 %v2987
      %v3006 = vpop.f32.mrf.mxu0
      %v3007 = vadd.f32 0.0, %v3006
      %3008 = vdwg.mxu0
      %v3009 = vadd.f32 %v2954, %v3007
      %s3010 = scalar_lea.vmem %s18, 24
      %v3011 = vld [vmem:[%s3010] sm:$0xf]
      %v3012 = vld [vmem:[%s3010 + $0x4] sm:$0xf]
      %v3013 = vunpack.c.l.bf16 %v3011
      %v3014 = vunpack.c.l.bf16 %v3012
      %s3015 = scalar_lea.vmem %s17, 24
      %v3016 = vld [vmem:[%s3015] sm:$0xff]
      %v3018 = vsel %vm1578, %v3016, 0
      %3020 = vmatpush.msra.mxu0 0.0
      %3021 = vmatpush.msra.mxu0 0.0
      %3022 = vmatpush.msra.mxu0 0.0
      %3023 = vmatpush.msra.mxu0 0.0
      %3024 = vmatpush.msra.mxu0 0.0
      %3025 = vmatpush.msra.mxu0 0.0
      %3026 = vmatpush.msra.mxu0 0.0
      %3027 = vmatpush.msra.mxu0 0.0
      %3028 = vmatpush.msra.mxu0 0.0
      %3029 = vmatpush.msra.mxu0 0.0
      %3030 = vmatpush.msra.mxu0 0.0
      %3031 = vmatpush.msra.mxu0 0.0
      %3032 = vmatpush.msra.mxu0 0.0
      %3033 = vmatpush.msra.mxu0 0.0
      %3034 = vmatpush.msra.mxu0 %v2851
      %3035 = vmatpush.msra.mxu0 %v2850
      %3036 = vmatmul.f32.gmra.mxu0 %v3018
      %v3037 = vpop.f32.mrf.mxu0
      %v3038 = vadd.f32 0.0, %v3037
      %3039 = vdwg.mxu0
      %v3041 = vsel %vm1578, %v3038, 0
      %3043 = vmatpush.msra.mxu0 0.0
      %3044 = vmatpush.msra.mxu0 0.0
      %3045 = vmatpush.msra.mxu0 0.0
      %3046 = vmatpush.msra.mxu0 0.0
      %3047 = vmatpush.msra.mxu0 0.0
      %3048 = vmatpush.msra.mxu0 0.0
      %3049 = vmatpush.msra.mxu0 0.0
      %3050 = vmatpush.msra.mxu0 0.0
      %3051 = vmatpush.msra.mxu0 0.0
      %3052 = vmatpush.msra.mxu0 0.0
      %3053 = vmatpush.msra.mxu0 0.0
      %3054 = vmatpush.msra.mxu0 0.0
      %3055 = vmatpush.msra.mxu0 0.0
      %3056 = vmatpush.msra.mxu0 0.0
      %3057 = vmatpush.msra.mxu0 %v3014
      %3058 = vmatpush.msra.mxu0 %v3013
      %3059 = vmatmul.f32.gmra.mxu0 %v3041
      %v3060 = vpop.f32.mrf.mxu0
      %v3061 = vadd.f32 0.0, %v3060
      %3062 = vdwg.mxu0
      %v3063 = vadd.f32 %v3009, %v3061
      %v3064 = vld [vmem:[%s19] sm:$0xff]
      %3066 = vset.pattern.permute.xlu0 0
      %3067 = vperm.xlu0 %3066, %v3064
      %v3068 = vpop.permute.xlu0 %3067
      %v3070 = vadd.f32 %v3063, %v3068
      %v3071 = vmax.f32 %v3070, 0.0
      %v3072 = vld [vmem:[%s21] sm:$0xff]
      %v3073 = vld [vmem:[%s21 + $0x8] sm:$0xff]
      %v3074 = vld [vmem:[%s21 + $0x10] sm:$0xff]
      %v3075 = vld [vmem:[%s21 + $0x18] sm:$0xff]
      %v3076 = vld [vmem:[%s21 + $0x20] sm:$0xff]
      %v3077 = vld [vmem:[%s21 + $0x28] sm:$0xff]
      %v3078 = vld [vmem:[%s21 + $0x30] sm:$0xff]
      %v3079 = vld [vmem:[%s21 + $0x38] sm:$0xff]
      %v3080 = vunpack.c.l.bf16 %v3072
      %v3081 = vunpack.c.h.bf16 %v3072
      %v3082 = vunpack.c.l.bf16 %v3073
      %v3083 = vunpack.c.h.bf16 %v3073
      %v3084 = vunpack.c.l.bf16 %v3074
      %v3085 = vunpack.c.h.bf16 %v3074
      %v3086 = vunpack.c.l.bf16 %v3075
      %v3087 = vunpack.c.h.bf16 %v3075
      %v3088 = vunpack.c.l.bf16 %v3076
      %v3089 = vunpack.c.h.bf16 %v3076
      %v3090 = vunpack.c.l.bf16 %v3077
      %v3091 = vunpack.c.h.bf16 %v3077
      %v3092 = vunpack.c.l.bf16 %v3078
      %v3093 = vunpack.c.h.bf16 %v3078
      %v3094 = vunpack.c.l.bf16 %v3079
      %v3095 = vunpack.c.h.bf16 %v3079
      %v3096 = vld [vmem:[%s20] sm:$0x7]
      %v3098 = vsel %vm1357, %v3096, 0
      %3100 = vmatpush.msra.mxu0 0.0
      %3101 = vmatpush.msra.mxu0 0.0
      %3102 = vmatpush.msra.mxu0 0.0
      %3103 = vmatpush.msra.mxu0 0.0
      %3104 = vmatpush.msra.mxu0 0.0
      %3105 = vmatpush.msra.mxu0 0.0
      %3106 = vmatpush.msra.mxu0 0.0
      %3107 = vmatpush.msra.mxu0 0.0
      %3108 = vmatpush.msra.mxu0 0.0
      %3109 = vmatpush.msra.mxu0 0.0
      %3110 = vmatpush.msra.mxu0 0.0
      %3111 = vmatpush.msra.mxu0 0.0
      %3112 = vmatpush.msra.mxu0 0.0
      %3113 = vmatpush.msra.mxu0 0.0
      %3114 = vmatpush.msra.mxu0 0.0
      %3115 = vmatpush.msra.mxu0 %v3071
      %3116 = vmatmul.f32.gmra.mxu0 %v3098
      %v3117 = vpop.f32.mrf.mxu0
      %v3118 = vadd.f32 0.0, %v3117
      %3119 = vdwg.mxu0
      %s3120 = scalar_lea.vmem %s21, 64
      %v3121 = vld [vmem:[%s3120] sm:$0xff]
      %v3122 = vld [vmem:[%s3120 + $0x8] sm:$0xff]
      %v3123 = vld [vmem:[%s3120 + $0x10] sm:$0xff]
      %v3124 = vld [vmem:[%s3120 + $0x18] sm:$0xff]
      %v3125 = vld [vmem:[%s3120 + $0x20] sm:$0xff]
      %v3126 = vld [vmem:[%s3120 + $0x28] sm:$0xff]
      %v3127 = vld [vmem:[%s3120 + $0x30] sm:$0xff]
      %v3128 = vld [vmem:[%s3120 + $0x38] sm:$0xff]
      %v3129 = vunpack.c.l.bf16 %v3121
      %v3130 = vunpack.c.h.bf16 %v3121
      %v3131 = vunpack.c.l.bf16 %v3122
      %v3132 = vunpack.c.h.bf16 %v3122
      %v3133 = vunpack.c.l.bf16 %v3123
      %v3134 = vunpack.c.h.bf16 %v3123
      %v3135 = vunpack.c.l.bf16 %v3124
      %v3136 = vunpack.c.h.bf16 %v3124
      %v3137 = vunpack.c.l.bf16 %v3125
      %v3138 = vunpack.c.h.bf16 %v3125
      %v3139 = vunpack.c.l.bf16 %v3126
      %v3140 = vunpack.c.h.bf16 %v3126
      %v3141 = vunpack.c.l.bf16 %v3127
      %v3142 = vunpack.c.h.bf16 %v3127
      %v3143 = vunpack.c.l.bf16 %v3128
      %v3144 = vunpack.c.h.bf16 %v3128
      %s3145 = scalar_lea.vmem %s20, 4
      %v3146 = vld [vmem:[%s3145] sm:$0x7]
      %v3148 = vsel %vm1357, %v3146, 0
      %3150 = vmatpush.msra.mxu0 0.0
      %3151 = vmatpush.msra.mxu0 0.0
      %3152 = vmatpush.msra.mxu0 0.0
      %3153 = vmatpush.msra.mxu0 0.0
      %3154 = vmatpush.msra.mxu0 0.0
      %3155 = vmatpush.msra.mxu0 0.0
      %3156 = vmatpush.msra.mxu0 0.0
      %3157 = vmatpush.msra.mxu0 0.0
      %3158 = vmatpush.msra.mxu0 0.0
      %3159 = vmatpush.msra.mxu0 0.0
      %3160 = vmatpush.msra.mxu0 0.0
      %3161 = vmatpush.msra.mxu0 0.0
      %3162 = vmatpush.msra.mxu0 0.0
      %3163 = vmatpush.msra.mxu0 0.0
      %3164 = vmatpush.msra.mxu0 0.0
      %3165 = vmatpush.msra.mxu0 %v3071
      %3166 = vmatmul.f32.gmra.mxu0 %v3148
      %v3167 = vpop.f32.mrf.mxu0
      %v3168 = vadd.f32 0.0, %v3167
      %3169 = vdwg.mxu0
      %v3171 = vsel %vm1291, %v3168, 0
      %3173 = vmatpush.msra.mxu0 0.0
      %3174 = vmatpush.msra.mxu0 0.0
      %3175 = vmatpush.msra.mxu0 0.0
      %3176 = vmatpush.msra.mxu0 0.0
      %3177 = vmatpush.msra.mxu0 0.0
      %3178 = vmatpush.msra.mxu0 0.0
      %3179 = vmatpush.msra.mxu0 0.0
      %3180 = vmatpush.msra.mxu0 0.0
      %3181 = vmatpush.msra.mxu0 %v3143
      %3182 = vmatpush.msra.mxu0 %v3141
      %3183 = vmatpush.msra.mxu0 %v3139
      %3184 = vmatpush.msra.mxu0 %v3137
      %3185 = vmatpush.msra.mxu0 %v3135
      %3186 = vmatpush.msra.mxu0 %v3133
      %3187 = vmatpush.msra.mxu0 %v3131
      %3188 = vmatpush.msra.mxu0 %v3129
      %3189 = vmatmul.f32.gmra.mxu0 %v3171
      %v3190 = vpop.f32.mrf.mxu0
      %v3191 = vadd.f32 0.0, %v3190
      %3192 = vdwg.mxu0
      %3193 = vmatpush.msra.mxu0 0.0
      %3194 = vmatpush.msra.mxu0 0.0
      %3195 = vmatpush.msra.mxu0 0.0
      %3196 = vmatpush.msra.mxu0 0.0
      %3197 = vmatpush.msra.mxu0 0.0
      %3198 = vmatpush.msra.mxu0 0.0
      %3199 = vmatpush.msra.mxu0 0.0
      %3200 = vmatpush.msra.mxu0 0.0
      %3201 = vmatpush.msra.mxu0 %v3144
      %3202 = vmatpush.msra.mxu0 %v3142
      %3203 = vmatpush.msra.mxu0 %v3140
      %3204 = vmatpush.msra.mxu0 %v3138
      %3205 = vmatpush.msra.mxu0 %v3136
      %3206 = vmatpush.msra.mxu0 %v3134
      %3207 = vmatpush.msra.mxu0 %v3132
      %3208 = vmatpush.msra.mxu0 %v3130
      %3209 = vmatmul.f32.gmra.mxu0 %v3171
      %v3210 = vpop.f32.mrf.mxu0
      %v3211 = vadd.f32 0.0, %v3210
      %3212 = vdwg.mxu0
      %v3214 = vsel %vm1291, %v3118, 0
      %3216 = vmatpush.msra.mxu0 0.0
      %3217 = vmatpush.msra.mxu0 0.0
      %3218 = vmatpush.msra.mxu0 0.0
      %3219 = vmatpush.msra.mxu0 0.0
      %3220 = vmatpush.msra.mxu0 0.0
      %3221 = vmatpush.msra.mxu0 0.0
      %3222 = vmatpush.msra.mxu0 0.0
      %3223 = vmatpush.msra.mxu0 0.0
      %3224 = vmatpush.msra.mxu0 %v3094
      %3225 = vmatpush.msra.mxu0 %v3092
      %3226 = vmatpush.msra.mxu0 %v3090
      %3227 = vmatpush.msra.mxu0 %v3088
      %3228 = vmatpush.msra.mxu0 %v3086
      %3229 = vmatpush.msra.mxu0 %v3084
      %3230 = vmatpush.msra.mxu0 %v3082
      %3231 = vmatpush.msra.mxu0 %v3080
      %3232 = vmatmul.f32.gmra.mxu0 %v3214
      %v3233 = vpop.f32.mrf.mxu0
      %v3234 = vadd.f32 %v3191, %v3233
      %3235 = vdwg.mxu0
      %3236 = vmatpush.msra.mxu0 0.0
      %3237 = vmatpush.msra.mxu0 0.0
      %3238 = vmatpush.msra.mxu0 0.0
      %3239 = vmatpush.msra.mxu0 0.0
      %3240 = vmatpush.msra.mxu0 0.0
      %3241 = vmatpush.msra.mxu0 0.0
      %3242 = vmatpush.msra.mxu0 0.0
      %3243 = vmatpush.msra.mxu0 0.0
      %3244 = vmatpush.msra.mxu0 %v3095
      %3245 = vmatpush.msra.mxu0 %v3093
      %3246 = vmatpush.msra.mxu0 %v3091
      %3247 = vmatpush.msra.mxu0 %v3089
      %3248 = vmatpush.msra.mxu0 %v3087
      %3249 = vmatpush.msra.mxu0 %v3085
      %3250 = vmatpush.msra.mxu0 %v3083
      %3251 = vmatpush.msra.mxu0 %v3081
      %3252 = vmatmul.f32.gmra.mxu0 %v3214
      %v3253 = vpop.f32.mrf.mxu0
      %v3254 = vadd.f32 %v3211, %v3253
      %3255 = vdwg.mxu0
      %s3256 = scalar_lea.vmem %s21, 128
      %v3257 = vld [vmem:[%s3256] sm:$0xff]
      %v3258 = vld [vmem:[%s3256 + $0x8] sm:$0xff]
      %v3259 = vld [vmem:[%s3256 + $0x10] sm:$0xff]
      %v3260 = vld [vmem:[%s3256 + $0x18] sm:$0xff]
      %v3261 = vld [vmem:[%s3256 + $0x20] sm:$0xff]
      %v3262 = vld [vmem:[%s3256 + $0x28] sm:$0xff]
      %v3263 = vld [vmem:[%s3256 + $0x30] sm:$0xff]
      %v3264 = vld [vmem:[%s3256 + $0x38] sm:$0xff]
      %v3265 = vunpack.c.l.bf16 %v3257
      %v3266 = vunpack.c.h.bf16 %v3257
      %v3267 = vunpack.c.l.bf16 %v3258
      %v3268 = vunpack.c.h.bf16 %v3258
      %v3269 = vunpack.c.l.bf16 %v3259
      %v3270 = vunpack.c.h.bf16 %v3259
      %v3271 = vunpack.c.l.bf16 %v3260
      %v3272 = vunpack.c.h.bf16 %v3260
      %v3273 = vunpack.c.l.bf16 %v3261
      %v3274 = vunpack.c.h.bf16 %v3261
      %v3275 = vunpack.c.l.bf16 %v3262
      %v3276 = vunpack.c.h.bf16 %v3262
      %v3277 = vunpack.c.l.bf16 %v3263
      %v3278 = vunpack.c.h.bf16 %v3263
      %v3279 = vunpack.c.l.bf16 %v3264
      %v3280 = vunpack.c.h.bf16 %v3264
      %s3281 = scalar_lea.vmem %s20, 8
      %v3282 = vld [vmem:[%s3281] sm:$0x7]
      %v3284 = vsel %vm1357, %v3282, 0
      %3286 = vmatpush.msra.mxu0 0.0
      %3287 = vmatpush.msra.mxu0 0.0
      %3288 = vmatpush.msra.mxu0 0.0
      %3289 = vmatpush.msra.mxu0 0.0
      %3290 = vmatpush.msra.mxu0 0.0
      %3291 = vmatpush.msra.mxu0 0.0
      %3292 = vmatpush.msra.mxu0 0.0
      %3293 = vmatpush.msra.mxu0 0.0
      %3294 = vmatpush.msra.mxu0 0.0
      %3295 = vmatpush.msra.mxu0 0.0
      %3296 = vmatpush.msra.mxu0 0.0
      %3297 = vmatpush.msra.mxu0 0.0
      %3298 = vmatpush.msra.mxu0 0.0
      %3299 = vmatpush.msra.mxu0 0.0
      %3300 = vmatpush.msra.mxu0 0.0
      %3301 = vmatpush.msra.mxu0 %v3071
      %3302 = vmatmul.f32.gmra.mxu0 %v3284
      %v3303 = vpop.f32.mrf.mxu0
      %v3304 = vadd.f32 0.0, %v3303
      %3305 = vdwg.mxu0
      %v3307 = vsel %vm1291, %v3304, 0
      %3309 = vmatpush.msra.mxu0 0.0
      %3310 = vmatpush.msra.mxu0 0.0
      %3311 = vmatpush.msra.mxu0 0.0
      %3312 = vmatpush.msra.mxu0 0.0
      %3313 = vmatpush.msra.mxu0 0.0
      %3314 = vmatpush.msra.mxu0 0.0
      %3315 = vmatpush.msra.mxu0 0.0
      %3316 = vmatpush.msra.mxu0 0.0
      %3317 = vmatpush.msra.mxu0 %v3279
      %3318 = vmatpush.msra.mxu0 %v3277
      %3319 = vmatpush.msra.mxu0 %v3275
      %3320 = vmatpush.msra.mxu0 %v3273
      %3321 = vmatpush.msra.mxu0 %v3271
      %3322 = vmatpush.msra.mxu0 %v3269
      %3323 = vmatpush.msra.mxu0 %v3267
      %3324 = vmatpush.msra.mxu0 %v3265
      %3325 = vmatmul.f32.gmra.mxu0 %v3307
      %v3326 = vpop.f32.mrf.mxu0
      %v3327 = vadd.f32 0.0, %v3326
      %3328 = vdwg.mxu0
      %3329 = vmatpush.msra.mxu0 0.0
      %3330 = vmatpush.msra.mxu0 0.0
      %3331 = vmatpush.msra.mxu0 0.0
      %3332 = vmatpush.msra.mxu0 0.0
      %3333 = vmatpush.msra.mxu0 0.0
      %3334 = vmatpush.msra.mxu0 0.0
      %3335 = vmatpush.msra.mxu0 0.0
      %3336 = vmatpush.msra.mxu0 0.0
      %3337 = vmatpush.msra.mxu0 %v3280
      %3338 = vmatpush.msra.mxu0 %v3278
      %3339 = vmatpush.msra.mxu0 %v3276
      %3340 = vmatpush.msra.mxu0 %v3274
      %3341 = vmatpush.msra.mxu0 %v3272
      %3342 = vmatpush.msra.mxu0 %v3270
      %3343 = vmatpush.msra.mxu0 %v3268
      %3344 = vmatpush.msra.mxu0 %v3266
      %3345 = vmatmul.f32.gmra.mxu0 %v3307
      %v3346 = vpop.f32.mrf.mxu0
      %v3347 = vadd.f32 0.0, %v3346
      %3348 = vdwg.mxu0
      %v3349 = vadd.f32 %v3234, %v3327
      %v3350 = vadd.f32 %v3254, %v3347
      %s3351 = scalar_lea.vmem %s21, 192
      %v3352 = vld [vmem:[%s3351] sm:$0xff]
      %v3353 = vld [vmem:[%s3351 + $0x8] sm:$0xff]
      %v3354 = vld [vmem:[%s3351 + $0x10] sm:$0xff]
      %v3355 = vld [vmem:[%s3351 + $0x18] sm:$0xff]
      %v3356 = vld [vmem:[%s3351 + $0x20] sm:$0xff]
      %v3357 = vld [vmem:[%s3351 + $0x28] sm:$0xff]
      %v3358 = vld [vmem:[%s3351 + $0x30] sm:$0xff]
      %v3359 = vld [vmem:[%s3351 + $0x38] sm:$0xff]
      %v3360 = vunpack.c.l.bf16 %v3352
      %v3361 = vunpack.c.h.bf16 %v3352
      %v3362 = vunpack.c.l.bf16 %v3353
      %v3363 = vunpack.c.h.bf16 %v3353
      %v3364 = vunpack.c.l.bf16 %v3354
      %v3365 = vunpack.c.h.bf16 %v3354
      %v3366 = vunpack.c.l.bf16 %v3355
      %v3367 = vunpack.c.h.bf16 %v3355
      %v3368 = vunpack.c.l.bf16 %v3356
      %v3369 = vunpack.c.h.bf16 %v3356
      %v3370 = vunpack.c.l.bf16 %v3357
      %v3371 = vunpack.c.h.bf16 %v3357
      %v3372 = vunpack.c.l.bf16 %v3358
      %v3373 = vunpack.c.h.bf16 %v3358
      %v3374 = vunpack.c.l.bf16 %v3359
      %v3375 = vunpack.c.h.bf16 %v3359
      %s3376 = scalar_lea.vmem %s20, 12
      %v3377 = vld [vmem:[%s3376] sm:$0x7]
      %v3379 = vsel %vm1357, %v3377, 0
      %3381 = vmatpush.msra.mxu0 0.0
      %3382 = vmatpush.msra.mxu0 0.0
      %3383 = vmatpush.msra.mxu0 0.0
      %3384 = vmatpush.msra.mxu0 0.0
      %3385 = vmatpush.msra.mxu0 0.0
      %3386 = vmatpush.msra.mxu0 0.0
      %3387 = vmatpush.msra.mxu0 0.0
      %3388 = vmatpush.msra.mxu0 0.0
      %3389 = vmatpush.msra.mxu0 0.0
      %3390 = vmatpush.msra.mxu0 0.0
      %3391 = vmatpush.msra.mxu0 0.0
      %3392 = vmatpush.msra.mxu0 0.0
      %3393 = vmatpush.msra.mxu0 0.0
      %3394 = vmatpush.msra.mxu0 0.0
      %3395 = vmatpush.msra.mxu0 0.0
      %3396 = vmatpush.msra.mxu0 %v3071
      %3397 = vmatmul.f32.gmra.mxu0 %v3379
      %v3398 = vpop.f32.mrf.mxu0
      %v3399 = vadd.f32 0.0, %v3398
      %3400 = vdwg.mxu0
      %v3402 = vsel %vm1291, %v3399, 0
      %3404 = vmatpush.msra.mxu0 0.0
      %3405 = vmatpush.msra.mxu0 0.0
      %3406 = vmatpush.msra.mxu0 0.0
      %3407 = vmatpush.msra.mxu0 0.0
      %3408 = vmatpush.msra.mxu0 0.0
      %3409 = vmatpush.msra.mxu0 0.0
      %3410 = vmatpush.msra.mxu0 0.0
      %3411 = vmatpush.msra.mxu0 0.0
      %3412 = vmatpush.msra.mxu0 %v3374
      %3413 = vmatpush.msra.mxu0 %v3372
      %3414 = vmatpush.msra.mxu0 %v3370
      %3415 = vmatpush.msra.mxu0 %v3368
      %3416 = vmatpush.msra.mxu0 %v3366
      %3417 = vmatpush.msra.mxu0 %v3364
      %3418 = vmatpush.msra.mxu0 %v3362
      %3419 = vmatpush.msra.mxu0 %v3360
      %3420 = vmatmul.f32.gmra.mxu0 %v3402
      %v3421 = vpop.f32.mrf.mxu0
      %v3422 = vadd.f32 0.0, %v3421
      %3423 = vdwg.mxu0
      %3424 = vmatpush.msra.mxu0 0.0
      %3425 = vmatpush.msra.mxu0 0.0
      %3426 = vmatpush.msra.mxu0 0.0
      %3427 = vmatpush.msra.mxu0 0.0
      %3428 = vmatpush.msra.mxu0 0.0
      %3429 = vmatpush.msra.mxu0 0.0
      %3430 = vmatpush.msra.mxu0 0.0
      %3431 = vmatpush.msra.mxu0 0.0
      %3432 = vmatpush.msra.mxu0 %v3375
      %3433 = vmatpush.msra.mxu0 %v3373
      %3434 = vmatpush.msra.mxu0 %v3371
      %3435 = vmatpush.msra.mxu0 %v3369
      %3436 = vmatpush.msra.mxu0 %v3367
      %3437 = vmatpush.msra.mxu0 %v3365
      %3438 = vmatpush.msra.mxu0 %v3363
      %3439 = vmatpush.msra.mxu0 %v3361
      %3440 = vmatmul.f32.gmra.mxu0 %v3402
      %v3441 = vpop.f32.mrf.mxu0
      %v3442 = vadd.f32 0.0, %v3441
      %3443 = vdwg.mxu0
      %v3444 = vadd.f32 %v3349, %v3422
      %v3445 = vadd.f32 %v3350, %v3442
      %v3446 = vld [vmem:[%s22] sm:$0x7]
      %3448 = vset.pattern.permute.xlu0 0
      %3449 = vperm.xlu0 %3448, %v3446
      %v3450 = vpop.permute.xlu0 %3449
      %v3452 = vadd.f32 %v3444, %v3450
      %v3453 = vadd.f32 %v3445, %v3450
      %v3454 = vxor.u32 %v3452, 2147483648
      %v3455 = vxor.u32 %v3453, 2147483648
      %v3456 = vmul.f32 %v3454, 1.442695
      %v3457 = vpow.pop %v3456
      %v3458 = vmul.f32 %v3455, 1.442695
      %v3459 = vpow.pop %v3458
      %v3460 = vadd.f32 %v3457, 1.0
      %v3461 = vadd.f32 %v3459, 1.0
      %v3462 = vrcp.pop %v3460
      %v3463 = vmul.f32 %v3460, %v3462
      %v3464 = vsub.f32 1.0, %v3463
      %v3465 = vmul.f32 %v3462, %v3464
      %v3466 = vadd.f32 %v3462, %v3465
      %vm3467 = vweird.f32 %v3460
      %vm3468 = vweird.f32 %v3462
      %vm3469 = vmor %vm3467, %vm3468
      %v3470 = vsel %vm3469, %v3462, %v3466
      %v3471 = vand.u32 2147483647, %v3460
      %vm3472 = vcmp.eq.f32.partialorder %v3471, 8.507059e+37
      %v3473 = vand.u32 %v3460, 2147483648
      %v3474 = vor.u32 1.1754944e-38, %v3473
      %v3475 = vsel %vm3472, %v3474, %v3470
      %v3476 = vmul.f32 1.0, %v3475
      %v3477 = vrcp.pop %v3461
      %v3478 = vmul.f32 %v3461, %v3477
      %v3479 = vsub.f32 1.0, %v3478
      %v3480 = vmul.f32 %v3477, %v3479
      %v3481 = vadd.f32 %v3477, %v3480
      %vm3482 = vweird.f32 %v3461
      %vm3483 = vweird.f32 %v3477
      %vm3484 = vmor %vm3482, %vm3483
      %v3485 = vsel %vm3484, %v3477, %v3481
      %v3486 = vand.u32 2147483647, %v3461
      %vm3487 = vcmp.eq.f32.partialorder %v3486, 8.507059e+37
      %v3488 = vand.u32 %v3461, 2147483648
      %v3489 = vor.u32 1.1754944e-38, %v3488
      %v3490 = vsel %vm3487, %v3489, %v3485
      %v3491 = vmul.f32 1.0, %v3490
      %v3494 = vrot.slane %v3491, 4
      %v3495 = vsel %vm2639, %v3476, %v3494
      %3497 = vst [vmem:[%s710] sm:$0x77] %v3495
      %p3498 = scmp.lt.s32.totalorder %s34, 1
      %s3499 = scalar_select %p3498, %s34, 1
      %s3500 = smul.addr %s3499, 2
      %s3501 = smul.addr %s3500, 4
      %s3502 = scalar_lea.vmem %s23, %s3501
      // Predicated region
      $region113: #{ae_forward.1} parent=111 // pred_check
        %p3503 = pneg %p540
      $region114: #{ae_forward.1} parent=111 // pred_check_branch
        %3505 = sbr.rel (%p3503) target = $region116
      $region115: #{ae_forward.1} parent=111 // pred_region
        _
      $region116: #{ae_forward.1} parent=111 // pred_fallthru
        _
    $region112: #{ae_forward.1} parent=5 // pred_fallthru
      _
    %p3506 = scmp.le.s32.totalorder 2, %s29
    // Predicated region
    $region117: #{ae_forward.1} parent=5 // pred_check
      %p3507 = pneg %p3506
    $region118: #{ae_forward.1} parent=5 // pred_check_branch
      %3509 = sbr.rel (%p3507) target = $region120
    $region119: #{ae_forward.1} parent=5 // pred_region
      %s3510 = ssub.s32 %s29, 2
      // Predicated region
      $region121: #{ae_forward.1} parent=119 // pred_check
        %p3511 = pneg %p546
      $region122: #{ae_forward.1} parent=119 // pred_check_branch
        %3513 = sbr.rel (%p3511) target = $region124
      $region123: #{ae_forward.1} parent=119 // pred_region
        %p3514 = scmp.lt.s32.totalorder %s35, 1
        %s3515 = scalar_select %p3514, %s35, 1
        %s3516 = smul.addr %s3515, 2
        %s3517 = smul.addr %s3516, 4
        %s3518 = scalar_lea.vmem %s23, %s3517
      $region124: #{ae_forward.1} parent=119 // pred_fallthru
        _
    $region120: #{ae_forward.1} parent=5 // pred_fallthru
      _
  $region6: #{ae_forward.1} parent=0 // loop_footer
    %s33 = sadd.s32 1, %s29
  $region7: #{ae_forward.1} parent=0 // loop_footer_branch
    %28 = sbr.rel target = $region3
  $region8: #{ae_forward.1} parent=0 // loop_exit
    _

</llo_original>
